<compile_context>
chip_gen: v5e
topology: v5e:2x2
jax: 0.10.0
libtpu: 0.0.40
codegen_flags: <defaults>
</compile_context>

<pallas_src>
import math

import jax
import jax.numpy as jnp
from jax.experimental import pallas as pl
from jax.experimental.pallas import tpu as pltpu


# ----------------------------- model dims -----------------------------------
DATA_DIM = 32          # data_dim
OUT_DIM = 16           # out_dim
DIM = 64               # hidden width (== sinusoidal embedding dim)
HALF_DIM = DIM // 2
STACK_DIM = DATA_DIM + DIM   # 96: fused [x, gelu(te1)] contraction dim

WEIGHT_DTYPE = jnp.bfloat16   # native MXU input dtype; accumulation stays f32

# rows of the packed (8, DIM) f32 constant slab
_C_FREQS, _C_PHASE, _C_BT1, _C_BFUSED, _C_BH, _C_BOUT = 0, 1, 2, 3, 4, 5


def _gelu(x):
    # tanh-approximate GELU (EUP-friendly). PyTorch nn.GELU default is exact erf;
    # difference is ~1e-3 absolute and irrelevant for this concrete denoiser.
    return jax.nn.gelu(x, approximate=True)


# ------------------------------- kernel --------------------------------------
def denoiser_kernel(x_ref, t_ref, const_ref, wt1_ref, w_stack_ref,
                    w_h_ref, w_out_ref, o_ref):
    wdt = wt1_ref.dtype
    x = x_ref[...]                                   # (TB, DATA_DIM) f32
    t = t_ref[...]                                   # (TB, 1)        f32

    freqs  = const_ref[_C_FREQS:_C_FREQS + 1, :]     # (1, DIM)
    phase  = const_ref[_C_PHASE:_C_PHASE + 1, :]
    bt1    = const_ref[_C_BT1:_C_BT1 + 1, :]
    b_fus  = const_ref[_C_BFUSED:_C_BFUSED + 1, :]
    b_h    = const_ref[_C_BH:_C_BH + 1, :]
    b_out  = const_ref[_C_BOUT:_C_BOUT + 1, :OUT_DIM]

    # --- sinusoidal time embedding, no lane concat: sin(t*f + phase), phase∈{0,π/2}
    t_emb = jnp.sin(t * freqs + phase)               # (TB, DIM) f32

    # --- first time-MLP layer + GELU ---
    te = jnp.dot(t_emb.astype(wdt), wt1_ref[...],
                 preferred_element_type=jnp.float32) + bt1
    te = _gelu(te)                                   # (TB, DIM) f32

    # --- fused input projection + second time-MLP matmul (K = 96 in one pass) ---
    #     h = [x, gelu(te1)] @ vstack(w_in, wt2) + (b_in + bt2)
    xt = jnp.concatenate([x, te], axis=-1)           # (TB, 96) -- cheap lane merge
    h = jnp.dot(xt.astype(wdt), w_stack_ref[...],
                preferred_element_type=jnp.float32) + b_fus

    # --- residual block: h + GELU(Linear(h)) ---
    r = jnp.dot(h.astype(wdt), w_h_ref[...],
                preferred_element_type=jnp.float32) + b_h
    h = h + _gelu(r)

    # --- output projection (OUT_DIM lanes; tiny, so masked store beats a slice op)
    out = jnp.dot(h.astype(wdt), w_out_ref[...],
                  preferred_element_type=jnp.float32) + b_out
    o_ref[...] = out.astype(o_ref.dtype)


# ------------------------------ wrapper ---------------------------------------
def _choose_tb(b):
    # bf16 packs 16 rows per packed vreg -> round to multiple of 16.
    bp = ((b + 15) // 16) * 16
    if bp <= 512:
        return bp        # one grid step: no per-step pipeline overhead (v5e/v6e)
    return 256           # big batches: 256-row MXU fill per step, >=2 steps for v7x


@jax.jit
def denoiser_forward(x, t, params):
    B = x.shape[0]
    TB = _choose_tb(B)
    Bp = ((B + TB - 1) // TB) * TB
    if Bp != B:
        x = jnp.pad(x, ((0, Bp - B), (0, 0)))
        t = jnp.pad(t, ((0, Bp - B),))
    t2d = t.astype(jnp.float32).reshape(Bp, 1)
    n_steps = Bp // TB

    full = lambda shape: pl.BlockSpec(shape, lambda i: (0, 0))

    # NOTE: weight/const specs are grid-invariant; with the single-step grid used
    # for moderate batches there is no double-buffering to worry about.
    in_specs = [
        pl.BlockSpec((TB, DATA_DIM), lambda i: (i, 0)),   # x
        pl.BlockSpec((TB, 1), lambda i: (i, 0)),          # t
        full((8, DIM)),                                   # packed constants
        full((DIM, DIM)),                                 # wt1
        full((STACK_DIM, DIM)),                           # w_stack = vstack(w_in, wt2)
        full((DIM, DIM)),                                 # w_h
        full((DIM, OUT_DIM)),                             # w_out
    ]
    out_spec = pl.BlockSpec((TB, OUT_DIM), lambda i: (i, 0))

    weight_bytes = (DIM * DIM + STACK_DIM * DIM + DIM * DIM + DIM * OUT_DIM) * 2 \
        + 8 * DIM * 4
    cost = pl.CostEstimate(
        flops=2 * Bp * (DIM * DIM + STACK_DIM * DIM + DIM * DIM + DIM * OUT_DIM),
        transcendentals=Bp * DIM * 3,                      # sin + 2x gelu tanh
        bytes_accessed=Bp * (DATA_DIM + 1 + OUT_DIM) * 4 + weight_bytes,
    )

    out = pl.pallas_call(
        denoiser_kernel,
        out_shape=jax.ShapeDtypeStruct((Bp, OUT_DIM), jnp.float32),
        grid=(n_steps,),
        in_specs=in_specs,
        out_specs=out_spec,
        compiler_params=pltpu.CompilerParams(dimension_semantics=("parallel",)),
        cost_estimate=cost,
    )(
        x, t2d, params["consts"],
        params["wt1"], params["w_stack"], params["w_h"], params["w_out"],
    )
    if Bp != B:
        out = out[:B]
    return out


# --------------------------- param init (deterministic) -----------------------
def init_params(key, weight_dtype=WEIGHT_DTYPE):
    def linear(key, fan_in, fan_out):
        # PyTorch nn.Linear default init: U(-1/sqrt(fan_in), 1/sqrt(fan_in))
        kw, kb = jax.random.split(key)
        bound = 1.0 / math.sqrt(fan_in)
        w = jax.random.uniform(kw, (fan_in, fan_out), jnp.float32, -bound, bound)
        b = jax.random.uniform(kb, (1, fan_out), jnp.float32, -bound, bound)
        return w, b

    keys = jax.random.split(key, 5)
    w_in, b_in = linear(keys[0], DATA_DIM, DIM)
    wt1, bt1 = linear(keys[1], DIM, DIM)
    wt2, bt2 = linear(keys[2], DIM, DIM)
    w_h, b_h = linear(keys[3], DIM, DIM)
    w_out, b_out = linear(keys[4], DIM, OUT_DIM)

    # fused input-projection / second-time-MLP weight: [x, gelu(te1)] @ w_stack
    w_stack = jnp.concatenate([w_in, wt2], axis=0)        # (96, 64)

    # sinusoidal embedding: exp(arange(half) * -ln(10000)/(half-1)), duplicated,
    # with a pi/2 phase on the second half so sin(x + pi/2) == cos(x).
    scale = math.log(10000.0) / (HALF_DIM - 1)
    half = jnp.exp(jnp.arange(HALF_DIM, dtype=jnp.float32) * -scale)
    freqs_full = jnp.concatenate([half, half])                                  # (DIM,)
    phase = jnp.concatenate([jnp.zeros((HALF_DIM,), jnp.float32),
                             jnp.full((HALF_DIM,), math.pi / 2, jnp.float32)])  # (DIM,)

    # pack all tiny constants into one (8, DIM) f32 slab -> a single DMA
    b_out64 = jnp.pad(b_out[0], (0, DIM - OUT_DIM))
    consts = jnp.stack([
        freqs_full,            # _C_FREQS
        phase,                 # _C_PHASE
        bt1[0],                # _C_BT1
        (b_in + bt2)[0],       # _C_BFUSED  (folded additive biases)
        b_h[0],                # _C_BH
        b_out64,               # _C_BOUT (lanes 0:OUT_DIM)
        jnp.zeros((DIM,), jnp.float32),
        jnp.zeros((DIM,), jnp.float32),
    ])                                                    # (8, DIM)

    return dict(
        consts=consts,
        wt1=wt1.astype(weight_dtype),
        w_stack=w_stack.astype(weight_dtype),
        w_h=w_h.astype(weight_dtype),
        w_out=w_out.astype(weight_dtype),
    )


# ------------------------------ reference (plain JAX) -------------------------
def reference_forward(x, t, p):
    c = p["consts"]
    freqs, phase = c[_C_FREQS:_C_FREQS + 1], c[_C_PHASE:_C_PHASE + 1]
    bt1, b_fused = c[_C_BT1:_C_BT1 + 1], c[_C_BFUSED:_C_BFUSED + 1]
    b_h, b_out = c[_C_BH:_C_BH + 1], c[_C_BOUT:_C_BOUT + 1, :OUT_DIM]
    wdt = p["wt1"].dtype

    t_emb = jnp.sin(t.astype(jnp.float32)[:, None] * freqs + phase)
    te = jnp.dot(t_emb.astype(wdt), p["wt1"],
                 preferred_element_type=jnp.float32) + bt1
    te = _gelu(te)
    xt = jnp.concatenate([x, te], axis=-1)
    h = jnp.dot(xt.astype(wdt), p["w_stack"],
                preferred_element_type=jnp.float32) + b_fused
    r = jnp.dot(h.astype(wdt), p["w_h"],
                preferred_element_type=jnp.float32) + b_h
    h = h + _gelu(r)
    out = jnp.dot(h.astype(wdt), p["w_out"],
                  preferred_element_type=jnp.float32) + b_out
    return out


if __name__ == "__main__":
    key = jax.random.PRNGKey(0)
    kx, kt, kp = jax.random.split(key, 3)

    BATCH = 256   # single TB=256 grid step: fills the 256-row MXU, no step overhead
    x = jax.random.normal(kx, (BATCH, DATA_DIM), jnp.float32)
    t = jax.random.randint(kt, (BATCH,), 0, 1000).astype(jnp.float32)
    params = init_params(kp)

    out = denoiser_forward(x, t, params)
    out = jax.block_until_ready(out)

    ref = reference_forward(x, t, params)
    assert out.shape == (BATCH, OUT_DIM)
    assert jnp.allclose(out, ref, atol=2e-2, rtol=2e-2), "kernel/reference mismatch"

    print("KERNEL_OK")
</pallas_src>

<mosaic_0001>
module attributes {stable_mosaic.version = 11 : i64} {
  func.func @denoiser_kernel(%arg0: i32, %arg1: memref<256x32xf32, #tpu.memory_space<vmem>>, %arg2: memref<256x1xf32, #tpu.memory_space<vmem>>, %arg3: memref<8x64xf32, #tpu.memory_space<vmem>>, %arg4: memref<64x64xbf16, #tpu.memory_space<vmem>>, %arg5: memref<96x64xbf16, #tpu.memory_space<vmem>>, %arg6: memref<64x64xbf16, #tpu.memory_space<vmem>>, %arg7: memref<64x16xbf16, #tpu.memory_space<vmem>>, %arg8: memref<256x16xf32, #tpu.memory_space<vmem>>) attributes {dimension_semantics = [#tpu.dimension_semantics<parallel>], iteration_bounds = array<i64: 1>, scalar_prefetch = 0 : i64, scratch_operands = 0 : i64, tpu.core_type = #tpu.core_type<tc>, window_params = [{transform_indices = @transform_0, window_bounds = array<i64: 256, 32>}, {transform_indices = @transform_1, window_bounds = array<i64: 256, 1>}, {pipeline_mode = #tpu.pipeline_mode<synchronous>, transform_indices = @transform_2, window_bounds = array<i64: 8, 64>}, {pipeline_mode = #tpu.pipeline_mode<synchronous>, transform_indices = @transform_3, window_bounds = array<i64: 64, 64>}, {pipeline_mode = #tpu.pipeline_mode<synchronous>, transform_indices = @transform_4, window_bounds = array<i64: 96, 64>}, {pipeline_mode = #tpu.pipeline_mode<synchronous>, transform_indices = @transform_5, window_bounds = array<i64: 64, 64>}, {pipeline_mode = #tpu.pipeline_mode<synchronous>, transform_indices = @transform_6, window_bounds = array<i64: 64, 16>}, {transform_indices = @transform_7, window_bounds = array<i64: 256, 16>}]} {
    %c0 = arith.constant 0 : index
    %c0_0 = arith.constant 0 : index
    %0 = vector.load %arg1[%c0, %c0_0] : memref<256x32xf32, #tpu.memory_space<vmem>>, vector<256x32xf32>
    %c0_1 = arith.constant 0 : index
    %c0_2 = arith.constant 0 : index
    %1 = vector.load %arg2[%c0_1, %c0_2] : memref<256x1xf32, #tpu.memory_space<vmem>>, vector<256x1xf32>
    %c0_3 = arith.constant 0 : index
    %c0_4 = arith.constant 0 : index
    %2 = vector.load %arg3[%c0_3, %c0_4] : memref<8x64xf32, #tpu.memory_space<vmem>>, vector<1x64xf32>
    %c1 = arith.constant 1 : index
    %c0_5 = arith.constant 0 : index
    %3 = vector.load %arg3[%c1, %c0_5] : memref<8x64xf32, #tpu.memory_space<vmem>>, vector<1x64xf32>
    %c2 = arith.constant 2 : index
    %c0_6 = arith.constant 0 : index
    %4 = vector.load %arg3[%c2, %c0_6] : memref<8x64xf32, #tpu.memory_space<vmem>>, vector<1x64xf32>
    %c3 = arith.constant 3 : index
    %c0_7 = arith.constant 0 : index
    %5 = vector.load %arg3[%c3, %c0_7] : memref<8x64xf32, #tpu.memory_space<vmem>>, vector<1x64xf32>
    %c4 = arith.constant 4 : index
    %c0_8 = arith.constant 0 : index
    %6 = vector.load %arg3[%c4, %c0_8] : memref<8x64xf32, #tpu.memory_space<vmem>>, vector<1x64xf32>
    %c5 = arith.constant 5 : index
    %c0_9 = arith.constant 0 : index
    %7 = vector.load %arg3[%c5, %c0_9] : memref<8x64xf32, #tpu.memory_space<vmem>>, vector<1x16xf32>
    %8 = vector.broadcast %1 : vector<256x1xf32> to vector<256x64xf32>
    %9 = vector.broadcast %2 : vector<1x64xf32> to vector<256x64xf32>
    %10 = arith.mulf %8, %9 : vector<256x64xf32>
    %11 = vector.broadcast %3 : vector<1x64xf32> to vector<256x64xf32>
    %12 = arith.addf %10, %11 : vector<256x64xf32>
    %13 = math.sin %12 : vector<256x64xf32>
    %14 = arith.truncf %13 : vector<256x64xf32> to vector<256x64xbf16>
    %c0_10 = arith.constant 0 : index
    %c0_11 = arith.constant 0 : index
    %15 = vector.load %arg4[%c0_10, %c0_11] : memref<64x64xbf16, #tpu.memory_space<vmem>>, vector<64x64xbf16>
    %cst = arith.constant dense<0.000000e+00> : vector<256x64xf32>
    %16 = tpu.matmul %14, %15, %cst {dimension_numbers = #tpu.dot_dimension_numbers<[1], [0], [0], [1], [0, 0, 1, 1], [], []>} : vector<256x64xbf16>, vector<64x64xbf16>, vector<256x64xf32> -> vector<256x64xf32>
    %17 = vector.broadcast %4 : vector<1x64xf32> to vector<256x64xf32>
    %18 = arith.addf %16, %17 : vector<256x64xf32>
    %19 = arith.mulf %18, %18 : vector<256x64xf32>
    %20 = arith.mulf %18, %19 : vector<256x64xf32>
    %cst_12 = arith.constant 4.471500e-02 : f32
    %21 = vector.broadcast %cst_12 : f32 to vector<256x64xf32>
    %22 = arith.mulf %21, %20 : vector<256x64xf32>
    %23 = arith.addf %18, %22 : vector<256x64xf32>
    %cst_13 = arith.constant 0.797884583 : f32
    %24 = vector.broadcast %cst_13 : f32 to vector<256x64xf32>
    %25 = arith.mulf %24, %23 : vector<256x64xf32>
    %26 = math.tanh %25 : vector<256x64xf32>
    %cst_14 = arith.constant 1.000000e+00 : f32
    %27 = vector.broadcast %cst_14 : f32 to vector<256x64xf32>
    %28 = arith.addf %27, %26 : vector<256x64xf32>
    %cst_15 = arith.constant 5.000000e-01 : f32
    %29 = vector.broadcast %cst_15 : f32 to vector<256x64xf32>
    %30 = arith.mulf %29, %28 : vector<256x64xf32>
    %31 = arith.mulf %18, %30 : vector<256x64xf32>
    %32 = tpu.concatenate %0, %31 in 1 : vector<256x32xf32>, vector<256x64xf32> -> vector<256x96xf32>
    %33 = arith.truncf %32 : vector<256x96xf32> to vector<256x96xbf16>
    %c0_16 = arith.constant 0 : index
    %c0_17 = arith.constant 0 : index
    %34 = vector.load %arg5[%c0_16, %c0_17] : memref<96x64xbf16, #tpu.memory_space<vmem>>, vector<96x64xbf16>
    %cst_18 = arith.constant dense<0.000000e+00> : vector<256x64xf32>
    %35 = tpu.matmul %33, %34, %cst_18 {dimension_numbers = #tpu.dot_dimension_numbers<[1], [0], [0], [1], [0, 0, 1, 1], [], []>} : vector<256x96xbf16>, vector<96x64xbf16>, vector<256x64xf32> -> vector<256x64xf32>
    %36 = vector.broadcast %5 : vector<1x64xf32> to vector<256x64xf32>
    %37 = arith.addf %35, %36 : vector<256x64xf32>
    %38 = arith.truncf %37 : vector<256x64xf32> to vector<256x64xbf16>
    %c0_19 = arith.constant 0 : index
    %c0_20 = arith.constant 0 : index
    %39 = vector.load %arg6[%c0_19, %c0_20] : memref<64x64xbf16, #tpu.memory_space<vmem>>, vector<64x64xbf16>
    %cst_21 = arith.constant dense<0.000000e+00> : vector<256x64xf32>
    %40 = tpu.matmul %38, %39, %cst_21 {dimension_numbers = #tpu.dot_dimension_numbers<[1], [0], [0], [1], [0, 0, 1, 1], [], []>} : vector<256x64xbf16>, vector<64x64xbf16>, vector<256x64xf32> -> vector<256x64xf32>
    %41 = vector.broadcast %6 : vector<1x64xf32> to vector<256x64xf32>
    %42 = arith.addf %40, %41 : vector<256x64xf32>
    %43 = arith.mulf %42, %42 : vector<256x64xf32>
    %44 = arith.mulf %42, %43 : vector<256x64xf32>
    %cst_22 = arith.constant 4.471500e-02 : f32
    %45 = vector.broadcast %cst_22 : f32 to vector<256x64xf32>
    %46 = arith.mulf %45, %44 : vector<256x64xf32>
    %47 = arith.addf %42, %46 : vector<256x64xf32>
    %cst_23 = arith.constant 0.797884583 : f32
    %48 = vector.broadcast %cst_23 : f32 to vector<256x64xf32>
    %49 = arith.mulf %48, %47 : vector<256x64xf32>
    %50 = math.tanh %49 : vector<256x64xf32>
    %cst_24 = arith.constant 1.000000e+00 : f32
    %51 = vector.broadcast %cst_24 : f32 to vector<256x64xf32>
    %52 = arith.addf %51, %50 : vector<256x64xf32>
    %cst_25 = arith.constant 5.000000e-01 : f32
    %53 = vector.broadcast %cst_25 : f32 to vector<256x64xf32>
    %54 = arith.mulf %53, %52 : vector<256x64xf32>
    %55 = arith.mulf %42, %54 : vector<256x64xf32>
    %56 = arith.addf %37, %55 : vector<256x64xf32>
    %57 = arith.truncf %56 : vector<256x64xf32> to vector<256x64xbf16>
    %c0_26 = arith.constant 0 : index
    %c0_27 = arith.constant 0 : index
    %58 = vector.load %arg7[%c0_26, %c0_27] : memref<64x16xbf16, #tpu.memory_space<vmem>>, vector<64x16xbf16>
    %cst_28 = arith.constant dense<0.000000e+00> : vector<256x16xf32>
    %59 = tpu.matmul %57, %58, %cst_28 {dimension_numbers = #tpu.dot_dimension_numbers<[1], [0], [0], [1], [0, 0, 1, 1], [], []>} : vector<256x64xbf16>, vector<64x16xbf16>, vector<256x16xf32> -> vector<256x16xf32>
    %60 = vector.broadcast %7 : vector<1x16xf32> to vector<256x16xf32>
    %61 = arith.addf %59, %60 : vector<256x16xf32>
    %c0_29 = arith.constant 0 : index
    %c0_30 = arith.constant 0 : index
    %62 = vector.load %arg8[%c0_29, %c0_30] : memref<256x16xf32, #tpu.memory_space<vmem>>, vector<256x16xf32>
    tpu.vector_store %arg8[%c0_29, %c0_30], %61 {strides = array<i32>} : memref<256x16xf32, #tpu.memory_space<vmem>>, vector<256x16xf32>,
    return
  }
  func.func @transform_0(%arg0: i32) -> (i32, i32) {
    %c0_i32 = arith.constant 0 : i32
    %c0_i32_0 = arith.constant 0 : i32
    return %arg0, %c0_i32 : i32, i32
  }
  func.func @transform_1(%arg0: i32) -> (i32, i32) {
    %c0_i32 = arith.constant 0 : i32
    %c0_i32_0 = arith.constant 0 : i32
    return %arg0, %c0_i32 : i32, i32
  }
  func.func @transform_2(%arg0: i32) -> (i32, i32) {
    %c0_i32 = arith.constant 0 : i32
    %c0_i32_0 = arith.constant 0 : i32
    %c0_i32_1 = arith.constant 0 : i32
    return %c0_i32, %c0_i32_0 : i32, i32
  }
  func.func @transform_3(%arg0: i32) -> (i32, i32) {
    %c0_i32 = arith.constant 0 : i32
    %c0_i32_0 = arith.constant 0 : i32
    %c0_i32_1 = arith.constant 0 : i32
    return %c0_i32, %c0_i32_0 : i32, i32
  }
  func.func @transform_4(%arg0: i32) -> (i32, i32) {
    %c0_i32 = arith.constant 0 : i32
    %c0_i32_0 = arith.constant 0 : i32
    %c0_i32_1 = arith.constant 0 : i32
    return %c0_i32, %c0_i32_0 : i32, i32
  }
  func.func @transform_5(%arg0: i32) -> (i32, i32) {
    %c0_i32 = arith.constant 0 : i32
    %c0_i32_0 = arith.constant 0 : i32
    %c0_i32_1 = arith.constant 0 : i32
    return %c0_i32, %c0_i32_0 : i32, i32
  }
  func.func @transform_6(%arg0: i32) -> (i32, i32) {
    %c0_i32 = arith.constant 0 : i32
    %c0_i32_0 = arith.constant 0 : i32
    %c0_i32_1 = arith.constant 0 : i32
    return %c0_i32, %c0_i32_0 : i32, i32
  }
  func.func @transform_7(%arg0: i32) -> (i32, i32) {
    %c0_i32 = arith.constant 0 : i32
    %c0_i32_0 = arith.constant 0 : i32
    return %arg0, %c0_i32 : i32, i32
  }
}

</mosaic_0001>

<llo_original>
// kernel: denoiser_forward.1
$region0: #{denoiser_forward.1}
  #allocation0 [shape = 'u32[]', space=smem, size = 0x4, offset = 0x4, fixed_abs, tag = 'smem constant byte address 0x4 - core index']
  #allocation1 [shape = 'u32[72,128]{1,0:T(1,128)}', space=vmem, size = 0x9000, scoped, tag = 'internal scratch']
  %s0 = inlined_call_operand.vmem [shape: f32[256,32], index: 0, kind: input, shape index: {}]
  %s1 = inlined_call_operand.vmem [shape: f32[256,1], index: 1, kind: input, shape index: {}]
  %s2 = inlined_call_operand.vmem [shape: f32[8,64], index: 2, kind: input, shape index: {}]
  %s3 = inlined_call_operand.vmem [shape: bf16[64,64], index: 3, kind: input, shape index: {}]
  %s4 = inlined_call_operand.vmem [shape: bf16[96,64], index: 4, kind: input, shape index: {}]
  %s5 = inlined_call_operand.vmem [shape: bf16[64,64], index: 5, kind: input, shape index: {}]
  %s6 = inlined_call_operand.vmem [shape: bf16[64,16], index: 6, kind: input, shape index: {}]
  %s7 = inlined_call_operand.vmem [shape: f32[256,16], index: 7, kind: output, shape index: {}]
  %s8 = sld [smem:[#allocation0]]
  $region38: #{denoiser_forward.1} parent=0
    _
  %s10 = ssub.s32 1, %s8
  %s11 = scalar_select 0, %s10, %s8
  // Predicated region
  $region2: #{denoiser_forward.1} parent=0 // pred_check
    _
  $region3: #{denoiser_forward.1} parent=0 // pred_check_branch
    %13 = sbr.rel (0) target = $region5
  $region4: #{denoiser_forward.1} parent=0 // pred_region
    _
  $region5: #{denoiser_forward.1} parent=0 // pred_fallthru
    _
  // Predicated region
  $region6: #{denoiser_forward.1} parent=0 // pred_check
    _
  $region7: #{denoiser_forward.1} parent=0 // pred_check_branch
    %15 = sbr.rel (0) target = $region9
  $region8: #{denoiser_forward.1} parent=0 // pred_region
    _
  $region9: #{denoiser_forward.1} parent=0 // pred_fallthru
    _
  // Predicated region
  $region10: #{denoiser_forward.1} parent=0 // pred_check
    _
  $region11: #{denoiser_forward.1} parent=0 // pred_check_branch
    %17 = sbr.rel (0) target = $region13
  $region12: #{denoiser_forward.1} parent=0 // pred_region
    _
  $region13: #{denoiser_forward.1} parent=0 // pred_fallthru
    _
  // Predicated region
  $region14: #{denoiser_forward.1} parent=0 // pred_check
    _
  $region15: #{denoiser_forward.1} parent=0 // pred_check_branch
    %19 = sbr.rel (0) target = $region17
  $region16: #{denoiser_forward.1} parent=0 // pred_region
    _
  $region17: #{denoiser_forward.1} parent=0 // pred_fallthru
    _
  // Predicated region
  $region18: #{denoiser_forward.1} parent=0 // pred_check
    _
  $region19: #{denoiser_forward.1} parent=0 // pred_check_branch
    %21 = sbr.rel (0) target = $region21
  $region20: #{denoiser_forward.1} parent=0 // pred_region
    _
  $region21: #{denoiser_forward.1} parent=0 // pred_fallthru
    _
  // Predicated region
  $region22: #{denoiser_forward.1} parent=0 // pred_check
    _
  $region23: #{denoiser_forward.1} parent=0 // pred_check_branch
    %23 = sbr.rel (0) target = $region25
  $region24: #{denoiser_forward.1} parent=0 // pred_region
    _
  $region25: #{denoiser_forward.1} parent=0 // pred_fallthru
    _
  // Predicated region
  $region26: #{denoiser_forward.1} parent=0 // pred_check
    _
  $region27: #{denoiser_forward.1} parent=0 // pred_check_branch
    %25 = sbr.rel (0) target = $region29
  $region28: #{denoiser_forward.1} parent=0 // pred_region
    _
  $region29: #{denoiser_forward.1} parent=0 // pred_fallthru
    _
  %v27 = vld [vmem:[%s0] sm:$0xff]
  %v28 = vld [vmem:[%s0 + $0x8] sm:$0xff]
  %v29 = vld [vmem:[%s0 + $0x10] sm:$0xff]
  %v30 = vld [vmem:[%s0 + $0x18] sm:$0xff]
  %v31 = vld [vmem:[%s0 + $0x20] sm:$0xff]
  %v32 = vld [vmem:[%s0 + $0x28] sm:$0xff]
  %v33 = vld [vmem:[%s0 + $0x30] sm:$0xff]
  %v34 = vld [vmem:[%s0 + $0x38] sm:$0xff]
  %v35 = vld [vmem:[%s0 + $0x40] sm:$0xff]
  %v36 = vld [vmem:[%s0 + $0x48] sm:$0xff]
  %v37 = vld [vmem:[%s0 + $0x50] sm:$0xff]
  %v38 = vld [vmem:[%s0 + $0x58] sm:$0xff]
  %v39 = vld [vmem:[%s0 + $0x60] sm:$0xff]
  %v40 = vld [vmem:[%s0 + $0x68] sm:$0xff]
  %v41 = vld [vmem:[%s0 + $0x70] sm:$0xff]
  %v42 = vld [vmem:[%s0 + $0x78] sm:$0xff]
  %v43 = vld [vmem:[%s0 + $0x80] sm:$0xff]
  %v44 = vld [vmem:[%s0 + $0x88] sm:$0xff]
  %v45 = vld [vmem:[%s0 + $0x90] sm:$0xff]
  %v46 = vld [vmem:[%s0 + $0x98] sm:$0xff]
  %v47 = vld [vmem:[%s0 + $0xa0] sm:$0xff]
  %v48 = vld [vmem:[%s0 + $0xa8] sm:$0xff]
  %v49 = vld [vmem:[%s0 + $0xb0] sm:$0xff]
  %v50 = vld [vmem:[%s0 + $0xb8] sm:$0xff]
  %v51 = vld [vmem:[%s0 + $0xc0] sm:$0xff]
  %v52 = vld [vmem:[%s0 + $0xc8] sm:$0xff]
  %v53 = vld [vmem:[%s0 + $0xd0] sm:$0xff]
  %v54 = vld [vmem:[%s0 + $0xd8] sm:$0xff]
  %v55 = vld [vmem:[%s0 + $0xe0] sm:$0xff]
  %v56 = vld [vmem:[%s0 + $0xe8] sm:$0xff]
  %v57 = vld [vmem:[%s0 + $0xf0] sm:$0xff]
  %v58 = vld [vmem:[%s0 + $0xf8] sm:$0xff]
  %v59 = vld [vmem:[%s1] sm:$0xff]
  %v60 = vld [vmem:[%s1 + $0x8] sm:$0xff]
  %v61 = vld [vmem:[%s1 + $0x10] sm:$0xff]
  %v62 = vld [vmem:[%s1 + $0x18] sm:$0xff]
  %v63 = vld [vmem:[%s1 + $0x20] sm:$0xff]
  %v64 = vld [vmem:[%s1 + $0x28] sm:$0xff]
  %v65 = vld [vmem:[%s1 + $0x30] sm:$0xff]
  %v66 = vld [vmem:[%s1 + $0x38] sm:$0xff]
  %v67 = vld [vmem:[%s1 + $0x40] sm:$0xff]
  %v68 = vld [vmem:[%s1 + $0x48] sm:$0xff]
  %v69 = vld [vmem:[%s1 + $0x50] sm:$0xff]
  %v70 = vld [vmem:[%s1 + $0x58] sm:$0xff]
  %v71 = vld [vmem:[%s1 + $0x60] sm:$0xff]
  %v72 = vld [vmem:[%s1 + $0x68] sm:$0xff]
  %v73 = vld [vmem:[%s1 + $0x70] sm:$0xff]
  %v74 = vld [vmem:[%s1 + $0x78] sm:$0xff]
  %v75 = vld [vmem:[%s1 + $0x80] sm:$0xff]
  %v76 = vld [vmem:[%s1 + $0x88] sm:$0xff]
  %v77 = vld [vmem:[%s1 + $0x90] sm:$0xff]
  %v78 = vld [vmem:[%s1 + $0x98] sm:$0xff]
  %v79 = vld [vmem:[%s1 + $0xa0] sm:$0xff]
  %v80 = vld [vmem:[%s1 + $0xa8] sm:$0xff]
  %v81 = vld [vmem:[%s1 + $0xb0] sm:$0xff]
  %v82 = vld [vmem:[%s1 + $0xb8] sm:$0xff]
  %v83 = vld [vmem:[%s1 + $0xc0] sm:$0xff]
  %v84 = vld [vmem:[%s1 + $0xc8] sm:$0xff]
  %v85 = vld [vmem:[%s1 + $0xd0] sm:$0xff]
  %v86 = vld [vmem:[%s1 + $0xd8] sm:$0xff]
  %v87 = vld [vmem:[%s1 + $0xe0] sm:$0xff]
  %v88 = vld [vmem:[%s1 + $0xe8] sm:$0xff]
  %v89 = vld [vmem:[%s1 + $0xf0] sm:$0xff]
  %v90 = vld [vmem:[%s1 + $0xf8] sm:$0xff]
  %v91 = vld [vmem:[%s2] sm:$0x1]
  %v92 = vld [vmem:[%s2 + $0x1] sm:$0x1]
  %v93 = vld [vmem:[%s2 + $0x2] sm:$0x1]
  %v94 = vld [vmem:[%s2 + $0x3] sm:$0x1]
  %v95 = vld [vmem:[%s2 + $0x4] sm:$0x1]
  %v96 = vld [vmem:[%s2 + $0x5] sm:$0x1]
  %98 = vset.pattern.permute.xlu0 0
  %99 = vperm.xlu0 %98, %v59
  %v100 = vpop.permute.xlu0 %99
  %103 = vset.pattern.permute.xlu0 0
  %104 = vperm.xlu0 %103, %v60
  %v105 = vpop.permute.xlu0 %104
  %108 = vset.pattern.permute.xlu0 0
  %109 = vperm.xlu0 %108, %v61
  %v110 = vpop.permute.xlu0 %109
  %113 = vset.pattern.permute.xlu0 0
  %114 = vperm.xlu0 %113, %v62
  %v115 = vpop.permute.xlu0 %114
  %118 = vset.pattern.permute.xlu0 0
  %119 = vperm.xlu0 %118, %v63
  %v120 = vpop.permute.xlu0 %119
  %123 = vset.pattern.permute.xlu0 0
  %124 = vperm.xlu0 %123, %v64
  %v125 = vpop.permute.xlu0 %124
  %128 = vset.pattern.permute.xlu0 0
  %129 = vperm.xlu0 %128, %v65
  %v130 = vpop.permute.xlu0 %129
  %133 = vset.pattern.permute.xlu0 0
  %134 = vperm.xlu0 %133, %v66
  %v135 = vpop.permute.xlu0 %134
  %138 = vset.pattern.permute.xlu0 0
  %139 = vperm.xlu0 %138, %v67
  %v140 = vpop.permute.xlu0 %139
  %143 = vset.pattern.permute.xlu0 0
  %144 = vperm.xlu0 %143, %v68
  %v145 = vpop.permute.xlu0 %144
  %148 = vset.pattern.permute.xlu0 0
  %149 = vperm.xlu0 %148, %v69
  %v150 = vpop.permute.xlu0 %149
  %153 = vset.pattern.permute.xlu0 0
  %154 = vperm.xlu0 %153, %v70
  %v155 = vpop.permute.xlu0 %154
  %158 = vset.pattern.permute.xlu0 0
  %159 = vperm.xlu0 %158, %v71
  %v160 = vpop.permute.xlu0 %159
  %163 = vset.pattern.permute.xlu0 0
  %164 = vperm.xlu0 %163, %v72
  %v165 = vpop.permute.xlu0 %164
  %168 = vset.pattern.permute.xlu0 0
  %169 = vperm.xlu0 %168, %v73
  %v170 = vpop.permute.xlu0 %169
  %173 = vset.pattern.permute.xlu0 0
  %174 = vperm.xlu0 %173, %v74
  %v175 = vpop.permute.xlu0 %174
  %178 = vset.pattern.permute.xlu0 0
  %179 = vperm.xlu0 %178, %v75
  %v180 = vpop.permute.xlu0 %179
  %183 = vset.pattern.permute.xlu0 0
  %184 = vperm.xlu0 %183, %v76
  %v185 = vpop.permute.xlu0 %184
  %188 = vset.pattern.permute.xlu0 0
  %189 = vperm.xlu0 %188, %v77
  %v190 = vpop.permute.xlu0 %189
  %193 = vset.pattern.permute.xlu0 0
  %194 = vperm.xlu0 %193, %v78
  %v195 = vpop.permute.xlu0 %194
  %198 = vset.pattern.permute.xlu0 0
  %199 = vperm.xlu0 %198, %v79
  %v200 = vpop.permute.xlu0 %199
  %203 = vset.pattern.permute.xlu0 0
  %204 = vperm.xlu0 %203, %v80
  %v205 = vpop.permute.xlu0 %204
  %208 = vset.pattern.permute.xlu0 0
  %209 = vperm.xlu0 %208, %v81
  %v210 = vpop.permute.xlu0 %209
  %213 = vset.pattern.permute.xlu0 0
  %214 = vperm.xlu0 %213, %v82
  %v215 = vpop.permute.xlu0 %214
  %218 = vset.pattern.permute.xlu0 0
  %219 = vperm.xlu0 %218, %v83
  %v220 = vpop.permute.xlu0 %219
  %223 = vset.pattern.permute.xlu0 0
  %224 = vperm.xlu0 %223, %v84
  %v225 = vpop.permute.xlu0 %224
  %228 = vset.pattern.permute.xlu0 0
  %229 = vperm.xlu0 %228, %v85
  %v230 = vpop.permute.xlu0 %229
  %233 = vset.pattern.permute.xlu0 0
  %234 = vperm.xlu0 %233, %v86
  %v235 = vpop.permute.xlu0 %234
  %238 = vset.pattern.permute.xlu0 0
  %239 = vperm.xlu0 %238, %v87
  %v240 = vpop.permute.xlu0 %239
  %243 = vset.pattern.permute.xlu0 0
  %244 = vperm.xlu0 %243, %v88
  %v245 = vpop.permute.xlu0 %244
  %248 = vset.pattern.permute.xlu0 0
  %249 = vperm.xlu0 %248, %v89
  %v250 = vpop.permute.xlu0 %249
  %253 = vset.pattern.permute.xlu0 0
  %254 = vperm.xlu0 %253, %v90
  %v255 = vpop.permute.xlu0 %254
  %v257 = vperm.slane %v91, 0
  %v258 = vmul.f32 %v100, %v257
  %v259 = vmul.f32 %v105, %v257
  %v260 = vmul.f32 %v110, %v257
  %v261 = vmul.f32 %v115, %v257
  %v262 = vmul.f32 %v120, %v257
  %v263 = vmul.f32 %v125, %v257
  %v264 = vmul.f32 %v130, %v257
  %v265 = vmul.f32 %v135, %v257
  %v266 = vmul.f32 %v140, %v257
  %v267 = vmul.f32 %v145, %v257
  %v268 = vmul.f32 %v150, %v257
  %v269 = vmul.f32 %v155, %v257
  %v270 = vmul.f32 %v160, %v257
  %v271 = vmul.f32 %v165, %v257
  %v272 = vmul.f32 %v170, %v257
  %v273 = vmul.f32 %v175, %v257
  %v274 = vmul.f32 %v180, %v257
  %v275 = vmul.f32 %v185, %v257
  %v276 = vmul.f32 %v190, %v257
  %v277 = vmul.f32 %v195, %v257
  %v278 = vmul.f32 %v200, %v257
  %v279 = vmul.f32 %v205, %v257
  %v280 = vmul.f32 %v210, %v257
  %v281 = vmul.f32 %v215, %v257
  %v282 = vmul.f32 %v220, %v257
  %v283 = vmul.f32 %v225, %v257
  %v284 = vmul.f32 %v230, %v257
  %v285 = vmul.f32 %v235, %v257
  %v286 = vmul.f32 %v240, %v257
  %v287 = vmul.f32 %v245, %v257
  %v288 = vmul.f32 %v250, %v257
  %v289 = vmul.f32 %v255, %v257
  %v290 = vperm.slane %v92, 0
  %v291 = vadd.f32 %v258, %v290
  %v292 = vadd.f32 %v259, %v290
  %v293 = vadd.f32 %v260, %v290
  %v294 = vadd.f32 %v261, %v290
  %v295 = vadd.f32 %v262, %v290
  %v296 = vadd.f32 %v263, %v290
  %v297 = vadd.f32 %v264, %v290
  %v298 = vadd.f32 %v265, %v290
  %v299 = vadd.f32 %v266, %v290
  %v300 = vadd.f32 %v267, %v290
  %v301 = vadd.f32 %v268, %v290
  %v302 = vadd.f32 %v269, %v290
  %v303 = vadd.f32 %v270, %v290
  %v304 = vadd.f32 %v271, %v290
  %v305 = vadd.f32 %v272, %v290
  %v306 = vadd.f32 %v273, %v290
  %v307 = vadd.f32 %v274, %v290
  %v308 = vadd.f32 %v275, %v290
  %v309 = vadd.f32 %v276, %v290
  %v310 = vadd.f32 %v277, %v290
  %v311 = vadd.f32 %v278, %v290
  %v312 = vadd.f32 %v279, %v290
  %v313 = vadd.f32 %v280, %v290
  %v314 = vadd.f32 %v281, %v290
  %v315 = vadd.f32 %v282, %v290
  %v316 = vadd.f32 %v283, %v290
  %v317 = vadd.f32 %v284, %v290
  %v318 = vadd.f32 %v285, %v290
  %v319 = vadd.f32 %v286, %v290
  %v320 = vadd.f32 %v287, %v290
  %v321 = vadd.f32 %v288, %v290
  %v322 = vadd.f32 %v289, %v290
  %v323 = vand.u32 2147483647, %v291
  %vm324 = vcmp.le.f32.partialorder %v323, 0.7853982
  %vm325 = vcmp.lt.s32.totalorder %v291, 0
  %v326 = vand.u32 %v291, 2139095040
  %v327 = vshrl.u32 %v326, 23
  %v328 = vsub.s32 %v327, 127
  %v329 = vand.u32 2147483647, %v291
  %v330 = vand.u32 %v329, 8388607
  %v331 = vor.u32 %v330, 8388608
  %v332 = vsub.s32 0, %v331
  %v333 = vadd.s32 %v328, 1
  %vm334 = vcmp.gt.s32.totalorder %v333, 0
  %v335 = vsel %vm334, %v333, 0
  %v336 = vshrl.u32 %v335, 5
  %v337 = vand.u32 %v335, 31
  %v338 = vsub.s32 32, %v337
  %v339 = vshrl.u32 683565275, %v338
  %v340 = vshll.u32 683565275, %v337
  %v341 = vshrl.u32 2475754826, %v338
  %v342 = vor.u32 %v340, %v341
  %v343 = vshll.u32 2475754826, %v337
  %v344 = vshrl.u32 2131351028, %v338
  %v345 = vor.u32 %v343, %v344
  %v346 = vshll.u32 2131351028, %v337
  %v347 = vshrl.u32 2102212464, %v338
  %v348 = vor.u32 %v346, %v347
  %v349 = vshll.u32 2102212464, %v337
  %v350 = vshrl.u32 920167782, %v338
  %v351 = vor.u32 %v349, %v350
  %v352 = vshll.u32 920167782, %v337
  %v353 = vshrl.u32 1326507024, %v338
  %v354 = vor.u32 %v352, %v353
  %vm355 = vcmp.lt.s32.totalorder %v336, 1
  %vm356 = vcmp.lt.s32.totalorder %v336, 2
  %vm357 = vcmp.lt.s32.totalorder %v336, 3
  %vm358 = vcmp.lt.s32.totalorder %v336, 4
  %v359 = vsel %vm355, %v339, %v342
  %v360 = vsel %vm358, %v348, 2102212464
  %v361 = vsel %vm357, %v345, %v360
  %v362 = vsel %vm356, %v359, %v361
  %v363 = vsel %vm355, %v342, %v345
  %v364 = vsel %vm358, %v351, 920167782
  %v365 = vsel %vm357, %v348, %v364
  %v366 = vsel %vm356, %v363, %v365
  %v367 = vsel %vm355, %v345, %v348
  %v368 = vsel %vm358, %v354, 1326507024
  %v369 = vsel %vm357, %v351, %v368
  %v370 = vsel %vm356, %v367, %v369
  %v371 = vshll.u32 %v331, 8
  %v372 = vand.u32 %v371, 65535
  %v373 = vshrl.u32 %v371, 16
  %v374 = vand.u32 %v370, 65535
  %v375 = vshrl.u32 %v370, 16
  %v376 = vmul.u32 %v372, %v374
  %v377 = vmul.u32 %v372, %v375
  %v378 = vmul.u32 %v373, %v374
  %v379 = vmul.u32 %v373, %v375
  %v380 = vshll.u32 %v377, 16
  %v381 = vshrl.u32 %v377, 16
  %v382 = vshll.u32 %v378, 16
  %v383 = vshrl.u32 %v378, 16
  %vm384 = vc.u32 %v376, %v380
  %v385 = vsel %vm384, 1, 0
  %v386 = vadd.s32 %v376, %v380
  %v387 = vadd.s32 %v379, %v385
  %vm388 = vc.u32 %v386, %v382
  %v389 = vsel %vm388, 1, 0
  %v390 = vadd.s32 %v386, %v382
  %v391 = vadd.s32 %v387, %v389
  %v392 = vadd.s32 %v391, %v381
  %v393 = vadd.s32 %v392, %v383
  %v394 = vand.u32 %v371, 65535
  %v395 = vshrl.u32 %v371, 16
  %v396 = vand.u32 %v366, 65535
  %v397 = vshrl.u32 %v366, 16
  %v398 = vmul.u32 %v394, %v396
  %v399 = vmul.u32 %v394, %v397
  %v400 = vmul.u32 %v395, %v396
  %v401 = vmul.u32 %v395, %v397
  %v402 = vshll.u32 %v399, 16
  %v403 = vshrl.u32 %v399, 16
  %v404 = vshll.u32 %v400, 16
  %v405 = vshrl.u32 %v400, 16
  %vm406 = vc.u32 %v398, %v402
  %v407 = vsel %vm406, 1, 0
  %v408 = vadd.s32 %v398, %v402
  %v409 = vadd.s32 %v401, %v407
  %vm410 = vc.u32 %v408, %v404
  %v411 = vsel %vm410, 1, 0
  %v412 = vadd.s32 %v408, %v404
  %v413 = vadd.s32 %v409, %v411
  %v414 = vadd.s32 %v413, %v403
  %v415 = vadd.s32 %v414, %v405
  %v416 = vmul.u32 %v371, %v362
  %v417 = vadd.s32 %v393, %v412
  %vm418 = vc.u32 %v393, %v412
  %v419 = vadd.s32 %v415, 1
  %v420 = vsel %vm418, %v419, %v415
  %v421 = vadd.s32 %v416, %v420
  %v422 = vadd.s32 %v421, 536870912
  %v423 = vshrl.u32 %v422, 30
  %v424 = vshll.u32 %v423, 30
  %v425 = vsub.s32 %v421, %v424
  %vm426 = vcmp.lt.s32.totalorder %v425, 0
  %v427 = vsub.s32 0, %v425
  %v428 = vsel %vm426, %v427, %v425
  %v429 = vclz %v428
  %v430 = vsub.s32 %v429, 2
  %vm431 = vcmp.gt.s32.totalorder 0, %v430
  %v432 = vsel %vm431, 0, %v430
  %v433 = vsub.s32 32, %v432
  %v434 = vshll.u32 %v425, %v432
  %v435 = vshrl.u32 %v417, %v433
  %v436 = vor.u32 %v434, %v435
  %v437 = vsub.s32 4294967266, %v432
  %v438 = vadd.s32 %v437, 127
  %v439 = vshll.u32 %v438, 23
  %v440 = vor.u32 4788187, %v439
  %v441 = vand.u32 2147483647, %v440
  %v443 = vcvt.s32.f32 %v436
  %v444 = vmul.f32 %v443, %v441
  %v445 = vxor.u32 %v444, 2147483648
  %v446 = vsel %vm325, %v445, %v444
  %v447 = vsub.s32 4, %v423
  %v448 = vsel %vm325, %v447, %v423
  %v449 = vsel %vm324, %v291, %v446
  %v450 = vsel %vm324, 0, %v448
  %v451 = vmul.f32 %v449, %v449
  %v452 = vmul.f32 %v451, -0.001358992
  %v453 = vadd.f32 %v452, 0.041655596
  %v454 = vmul.f32 %v451, %v453
  %v455 = vadd.f32 %v454, -0.4999988
  %v456 = vmul.f32 %v451, %v455
  %v457 = vadd.f32 1.0, %v456
  %v458 = vmul.f32 %v449, %v449
  %v459 = vmul.f32 %v458, -0.00019511016
  %v460 = vadd.f32 %v459, 0.008332121
  %v461 = vmul.f32 %v458, %v460
  %v462 = vadd.f32 %v461, -0.16666654
  %v463 = vmul.f32 %v458, %v462
  %v464 = vadd.f32 %v463, 1.0
  %v465 = vmul.f32 %v464, %v449
  %vm466 = vweird.f32 %v291
  %v467 = vadd.s32 %v450, 3
  %v468 = vand.u32 %v467, 3
  %vm469 = vcmp.lt.s32.totalorder %v468, 2
  %vm470 = vcmp.eq.s32.totalorder %v468, 0
  %v471 = vxor.u32 %v465, 2147483648
  %v472 = vsel %vm470, %v457, %v471
  %vm473 = vcmp.eq.s32.totalorder %v468, 2
  %v474 = vxor.u32 %v457, 2147483648
  %v475 = vsel %vm473, %v474, %v465
  %v476 = vsel %vm469, %v472, %v475
  %v477 = vsel %vm466, nan, %v476
  %v478 = vand.u32 2147483647, %v292
  %vm479 = vcmp.le.f32.partialorder %v478, 0.7853982
  %vm480 = vcmp.lt.s32.totalorder %v292, 0
  %v481 = vand.u32 %v292, 2139095040
  %v482 = vshrl.u32 %v481, 23
  %v483 = vsub.s32 %v482, 127
  %v484 = vand.u32 2147483647, %v292
  %v485 = vand.u32 %v484, 8388607
  %v486 = vor.u32 %v485, 8388608
  %v487 = vsub.s32 0, %v486
  %v488 = vadd.s32 %v483, 1
  %vm489 = vcmp.gt.s32.totalorder %v488, 0
  %v490 = vsel %vm489, %v488, 0
  %v491 = vshrl.u32 %v490, 5
  %v492 = vand.u32 %v490, 31
  %v493 = vsub.s32 32, %v492
  %v494 = vshrl.u32 683565275, %v493
  %v495 = vshll.u32 683565275, %v492
  %v496 = vshrl.u32 2475754826, %v493
  %v497 = vor.u32 %v495, %v496
  %v498 = vshll.u32 2475754826, %v492
  %v499 = vshrl.u32 2131351028, %v493
  %v500 = vor.u32 %v498, %v499
  %v501 = vshll.u32 2131351028, %v492
  %v502 = vshrl.u32 2102212464, %v493
  %v503 = vor.u32 %v501, %v502
  %v504 = vshll.u32 2102212464, %v492
  %v505 = vshrl.u32 920167782, %v493
  %v506 = vor.u32 %v504, %v505
  %v507 = vshll.u32 920167782, %v492
  %v508 = vshrl.u32 1326507024, %v493
  %v509 = vor.u32 %v507, %v508
  %vm510 = vcmp.lt.s32.totalorder %v491, 1
  %vm511 = vcmp.lt.s32.totalorder %v491, 2
  %vm512 = vcmp.lt.s32.totalorder %v491, 3
  %vm513 = vcmp.lt.s32.totalorder %v491, 4
  %v514 = vsel %vm510, %v494, %v497
  %v515 = vsel %vm513, %v503, 2102212464
  %v516 = vsel %vm512, %v500, %v515
  %v517 = vsel %vm511, %v514, %v516
  %v518 = vsel %vm510, %v497, %v500
  %v519 = vsel %vm513, %v506, 920167782
  %v520 = vsel %vm512, %v503, %v519
  %v521 = vsel %vm511, %v518, %v520
  %v522 = vsel %vm510, %v500, %v503
  %v523 = vsel %vm513, %v509, 1326507024
  %v524 = vsel %vm512, %v506, %v523
  %v525 = vsel %vm511, %v522, %v524
  %v526 = vshll.u32 %v486, 8
  %v527 = vand.u32 %v526, 65535
  %v528 = vshrl.u32 %v526, 16
  %v529 = vand.u32 %v525, 65535
  %v530 = vshrl.u32 %v525, 16
  %v531 = vmul.u32 %v527, %v529
  %v532 = vmul.u32 %v527, %v530
  %v533 = vmul.u32 %v528, %v529
  %v534 = vmul.u32 %v528, %v530
  %v535 = vshll.u32 %v532, 16
  %v536 = vshrl.u32 %v532, 16
  %v537 = vshll.u32 %v533, 16
  %v538 = vshrl.u32 %v533, 16
  %vm539 = vc.u32 %v531, %v535
  %v540 = vsel %vm539, 1, 0
  %v541 = vadd.s32 %v531, %v535
  %v542 = vadd.s32 %v534, %v540
  %vm543 = vc.u32 %v541, %v537
  %v544 = vsel %vm543, 1, 0
  %v545 = vadd.s32 %v541, %v537
  %v546 = vadd.s32 %v542, %v544
  %v547 = vadd.s32 %v546, %v536
  %v548 = vadd.s32 %v547, %v538
  %v549 = vand.u32 %v526, 65535
  %v550 = vshrl.u32 %v526, 16
  %v551 = vand.u32 %v521, 65535
  %v552 = vshrl.u32 %v521, 16
  %v553 = vmul.u32 %v549, %v551
  %v554 = vmul.u32 %v549, %v552
  %v555 = vmul.u32 %v550, %v551
  %v556 = vmul.u32 %v550, %v552
  %v557 = vshll.u32 %v554, 16
  %v558 = vshrl.u32 %v554, 16
  %v559 = vshll.u32 %v555, 16
  %v560 = vshrl.u32 %v555, 16
  %vm561 = vc.u32 %v553, %v557
  %v562 = vsel %vm561, 1, 0
  %v563 = vadd.s32 %v553, %v557
  %v564 = vadd.s32 %v556, %v562
  %vm565 = vc.u32 %v563, %v559
  %v566 = vsel %vm565, 1, 0
  %v567 = vadd.s32 %v563, %v559
  %v568 = vadd.s32 %v564, %v566
  %v569 = vadd.s32 %v568, %v558
  %v570 = vadd.s32 %v569, %v560
  %v571 = vmul.u32 %v526, %v517
  %v572 = vadd.s32 %v548, %v567
  %vm573 = vc.u32 %v548, %v567
  %v574 = vadd.s32 %v570, 1
  %v575 = vsel %vm573, %v574, %v570
  %v576 = vadd.s32 %v571, %v575
  %v577 = vadd.s32 %v576, 536870912
  %v578 = vshrl.u32 %v577, 30
  %v579 = vshll.u32 %v578, 30
  %v580 = vsub.s32 %v576, %v579
  %vm581 = vcmp.lt.s32.totalorder %v580, 0
  %v582 = vsub.s32 0, %v580
  %v583 = vsel %vm581, %v582, %v580
  %v584 = vclz %v583
  %v585 = vsub.s32 %v584, 2
  %vm586 = vcmp.gt.s32.totalorder 0, %v585
  %v587 = vsel %vm586, 0, %v585
  %v588 = vsub.s32 32, %v587
  %v589 = vshll.u32 %v580, %v587
  %v590 = vshrl.u32 %v572, %v588
  %v591 = vor.u32 %v589, %v590
  %v592 = vsub.s32 4294967266, %v587
  %v593 = vadd.s32 %v592, 127
  %v594 = vshll.u32 %v593, 23
  %v595 = vor.u32 4788187, %v594
  %v596 = vand.u32 2147483647, %v595
  %v598 = vcvt.s32.f32 %v591
  %v599 = vmul.f32 %v598, %v596
  %v600 = vxor.u32 %v599, 2147483648
  %v601 = vsel %vm480, %v600, %v599
  %v602 = vsub.s32 4, %v578
  %v603 = vsel %vm480, %v602, %v578
  %v604 = vsel %vm479, %v292, %v601
  %v605 = vsel %vm479, 0, %v603
  %v606 = vmul.f32 %v604, %v604
  %v607 = vmul.f32 %v606, -0.001358992
  %v608 = vadd.f32 %v607, 0.041655596
  %v609 = vmul.f32 %v606, %v608
  %v610 = vadd.f32 %v609, -0.4999988
  %v611 = vmul.f32 %v606, %v610
  %v612 = vadd.f32 1.0, %v611
  %v613 = vmul.f32 %v604, %v604
  %v614 = vmul.f32 %v613, -0.00019511016
  %v615 = vadd.f32 %v614, 0.008332121
  %v616 = vmul.f32 %v613, %v615
  %v617 = vadd.f32 %v616, -0.16666654
  %v618 = vmul.f32 %v613, %v617
  %v619 = vadd.f32 %v618, 1.0
  %v620 = vmul.f32 %v619, %v604
  %vm621 = vweird.f32 %v292
  %v622 = vadd.s32 %v605, 3
  %v623 = vand.u32 %v622, 3
  %vm624 = vcmp.lt.s32.totalorder %v623, 2
  %vm625 = vcmp.eq.s32.totalorder %v623, 0
  %v626 = vxor.u32 %v620, 2147483648
  %v627 = vsel %vm625, %v612, %v626
  %vm628 = vcmp.eq.s32.totalorder %v623, 2
  %v629 = vxor.u32 %v612, 2147483648
  %v630 = vsel %vm628, %v629, %v620
  %v631 = vsel %vm624, %v627, %v630
  %v632 = vsel %vm621, nan, %v631
  %v633 = vand.u32 2147483647, %v293
  %vm634 = vcmp.le.f32.partialorder %v633, 0.7853982
  %vm635 = vcmp.lt.s32.totalorder %v293, 0
  %v636 = vand.u32 %v293, 2139095040
  %v637 = vshrl.u32 %v636, 23
  %v638 = vsub.s32 %v637, 127
  %v639 = vand.u32 2147483647, %v293
  %v640 = vand.u32 %v639, 8388607
  %v641 = vor.u32 %v640, 8388608
  %v642 = vsub.s32 0, %v641
  %v643 = vadd.s32 %v638, 1
  %vm644 = vcmp.gt.s32.totalorder %v643, 0
  %v645 = vsel %vm644, %v643, 0
  %v646 = vshrl.u32 %v645, 5
  %v647 = vand.u32 %v645, 31
  %v648 = vsub.s32 32, %v647
  %v649 = vshrl.u32 683565275, %v648
  %v650 = vshll.u32 683565275, %v647
  %v651 = vshrl.u32 2475754826, %v648
  %v652 = vor.u32 %v650, %v651
  %v653 = vshll.u32 2475754826, %v647
  %v654 = vshrl.u32 2131351028, %v648
  %v655 = vor.u32 %v653, %v654
  %v656 = vshll.u32 2131351028, %v647
  %v657 = vshrl.u32 2102212464, %v648
  %v658 = vor.u32 %v656, %v657
  %v659 = vshll.u32 2102212464, %v647
  %v660 = vshrl.u32 920167782, %v648
  %v661 = vor.u32 %v659, %v660
  %v662 = vshll.u32 920167782, %v647
  %v663 = vshrl.u32 1326507024, %v648
  %v664 = vor.u32 %v662, %v663
  %vm665 = vcmp.lt.s32.totalorder %v646, 1
  %vm666 = vcmp.lt.s32.totalorder %v646, 2
  %vm667 = vcmp.lt.s32.totalorder %v646, 3
  %vm668 = vcmp.lt.s32.totalorder %v646, 4
  %v669 = vsel %vm665, %v649, %v652
  %v670 = vsel %vm668, %v658, 2102212464
  %v671 = vsel %vm667, %v655, %v670
  %v672 = vsel %vm666, %v669, %v671
  %v673 = vsel %vm665, %v652, %v655
  %v674 = vsel %vm668, %v661, 920167782
  %v675 = vsel %vm667, %v658, %v674
  %v676 = vsel %vm666, %v673, %v675
  %v677 = vsel %vm665, %v655, %v658
  %v678 = vsel %vm668, %v664, 1326507024
  %v679 = vsel %vm667, %v661, %v678
  %v680 = vsel %vm666, %v677, %v679
  %v681 = vshll.u32 %v641, 8
  %v682 = vand.u32 %v681, 65535
  %v683 = vshrl.u32 %v681, 16
  %v684 = vand.u32 %v680, 65535
  %v685 = vshrl.u32 %v680, 16
  %v686 = vmul.u32 %v682, %v684
  %v687 = vmul.u32 %v682, %v685
  %v688 = vmul.u32 %v683, %v684
  %v689 = vmul.u32 %v683, %v685
  %v690 = vshll.u32 %v687, 16
  %v691 = vshrl.u32 %v687, 16
  %v692 = vshll.u32 %v688, 16
  %v693 = vshrl.u32 %v688, 16
  %vm694 = vc.u32 %v686, %v690
  %v695 = vsel %vm694, 1, 0
  %v696 = vadd.s32 %v686, %v690
  %v697 = vadd.s32 %v689, %v695
  %vm698 = vc.u32 %v696, %v692
  %v699 = vsel %vm698, 1, 0
  %v700 = vadd.s32 %v696, %v692
  %v701 = vadd.s32 %v697, %v699
  %v702 = vadd.s32 %v701, %v691
  %v703 = vadd.s32 %v702, %v693
  %v704 = vand.u32 %v681, 65535
  %v705 = vshrl.u32 %v681, 16
  %v706 = vand.u32 %v676, 65535
  %v707 = vshrl.u32 %v676, 16
  %v708 = vmul.u32 %v704, %v706
  %v709 = vmul.u32 %v704, %v707
  %v710 = vmul.u32 %v705, %v706
  %v711 = vmul.u32 %v705, %v707
  %v712 = vshll.u32 %v709, 16
  %v713 = vshrl.u32 %v709, 16
  %v714 = vshll.u32 %v710, 16
  %v715 = vshrl.u32 %v710, 16
  %vm716 = vc.u32 %v708, %v712
  %v717 = vsel %vm716, 1, 0
  %v718 = vadd.s32 %v708, %v712
  %v719 = vadd.s32 %v711, %v717
  %vm720 = vc.u32 %v718, %v714
  %v721 = vsel %vm720, 1, 0
  %v722 = vadd.s32 %v718, %v714
  %v723 = vadd.s32 %v719, %v721
  %v724 = vadd.s32 %v723, %v713
  %v725 = vadd.s32 %v724, %v715
  %v726 = vmul.u32 %v681, %v672
  %v727 = vadd.s32 %v703, %v722
  %vm728 = vc.u32 %v703, %v722
  %v729 = vadd.s32 %v725, 1
  %v730 = vsel %vm728, %v729, %v725
  %v731 = vadd.s32 %v726, %v730
  %v732 = vadd.s32 %v731, 536870912
  %v733 = vshrl.u32 %v732, 30
  %v734 = vshll.u32 %v733, 30
  %v735 = vsub.s32 %v731, %v734
  %vm736 = vcmp.lt.s32.totalorder %v735, 0
  %v737 = vsub.s32 0, %v735
  %v738 = vsel %vm736, %v737, %v735
  %v739 = vclz %v738
  %v740 = vsub.s32 %v739, 2
  %vm741 = vcmp.gt.s32.totalorder 0, %v740
  %v742 = vsel %vm741, 0, %v740
  %v743 = vsub.s32 32, %v742
  %v744 = vshll.u32 %v735, %v742
  %v745 = vshrl.u32 %v727, %v743
  %v746 = vor.u32 %v744, %v745
  %v747 = vsub.s32 4294967266, %v742
  %v748 = vadd.s32 %v747, 127
  %v749 = vshll.u32 %v748, 23
  %v750 = vor.u32 4788187, %v749
  %v751 = vand.u32 2147483647, %v750
  %v753 = vcvt.s32.f32 %v746
  %v754 = vmul.f32 %v753, %v751
  %v755 = vxor.u32 %v754, 2147483648
  %v756 = vsel %vm635, %v755, %v754
  %v757 = vsub.s32 4, %v733
  %v758 = vsel %vm635, %v757, %v733
  %v759 = vsel %vm634, %v293, %v756
  %v760 = vsel %vm634, 0, %v758
  %v761 = vmul.f32 %v759, %v759
  %v762 = vmul.f32 %v761, -0.001358992
  %v763 = vadd.f32 %v762, 0.041655596
  %v764 = vmul.f32 %v761, %v763
  %v765 = vadd.f32 %v764, -0.4999988
  %v766 = vmul.f32 %v761, %v765
  %v767 = vadd.f32 1.0, %v766
  %v768 = vmul.f32 %v759, %v759
  %v769 = vmul.f32 %v768, -0.00019511016
  %v770 = vadd.f32 %v769, 0.008332121
  %v771 = vmul.f32 %v768, %v770
  %v772 = vadd.f32 %v771, -0.16666654
  %v773 = vmul.f32 %v768, %v772
  %v774 = vadd.f32 %v773, 1.0
  %v775 = vmul.f32 %v774, %v759
  %vm776 = vweird.f32 %v293
  %v777 = vadd.s32 %v760, 3
  %v778 = vand.u32 %v777, 3
  %vm779 = vcmp.lt.s32.totalorder %v778, 2
  %vm780 = vcmp.eq.s32.totalorder %v778, 0
  %v781 = vxor.u32 %v775, 2147483648
  %v782 = vsel %vm780, %v767, %v781
  %vm783 = vcmp.eq.s32.totalorder %v778, 2
  %v784 = vxor.u32 %v767, 2147483648
  %v785 = vsel %vm783, %v784, %v775
  %v786 = vsel %vm779, %v782, %v785
  %v787 = vsel %vm776, nan, %v786
  %v788 = vand.u32 2147483647, %v294
  %vm789 = vcmp.le.f32.partialorder %v788, 0.7853982
  %vm790 = vcmp.lt.s32.totalorder %v294, 0
  %v791 = vand.u32 %v294, 2139095040
  %v792 = vshrl.u32 %v791, 23
  %v793 = vsub.s32 %v792, 127
  %v794 = vand.u32 2147483647, %v294
  %v795 = vand.u32 %v794, 8388607
  %v796 = vor.u32 %v795, 8388608
  %v797 = vsub.s32 0, %v796
  %v798 = vadd.s32 %v793, 1
  %vm799 = vcmp.gt.s32.totalorder %v798, 0
  %v800 = vsel %vm799, %v798, 0
  %v801 = vshrl.u32 %v800, 5
  %v802 = vand.u32 %v800, 31
  %v803 = vsub.s32 32, %v802
  %v804 = vshrl.u32 683565275, %v803
  %v805 = vshll.u32 683565275, %v802
  %v806 = vshrl.u32 2475754826, %v803
  %v807 = vor.u32 %v805, %v806
  %v808 = vshll.u32 2475754826, %v802
  %v809 = vshrl.u32 2131351028, %v803
  %v810 = vor.u32 %v808, %v809
  %v811 = vshll.u32 2131351028, %v802
  %v812 = vshrl.u32 2102212464, %v803
  %v813 = vor.u32 %v811, %v812
  %v814 = vshll.u32 2102212464, %v802
  %v815 = vshrl.u32 920167782, %v803
  %v816 = vor.u32 %v814, %v815
  %v817 = vshll.u32 920167782, %v802
  %v818 = vshrl.u32 1326507024, %v803
  %v819 = vor.u32 %v817, %v818
  %vm820 = vcmp.lt.s32.totalorder %v801, 1
  %vm821 = vcmp.lt.s32.totalorder %v801, 2
  %vm822 = vcmp.lt.s32.totalorder %v801, 3
  %vm823 = vcmp.lt.s32.totalorder %v801, 4
  %v824 = vsel %vm820, %v804, %v807
  %v825 = vsel %vm823, %v813, 2102212464
  %v826 = vsel %vm822, %v810, %v825
  %v827 = vsel %vm821, %v824, %v826
  %v828 = vsel %vm820, %v807, %v810
  %v829 = vsel %vm823, %v816, 920167782
  %v830 = vsel %vm822, %v813, %v829
  %v831 = vsel %vm821, %v828, %v830
  %v832 = vsel %vm820, %v810, %v813
  %v833 = vsel %vm823, %v819, 1326507024
  %v834 = vsel %vm822, %v816, %v833
  %v835 = vsel %vm821, %v832, %v834
  %v836 = vshll.u32 %v796, 8
  %v837 = vand.u32 %v836, 65535
  %v838 = vshrl.u32 %v836, 16
  %v839 = vand.u32 %v835, 65535
  %v840 = vshrl.u32 %v835, 16
  %v841 = vmul.u32 %v837, %v839
  %v842 = vmul.u32 %v837, %v840
  %v843 = vmul.u32 %v838, %v839
  %v844 = vmul.u32 %v838, %v840
  %v845 = vshll.u32 %v842, 16
  %v846 = vshrl.u32 %v842, 16
  %v847 = vshll.u32 %v843, 16
  %v848 = vshrl.u32 %v843, 16
  %vm849 = vc.u32 %v841, %v845
  %v850 = vsel %vm849, 1, 0
  %v851 = vadd.s32 %v841, %v845
  %v852 = vadd.s32 %v844, %v850
  %vm853 = vc.u32 %v851, %v847
  %v854 = vsel %vm853, 1, 0
  %v855 = vadd.s32 %v851, %v847
  %v856 = vadd.s32 %v852, %v854
  %v857 = vadd.s32 %v856, %v846
  %v858 = vadd.s32 %v857, %v848
  %v859 = vand.u32 %v836, 65535
  %v860 = vshrl.u32 %v836, 16
  %v861 = vand.u32 %v831, 65535
  %v862 = vshrl.u32 %v831, 16
  %v863 = vmul.u32 %v859, %v861
  %v864 = vmul.u32 %v859, %v862
  %v865 = vmul.u32 %v860, %v861
  %v866 = vmul.u32 %v860, %v862
  %v867 = vshll.u32 %v864, 16
  %v868 = vshrl.u32 %v864, 16
  %v869 = vshll.u32 %v865, 16
  %v870 = vshrl.u32 %v865, 16
  %vm871 = vc.u32 %v863, %v867
  %v872 = vsel %vm871, 1, 0
  %v873 = vadd.s32 %v863, %v867
  %v874 = vadd.s32 %v866, %v872
  %vm875 = vc.u32 %v873, %v869
  %v876 = vsel %vm875, 1, 0
  %v877 = vadd.s32 %v873, %v869
  %v878 = vadd.s32 %v874, %v876
  %v879 = vadd.s32 %v878, %v868
  %v880 = vadd.s32 %v879, %v870
  %v881 = vmul.u32 %v836, %v827
  %v882 = vadd.s32 %v858, %v877
  %vm883 = vc.u32 %v858, %v877
  %v884 = vadd.s32 %v880, 1
  %v885 = vsel %vm883, %v884, %v880
  %v886 = vadd.s32 %v881, %v885
  %v887 = vadd.s32 %v886, 536870912
  %v888 = vshrl.u32 %v887, 30
  %v889 = vshll.u32 %v888, 30
  %v890 = vsub.s32 %v886, %v889
  %vm891 = vcmp.lt.s32.totalorder %v890, 0
  %v892 = vsub.s32 0, %v890
  %v893 = vsel %vm891, %v892, %v890
  %v894 = vclz %v893
  %v895 = vsub.s32 %v894, 2
  %vm896 = vcmp.gt.s32.totalorder 0, %v895
  %v897 = vsel %vm896, 0, %v895
  %v898 = vsub.s32 32, %v897
  %v899 = vshll.u32 %v890, %v897
  %v900 = vshrl.u32 %v882, %v898
  %v901 = vor.u32 %v899, %v900
  %v902 = vsub.s32 4294967266, %v897
  %v903 = vadd.s32 %v902, 127
  %v904 = vshll.u32 %v903, 23
  %v905 = vor.u32 4788187, %v904
  %v906 = vand.u32 2147483647, %v905
  %v908 = vcvt.s32.f32 %v901
  %v909 = vmul.f32 %v908, %v906
  %v910 = vxor.u32 %v909, 2147483648
  %v911 = vsel %vm790, %v910, %v909
  %v912 = vsub.s32 4, %v888
  %v913 = vsel %vm790, %v912, %v888
  %v914 = vsel %vm789, %v294, %v911
  %v915 = vsel %vm789, 0, %v913
  %v916 = vmul.f32 %v914, %v914
  %v917 = vmul.f32 %v916, -0.001358992
  %v918 = vadd.f32 %v917, 0.041655596
  %v919 = vmul.f32 %v916, %v918
  %v920 = vadd.f32 %v919, -0.4999988
  %v921 = vmul.f32 %v916, %v920
  %v922 = vadd.f32 1.0, %v921
  %v923 = vmul.f32 %v914, %v914
  %v924 = vmul.f32 %v923, -0.00019511016
  %v925 = vadd.f32 %v924, 0.008332121
  %v926 = vmul.f32 %v923, %v925
  %v927 = vadd.f32 %v926, -0.16666654
  %v928 = vmul.f32 %v923, %v927
  %v929 = vadd.f32 %v928, 1.0
  %v930 = vmul.f32 %v929, %v914
  %vm931 = vweird.f32 %v294
  %v932 = vadd.s32 %v915, 3
  %v933 = vand.u32 %v932, 3
  %vm934 = vcmp.lt.s32.totalorder %v933, 2
  %vm935 = vcmp.eq.s32.totalorder %v933, 0
  %v936 = vxor.u32 %v930, 2147483648
  %v937 = vsel %vm935, %v922, %v936
  %vm938 = vcmp.eq.s32.totalorder %v933, 2
  %v939 = vxor.u32 %v922, 2147483648
  %v940 = vsel %vm938, %v939, %v930
  %v941 = vsel %vm934, %v937, %v940
  %v942 = vsel %vm931, nan, %v941
  %v943 = vand.u32 2147483647, %v295
  %vm944 = vcmp.le.f32.partialorder %v943, 0.7853982
  %vm945 = vcmp.lt.s32.totalorder %v295, 0
  %v946 = vand.u32 %v295, 2139095040
  %v947 = vshrl.u32 %v946, 23
  %v948 = vsub.s32 %v947, 127
  %v949 = vand.u32 2147483647, %v295
  %v950 = vand.u32 %v949, 8388607
  %v951 = vor.u32 %v950, 8388608
  %v952 = vsub.s32 0, %v951
  %v953 = vadd.s32 %v948, 1
  %vm954 = vcmp.gt.s32.totalorder %v953, 0
  %v955 = vsel %vm954, %v953, 0
  %v956 = vshrl.u32 %v955, 5
  %v957 = vand.u32 %v955, 31
  %v958 = vsub.s32 32, %v957
  %v959 = vshrl.u32 683565275, %v958
  %v960 = vshll.u32 683565275, %v957
  %v961 = vshrl.u32 2475754826, %v958
  %v962 = vor.u32 %v960, %v961
  %v963 = vshll.u32 2475754826, %v957
  %v964 = vshrl.u32 2131351028, %v958
  %v965 = vor.u32 %v963, %v964
  %v966 = vshll.u32 2131351028, %v957
  %v967 = vshrl.u32 2102212464, %v958
  %v968 = vor.u32 %v966, %v967
  %v969 = vshll.u32 2102212464, %v957
  %v970 = vshrl.u32 920167782, %v958
  %v971 = vor.u32 %v969, %v970
  %v972 = vshll.u32 920167782, %v957
  %v973 = vshrl.u32 1326507024, %v958
  %v974 = vor.u32 %v972, %v973
  %vm975 = vcmp.lt.s32.totalorder %v956, 1
  %vm976 = vcmp.lt.s32.totalorder %v956, 2
  %vm977 = vcmp.lt.s32.totalorder %v956, 3
  %vm978 = vcmp.lt.s32.totalorder %v956, 4
  %v979 = vsel %vm975, %v959, %v962
  %v980 = vsel %vm978, %v968, 2102212464
  %v981 = vsel %vm977, %v965, %v980
  %v982 = vsel %vm976, %v979, %v981
  %v983 = vsel %vm975, %v962, %v965
  %v984 = vsel %vm978, %v971, 920167782
  %v985 = vsel %vm977, %v968, %v984
  %v986 = vsel %vm976, %v983, %v985
  %v987 = vsel %vm975, %v965, %v968
  %v988 = vsel %vm978, %v974, 1326507024
  %v989 = vsel %vm977, %v971, %v988
  %v990 = vsel %vm976, %v987, %v989
  %v991 = vshll.u32 %v951, 8
  %v992 = vand.u32 %v991, 65535
  %v993 = vshrl.u32 %v991, 16
  %v994 = vand.u32 %v990, 65535
  %v995 = vshrl.u32 %v990, 16
  %v996 = vmul.u32 %v992, %v994
  %v997 = vmul.u32 %v992, %v995
  %v998 = vmul.u32 %v993, %v994
  %v999 = vmul.u32 %v993, %v995
  %v1000 = vshll.u32 %v997, 16
  %v1001 = vshrl.u32 %v997, 16
  %v1002 = vshll.u32 %v998, 16
  %v1003 = vshrl.u32 %v998, 16
  %vm1004 = vc.u32 %v996, %v1000
  %v1005 = vsel %vm1004, 1, 0
  %v1006 = vadd.s32 %v996, %v1000
  %v1007 = vadd.s32 %v999, %v1005
  %vm1008 = vc.u32 %v1006, %v1002
  %v1009 = vsel %vm1008, 1, 0
  %v1010 = vadd.s32 %v1006, %v1002
  %v1011 = vadd.s32 %v1007, %v1009
  %v1012 = vadd.s32 %v1011, %v1001
  %v1013 = vadd.s32 %v1012, %v1003
  %v1014 = vand.u32 %v991, 65535
  %v1015 = vshrl.u32 %v991, 16
  %v1016 = vand.u32 %v986, 65535
  %v1017 = vshrl.u32 %v986, 16
  %v1018 = vmul.u32 %v1014, %v1016
  %v1019 = vmul.u32 %v1014, %v1017
  %v1020 = vmul.u32 %v1015, %v1016
  %v1021 = vmul.u32 %v1015, %v1017
  %v1022 = vshll.u32 %v1019, 16
  %v1023 = vshrl.u32 %v1019, 16
  %v1024 = vshll.u32 %v1020, 16
  %v1025 = vshrl.u32 %v1020, 16
  %vm1026 = vc.u32 %v1018, %v1022
  %v1027 = vsel %vm1026, 1, 0
  %v1028 = vadd.s32 %v1018, %v1022
  %v1029 = vadd.s32 %v1021, %v1027
  %vm1030 = vc.u32 %v1028, %v1024
  %v1031 = vsel %vm1030, 1, 0
  %v1032 = vadd.s32 %v1028, %v1024
  %v1033 = vadd.s32 %v1029, %v1031
  %v1034 = vadd.s32 %v1033, %v1023
  %v1035 = vadd.s32 %v1034, %v1025
  %v1036 = vmul.u32 %v991, %v982
  %v1037 = vadd.s32 %v1013, %v1032
  %vm1038 = vc.u32 %v1013, %v1032
  %v1039 = vadd.s32 %v1035, 1
  %v1040 = vsel %vm1038, %v1039, %v1035
  %v1041 = vadd.s32 %v1036, %v1040
  %v1042 = vadd.s32 %v1041, 536870912
  %v1043 = vshrl.u32 %v1042, 30
  %v1044 = vshll.u32 %v1043, 30
  %v1045 = vsub.s32 %v1041, %v1044
  %vm1046 = vcmp.lt.s32.totalorder %v1045, 0
  %v1047 = vsub.s32 0, %v1045
  %v1048 = vsel %vm1046, %v1047, %v1045
  %v1049 = vclz %v1048
  %v1050 = vsub.s32 %v1049, 2
  %vm1051 = vcmp.gt.s32.totalorder 0, %v1050
  %v1052 = vsel %vm1051, 0, %v1050
  %v1053 = vsub.s32 32, %v1052
  %v1054 = vshll.u32 %v1045, %v1052
  %v1055 = vshrl.u32 %v1037, %v1053
  %v1056 = vor.u32 %v1054, %v1055
  %v1057 = vsub.s32 4294967266, %v1052
  %v1058 = vadd.s32 %v1057, 127
  %v1059 = vshll.u32 %v1058, 23
  %v1060 = vor.u32 4788187, %v1059
  %v1061 = vand.u32 2147483647, %v1060
  %v1063 = vcvt.s32.f32 %v1056
  %v1064 = vmul.f32 %v1063, %v1061
  %v1065 = vxor.u32 %v1064, 2147483648
  %v1066 = vsel %vm945, %v1065, %v1064
  %v1067 = vsub.s32 4, %v1043
  %v1068 = vsel %vm945, %v1067, %v1043
  %v1069 = vsel %vm944, %v295, %v1066
  %v1070 = vsel %vm944, 0, %v1068
  %v1071 = vmul.f32 %v1069, %v1069
  %v1072 = vmul.f32 %v1071, -0.001358992
  %v1073 = vadd.f32 %v1072, 0.041655596
  %v1074 = vmul.f32 %v1071, %v1073
  %v1075 = vadd.f32 %v1074, -0.4999988
  %v1076 = vmul.f32 %v1071, %v1075
  %v1077 = vadd.f32 1.0, %v1076
  %v1078 = vmul.f32 %v1069, %v1069
  %v1079 = vmul.f32 %v1078, -0.00019511016
  %v1080 = vadd.f32 %v1079, 0.008332121
  %v1081 = vmul.f32 %v1078, %v1080
  %v1082 = vadd.f32 %v1081, -0.16666654
  %v1083 = vmul.f32 %v1078, %v1082
  %v1084 = vadd.f32 %v1083, 1.0
  %v1085 = vmul.f32 %v1084, %v1069
  %vm1086 = vweird.f32 %v295
  %v1087 = vadd.s32 %v1070, 3
  %v1088 = vand.u32 %v1087, 3
  %vm1089 = vcmp.lt.s32.totalorder %v1088, 2
  %vm1090 = vcmp.eq.s32.totalorder %v1088, 0
  %v1091 = vxor.u32 %v1085, 2147483648
  %v1092 = vsel %vm1090, %v1077, %v1091
  %vm1093 = vcmp.eq.s32.totalorder %v1088, 2
  %v1094 = vxor.u32 %v1077, 2147483648
  %v1095 = vsel %vm1093, %v1094, %v1085
  %v1096 = vsel %vm1089, %v1092, %v1095
  %v1097 = vsel %vm1086, nan, %v1096
  %v1098 = vand.u32 2147483647, %v296
  %vm1099 = vcmp.le.f32.partialorder %v1098, 0.7853982
  %vm1100 = vcmp.lt.s32.totalorder %v296, 0
  %v1101 = vand.u32 %v296, 2139095040
  %v1102 = vshrl.u32 %v1101, 23
  %v1103 = vsub.s32 %v1102, 127
  %v1104 = vand.u32 2147483647, %v296
  %v1105 = vand.u32 %v1104, 8388607
  %v1106 = vor.u32 %v1105, 8388608
  %v1107 = vsub.s32 0, %v1106
  %v1108 = vadd.s32 %v1103, 1
  %vm1109 = vcmp.gt.s32.totalorder %v1108, 0
  %v1110 = vsel %vm1109, %v1108, 0
  %v1111 = vshrl.u32 %v1110, 5
  %v1112 = vand.u32 %v1110, 31
  %v1113 = vsub.s32 32, %v1112
  %v1114 = vshrl.u32 683565275, %v1113
  %v1115 = vshll.u32 683565275, %v1112
  %v1116 = vshrl.u32 2475754826, %v1113
  %v1117 = vor.u32 %v1115, %v1116
  %v1118 = vshll.u32 2475754826, %v1112
  %v1119 = vshrl.u32 2131351028, %v1113
  %v1120 = vor.u32 %v1118, %v1119
  %v1121 = vshll.u32 2131351028, %v1112
  %v1122 = vshrl.u32 2102212464, %v1113
  %v1123 = vor.u32 %v1121, %v1122
  %v1124 = vshll.u32 2102212464, %v1112
  %v1125 = vshrl.u32 920167782, %v1113
  %v1126 = vor.u32 %v1124, %v1125
  %v1127 = vshll.u32 920167782, %v1112
  %v1128 = vshrl.u32 1326507024, %v1113
  %v1129 = vor.u32 %v1127, %v1128
  %vm1130 = vcmp.lt.s32.totalorder %v1111, 1
  %vm1131 = vcmp.lt.s32.totalorder %v1111, 2
  %vm1132 = vcmp.lt.s32.totalorder %v1111, 3
  %vm1133 = vcmp.lt.s32.totalorder %v1111, 4
  %v1134 = vsel %vm1130, %v1114, %v1117
  %v1135 = vsel %vm1133, %v1123, 2102212464
  %v1136 = vsel %vm1132, %v1120, %v1135
  %v1137 = vsel %vm1131, %v1134, %v1136
  %v1138 = vsel %vm1130, %v1117, %v1120
  %v1139 = vsel %vm1133, %v1126, 920167782
  %v1140 = vsel %vm1132, %v1123, %v1139
  %v1141 = vsel %vm1131, %v1138, %v1140
  %v1142 = vsel %vm1130, %v1120, %v1123
  %v1143 = vsel %vm1133, %v1129, 1326507024
  %v1144 = vsel %vm1132, %v1126, %v1143
  %v1145 = vsel %vm1131, %v1142, %v1144
  %v1146 = vshll.u32 %v1106, 8
  %v1147 = vand.u32 %v1146, 65535
  %v1148 = vshrl.u32 %v1146, 16
  %v1149 = vand.u32 %v1145, 65535
  %v1150 = vshrl.u32 %v1145, 16
  %v1151 = vmul.u32 %v1147, %v1149
  %v1152 = vmul.u32 %v1147, %v1150
  %v1153 = vmul.u32 %v1148, %v1149
  %v1154 = vmul.u32 %v1148, %v1150
  %v1155 = vshll.u32 %v1152, 16
  %v1156 = vshrl.u32 %v1152, 16
  %v1157 = vshll.u32 %v1153, 16
  %v1158 = vshrl.u32 %v1153, 16
  %vm1159 = vc.u32 %v1151, %v1155
  %v1160 = vsel %vm1159, 1, 0
  %v1161 = vadd.s32 %v1151, %v1155
  %v1162 = vadd.s32 %v1154, %v1160
  %vm1163 = vc.u32 %v1161, %v1157
  %v1164 = vsel %vm1163, 1, 0
  %v1165 = vadd.s32 %v1161, %v1157
  %v1166 = vadd.s32 %v1162, %v1164
  %v1167 = vadd.s32 %v1166, %v1156
  %v1168 = vadd.s32 %v1167, %v1158
  %v1169 = vand.u32 %v1146, 65535
  %v1170 = vshrl.u32 %v1146, 16
  %v1171 = vand.u32 %v1141, 65535
  %v1172 = vshrl.u32 %v1141, 16
  %v1173 = vmul.u32 %v1169, %v1171
  %v1174 = vmul.u32 %v1169, %v1172
  %v1175 = vmul.u32 %v1170, %v1171
  %v1176 = vmul.u32 %v1170, %v1172
  %v1177 = vshll.u32 %v1174, 16
  %v1178 = vshrl.u32 %v1174, 16
  %v1179 = vshll.u32 %v1175, 16
  %v1180 = vshrl.u32 %v1175, 16
  %vm1181 = vc.u32 %v1173, %v1177
  %v1182 = vsel %vm1181, 1, 0
  %v1183 = vadd.s32 %v1173, %v1177
  %v1184 = vadd.s32 %v1176, %v1182
  %vm1185 = vc.u32 %v1183, %v1179
  %v1186 = vsel %vm1185, 1, 0
  %v1187 = vadd.s32 %v1183, %v1179
  %v1188 = vadd.s32 %v1184, %v1186
  %v1189 = vadd.s32 %v1188, %v1178
  %v1190 = vadd.s32 %v1189, %v1180
  %v1191 = vmul.u32 %v1146, %v1137
  %v1192 = vadd.s32 %v1168, %v1187
  %vm1193 = vc.u32 %v1168, %v1187
  %v1194 = vadd.s32 %v1190, 1
  %v1195 = vsel %vm1193, %v1194, %v1190
  %v1196 = vadd.s32 %v1191, %v1195
  %v1197 = vadd.s32 %v1196, 536870912
  %v1198 = vshrl.u32 %v1197, 30
  %v1199 = vshll.u32 %v1198, 30
  %v1200 = vsub.s32 %v1196, %v1199
  %vm1201 = vcmp.lt.s32.totalorder %v1200, 0
  %v1202 = vsub.s32 0, %v1200
  %v1203 = vsel %vm1201, %v1202, %v1200
  %v1204 = vclz %v1203
  %v1205 = vsub.s32 %v1204, 2
  %vm1206 = vcmp.gt.s32.totalorder 0, %v1205
  %v1207 = vsel %vm1206, 0, %v1205
  %v1208 = vsub.s32 32, %v1207
  %v1209 = vshll.u32 %v1200, %v1207
  %v1210 = vshrl.u32 %v1192, %v1208
  %v1211 = vor.u32 %v1209, %v1210
  %v1212 = vsub.s32 4294967266, %v1207
  %v1213 = vadd.s32 %v1212, 127
  %v1214 = vshll.u32 %v1213, 23
  %v1215 = vor.u32 4788187, %v1214
  %v1216 = vand.u32 2147483647, %v1215
  %v1218 = vcvt.s32.f32 %v1211
  %v1219 = vmul.f32 %v1218, %v1216
  %v1220 = vxor.u32 %v1219, 2147483648
  %v1221 = vsel %vm1100, %v1220, %v1219
  %v1222 = vsub.s32 4, %v1198
  %v1223 = vsel %vm1100, %v1222, %v1198
  %v1224 = vsel %vm1099, %v296, %v1221
  %v1225 = vsel %vm1099, 0, %v1223
  %v1226 = vmul.f32 %v1224, %v1224
  %v1227 = vmul.f32 %v1226, -0.001358992
  %v1228 = vadd.f32 %v1227, 0.041655596
  %v1229 = vmul.f32 %v1226, %v1228
  %v1230 = vadd.f32 %v1229, -0.4999988
  %v1231 = vmul.f32 %v1226, %v1230
  %v1232 = vadd.f32 1.0, %v1231
  %v1233 = vmul.f32 %v1224, %v1224
  %v1234 = vmul.f32 %v1233, -0.00019511016
  %v1235 = vadd.f32 %v1234, 0.008332121
  %v1236 = vmul.f32 %v1233, %v1235
  %v1237 = vadd.f32 %v1236, -0.16666654
  %v1238 = vmul.f32 %v1233, %v1237
  %v1239 = vadd.f32 %v1238, 1.0
  %v1240 = vmul.f32 %v1239, %v1224
  %vm1241 = vweird.f32 %v296
  %v1242 = vadd.s32 %v1225, 3
  %v1243 = vand.u32 %v1242, 3
  %vm1244 = vcmp.lt.s32.totalorder %v1243, 2
  %vm1245 = vcmp.eq.s32.totalorder %v1243, 0
  %v1246 = vxor.u32 %v1240, 2147483648
  %v1247 = vsel %vm1245, %v1232, %v1246
  %vm1248 = vcmp.eq.s32.totalorder %v1243, 2
  %v1249 = vxor.u32 %v1232, 2147483648
  %v1250 = vsel %vm1248, %v1249, %v1240
  %v1251 = vsel %vm1244, %v1247, %v1250
  %v1252 = vsel %vm1241, nan, %v1251
  %v1253 = vand.u32 2147483647, %v297
  %vm1254 = vcmp.le.f32.partialorder %v1253, 0.7853982
  %vm1255 = vcmp.lt.s32.totalorder %v297, 0
  %v1256 = vand.u32 %v297, 2139095040
  %v1257 = vshrl.u32 %v1256, 23
  %v1258 = vsub.s32 %v1257, 127
  %v1259 = vand.u32 2147483647, %v297
  %v1260 = vand.u32 %v1259, 8388607
  %v1261 = vor.u32 %v1260, 8388608
  %v1262 = vsub.s32 0, %v1261
  %v1263 = vadd.s32 %v1258, 1
  %vm1264 = vcmp.gt.s32.totalorder %v1263, 0
  %v1265 = vsel %vm1264, %v1263, 0
  %v1266 = vshrl.u32 %v1265, 5
  %v1267 = vand.u32 %v1265, 31
  %v1268 = vsub.s32 32, %v1267
  %v1269 = vshrl.u32 683565275, %v1268
  %v1270 = vshll.u32 683565275, %v1267
  %v1271 = vshrl.u32 2475754826, %v1268
  %v1272 = vor.u32 %v1270, %v1271
  %v1273 = vshll.u32 2475754826, %v1267
  %v1274 = vshrl.u32 2131351028, %v1268
  %v1275 = vor.u32 %v1273, %v1274
  %v1276 = vshll.u32 2131351028, %v1267
  %v1277 = vshrl.u32 2102212464, %v1268
  %v1278 = vor.u32 %v1276, %v1277
  %v1279 = vshll.u32 2102212464, %v1267
  %v1280 = vshrl.u32 920167782, %v1268
  %v1281 = vor.u32 %v1279, %v1280
  %v1282 = vshll.u32 920167782, %v1267
  %v1283 = vshrl.u32 1326507024, %v1268
  %v1284 = vor.u32 %v1282, %v1283
  %vm1285 = vcmp.lt.s32.totalorder %v1266, 1
  %vm1286 = vcmp.lt.s32.totalorder %v1266, 2
  %vm1287 = vcmp.lt.s32.totalorder %v1266, 3
  %vm1288 = vcmp.lt.s32.totalorder %v1266, 4
  %v1289 = vsel %vm1285, %v1269, %v1272
  %v1290 = vsel %vm1288, %v1278, 2102212464
  %v1291 = vsel %vm1287, %v1275, %v1290
  %v1292 = vsel %vm1286, %v1289, %v1291
  %v1293 = vsel %vm1285, %v1272, %v1275
  %v1294 = vsel %vm1288, %v1281, 920167782
  %v1295 = vsel %vm1287, %v1278, %v1294
  %v1296 = vsel %vm1286, %v1293, %v1295
  %v1297 = vsel %vm1285, %v1275, %v1278
  %v1298 = vsel %vm1288, %v1284, 1326507024
  %v1299 = vsel %vm1287, %v1281, %v1298
  %v1300 = vsel %vm1286, %v1297, %v1299
  %v1301 = vshll.u32 %v1261, 8
  %v1302 = vand.u32 %v1301, 65535
  %v1303 = vshrl.u32 %v1301, 16
  %v1304 = vand.u32 %v1300, 65535
  %v1305 = vshrl.u32 %v1300, 16
  %v1306 = vmul.u32 %v1302, %v1304
  %v1307 = vmul.u32 %v1302, %v1305
  %v1308 = vmul.u32 %v1303, %v1304
  %v1309 = vmul.u32 %v1303, %v1305
  %v1310 = vshll.u32 %v1307, 16
  %v1311 = vshrl.u32 %v1307, 16
  %v1312 = vshll.u32 %v1308, 16
  %v1313 = vshrl.u32 %v1308, 16
  %vm1314 = vc.u32 %v1306, %v1310
  %v1315 = vsel %vm1314, 1, 0
  %v1316 = vadd.s32 %v1306, %v1310
  %v1317 = vadd.s32 %v1309, %v1315
  %vm1318 = vc.u32 %v1316, %v1312
  %v1319 = vsel %vm1318, 1, 0
  %v1320 = vadd.s32 %v1316, %v1312
  %v1321 = vadd.s32 %v1317, %v1319
  %v1322 = vadd.s32 %v1321, %v1311
  %v1323 = vadd.s32 %v1322, %v1313
  %v1324 = vand.u32 %v1301, 65535
  %v1325 = vshrl.u32 %v1301, 16
  %v1326 = vand.u32 %v1296, 65535
  %v1327 = vshrl.u32 %v1296, 16
  %v1328 = vmul.u32 %v1324, %v1326
  %v1329 = vmul.u32 %v1324, %v1327
  %v1330 = vmul.u32 %v1325, %v1326
  %v1331 = vmul.u32 %v1325, %v1327
  %v1332 = vshll.u32 %v1329, 16
  %v1333 = vshrl.u32 %v1329, 16
  %v1334 = vshll.u32 %v1330, 16
  %v1335 = vshrl.u32 %v1330, 16
  %vm1336 = vc.u32 %v1328, %v1332
  %v1337 = vsel %vm1336, 1, 0
  %v1338 = vadd.s32 %v1328, %v1332
  %v1339 = vadd.s32 %v1331, %v1337
  %vm1340 = vc.u32 %v1338, %v1334
  %v1341 = vsel %vm1340, 1, 0
  %v1342 = vadd.s32 %v1338, %v1334
  %v1343 = vadd.s32 %v1339, %v1341
  %v1344 = vadd.s32 %v1343, %v1333
  %v1345 = vadd.s32 %v1344, %v1335
  %v1346 = vmul.u32 %v1301, %v1292
  %v1347 = vadd.s32 %v1323, %v1342
  %vm1348 = vc.u32 %v1323, %v1342
  %v1349 = vadd.s32 %v1345, 1
  %v1350 = vsel %vm1348, %v1349, %v1345
  %v1351 = vadd.s32 %v1346, %v1350
  %v1352 = vadd.s32 %v1351, 536870912
  %v1353 = vshrl.u32 %v1352, 30
  %v1354 = vshll.u32 %v1353, 30
  %v1355 = vsub.s32 %v1351, %v1354
  %vm1356 = vcmp.lt.s32.totalorder %v1355, 0
  %v1357 = vsub.s32 0, %v1355
  %v1358 = vsel %vm1356, %v1357, %v1355
  %v1359 = vclz %v1358
  %v1360 = vsub.s32 %v1359, 2
  %vm1361 = vcmp.gt.s32.totalorder 0, %v1360
  %v1362 = vsel %vm1361, 0, %v1360
  %v1363 = vsub.s32 32, %v1362
  %v1364 = vshll.u32 %v1355, %v1362
  %v1365 = vshrl.u32 %v1347, %v1363
  %v1366 = vor.u32 %v1364, %v1365
  %v1367 = vsub.s32 4294967266, %v1362
  %v1368 = vadd.s32 %v1367, 127
  %v1369 = vshll.u32 %v1368, 23
  %v1370 = vor.u32 4788187, %v1369
  %v1371 = vand.u32 2147483647, %v1370
  %v1373 = vcvt.s32.f32 %v1366
  %v1374 = vmul.f32 %v1373, %v1371
  %v1375 = vxor.u32 %v1374, 2147483648
  %v1376 = vsel %vm1255, %v1375, %v1374
  %v1377 = vsub.s32 4, %v1353
  %v1378 = vsel %vm1255, %v1377, %v1353
  %v1379 = vsel %vm1254, %v297, %v1376
  %v1380 = vsel %vm1254, 0, %v1378
  %v1381 = vmul.f32 %v1379, %v1379
  %v1382 = vmul.f32 %v1381, -0.001358992
  %v1383 = vadd.f32 %v1382, 0.041655596
  %v1384 = vmul.f32 %v1381, %v1383
  %v1385 = vadd.f32 %v1384, -0.4999988
  %v1386 = vmul.f32 %v1381, %v1385
  %v1387 = vadd.f32 1.0, %v1386
  %v1388 = vmul.f32 %v1379, %v1379
  %v1389 = vmul.f32 %v1388, -0.00019511016
  %v1390 = vadd.f32 %v1389, 0.008332121
  %v1391 = vmul.f32 %v1388, %v1390
  %v1392 = vadd.f32 %v1391, -0.16666654
  %v1393 = vmul.f32 %v1388, %v1392
  %v1394 = vadd.f32 %v1393, 1.0
  %v1395 = vmul.f32 %v1394, %v1379
  %vm1396 = vweird.f32 %v297
  %v1397 = vadd.s32 %v1380, 3
  %v1398 = vand.u32 %v1397, 3
  %vm1399 = vcmp.lt.s32.totalorder %v1398, 2
  %vm1400 = vcmp.eq.s32.totalorder %v1398, 0
  %v1401 = vxor.u32 %v1395, 2147483648
  %v1402 = vsel %vm1400, %v1387, %v1401
  %vm1403 = vcmp.eq.s32.totalorder %v1398, 2
  %v1404 = vxor.u32 %v1387, 2147483648
  %v1405 = vsel %vm1403, %v1404, %v1395
  %v1406 = vsel %vm1399, %v1402, %v1405
  %v1407 = vsel %vm1396, nan, %v1406
  %v1408 = vand.u32 2147483647, %v298
  %vm1409 = vcmp.le.f32.partialorder %v1408, 0.7853982
  %vm1410 = vcmp.lt.s32.totalorder %v298, 0
  %v1411 = vand.u32 %v298, 2139095040
  %v1412 = vshrl.u32 %v1411, 23
  %v1413 = vsub.s32 %v1412, 127
  %v1414 = vand.u32 2147483647, %v298
  %v1415 = vand.u32 %v1414, 8388607
  %v1416 = vor.u32 %v1415, 8388608
  %v1417 = vsub.s32 0, %v1416
  %v1418 = vadd.s32 %v1413, 1
  %vm1419 = vcmp.gt.s32.totalorder %v1418, 0
  %v1420 = vsel %vm1419, %v1418, 0
  %v1421 = vshrl.u32 %v1420, 5
  %v1422 = vand.u32 %v1420, 31
  %v1423 = vsub.s32 32, %v1422
  %v1424 = vshrl.u32 683565275, %v1423
  %v1425 = vshll.u32 683565275, %v1422
  %v1426 = vshrl.u32 2475754826, %v1423
  %v1427 = vor.u32 %v1425, %v1426
  %v1428 = vshll.u32 2475754826, %v1422
  %v1429 = vshrl.u32 2131351028, %v1423
  %v1430 = vor.u32 %v1428, %v1429
  %v1431 = vshll.u32 2131351028, %v1422
  %v1432 = vshrl.u32 2102212464, %v1423
  %v1433 = vor.u32 %v1431, %v1432
  %v1434 = vshll.u32 2102212464, %v1422
  %v1435 = vshrl.u32 920167782, %v1423
  %v1436 = vor.u32 %v1434, %v1435
  %v1437 = vshll.u32 920167782, %v1422
  %v1438 = vshrl.u32 1326507024, %v1423
  %v1439 = vor.u32 %v1437, %v1438
  %vm1440 = vcmp.lt.s32.totalorder %v1421, 1
  %vm1441 = vcmp.lt.s32.totalorder %v1421, 2
  %vm1442 = vcmp.lt.s32.totalorder %v1421, 3
  %vm1443 = vcmp.lt.s32.totalorder %v1421, 4
  %v1444 = vsel %vm1440, %v1424, %v1427
  %v1445 = vsel %vm1443, %v1433, 2102212464
  %v1446 = vsel %vm1442, %v1430, %v1445
  %v1447 = vsel %vm1441, %v1444, %v1446
  %v1448 = vsel %vm1440, %v1427, %v1430
  %v1449 = vsel %vm1443, %v1436, 920167782
  %v1450 = vsel %vm1442, %v1433, %v1449
  %v1451 = vsel %vm1441, %v1448, %v1450
  %v1452 = vsel %vm1440, %v1430, %v1433
  %v1453 = vsel %vm1443, %v1439, 1326507024
  %v1454 = vsel %vm1442, %v1436, %v1453
  %v1455 = vsel %vm1441, %v1452, %v1454
  %v1456 = vshll.u32 %v1416, 8
  %v1457 = vand.u32 %v1456, 65535
  %v1458 = vshrl.u32 %v1456, 16
  %v1459 = vand.u32 %v1455, 65535
  %v1460 = vshrl.u32 %v1455, 16
  %v1461 = vmul.u32 %v1457, %v1459
  %v1462 = vmul.u32 %v1457, %v1460
  %v1463 = vmul.u32 %v1458, %v1459
  %v1464 = vmul.u32 %v1458, %v1460
  %v1465 = vshll.u32 %v1462, 16
  %v1466 = vshrl.u32 %v1462, 16
  %v1467 = vshll.u32 %v1463, 16
  %v1468 = vshrl.u32 %v1463, 16
  %vm1469 = vc.u32 %v1461, %v1465
  %v1470 = vsel %vm1469, 1, 0
  %v1471 = vadd.s32 %v1461, %v1465
  %v1472 = vadd.s32 %v1464, %v1470
  %vm1473 = vc.u32 %v1471, %v1467
  %v1474 = vsel %vm1473, 1, 0
  %v1475 = vadd.s32 %v1471, %v1467
  %v1476 = vadd.s32 %v1472, %v1474
  %v1477 = vadd.s32 %v1476, %v1466
  %v1478 = vadd.s32 %v1477, %v1468
  %v1479 = vand.u32 %v1456, 65535
  %v1480 = vshrl.u32 %v1456, 16
  %v1481 = vand.u32 %v1451, 65535
  %v1482 = vshrl.u32 %v1451, 16
  %v1483 = vmul.u32 %v1479, %v1481
  %v1484 = vmul.u32 %v1479, %v1482
  %v1485 = vmul.u32 %v1480, %v1481
  %v1486 = vmul.u32 %v1480, %v1482
  %v1487 = vshll.u32 %v1484, 16
  %v1488 = vshrl.u32 %v1484, 16
  %v1489 = vshll.u32 %v1485, 16
  %v1490 = vshrl.u32 %v1485, 16
  %vm1491 = vc.u32 %v1483, %v1487
  %v1492 = vsel %vm1491, 1, 0
  %v1493 = vadd.s32 %v1483, %v1487
  %v1494 = vadd.s32 %v1486, %v1492
  %vm1495 = vc.u32 %v1493, %v1489
  %v1496 = vsel %vm1495, 1, 0
  %v1497 = vadd.s32 %v1493, %v1489
  %v1498 = vadd.s32 %v1494, %v1496
  %v1499 = vadd.s32 %v1498, %v1488
  %v1500 = vadd.s32 %v1499, %v1490
  %v1501 = vmul.u32 %v1456, %v1447
  %v1502 = vadd.s32 %v1478, %v1497
  %vm1503 = vc.u32 %v1478, %v1497
  %v1504 = vadd.s32 %v1500, 1
  %v1505 = vsel %vm1503, %v1504, %v1500
  %v1506 = vadd.s32 %v1501, %v1505
  %v1507 = vadd.s32 %v1506, 536870912
  %v1508 = vshrl.u32 %v1507, 30
  %v1509 = vshll.u32 %v1508, 30
  %v1510 = vsub.s32 %v1506, %v1509
  %vm1511 = vcmp.lt.s32.totalorder %v1510, 0
  %v1512 = vsub.s32 0, %v1510
  %v1513 = vsel %vm1511, %v1512, %v1510
  %v1514 = vclz %v1513
  %v1515 = vsub.s32 %v1514, 2
  %vm1516 = vcmp.gt.s32.totalorder 0, %v1515
  %v1517 = vsel %vm1516, 0, %v1515
  %v1518 = vsub.s32 32, %v1517
  %v1519 = vshll.u32 %v1510, %v1517
  %v1520 = vshrl.u32 %v1502, %v1518
  %v1521 = vor.u32 %v1519, %v1520
  %v1522 = vsub.s32 4294967266, %v1517
  %v1523 = vadd.s32 %v1522, 127
  %v1524 = vshll.u32 %v1523, 23
  %v1525 = vor.u32 4788187, %v1524
  %v1526 = vand.u32 2147483647, %v1525
  %v1528 = vcvt.s32.f32 %v1521
  %v1529 = vmul.f32 %v1528, %v1526
  %v1530 = vxor.u32 %v1529, 2147483648
  %v1531 = vsel %vm1410, %v1530, %v1529
  %v1532 = vsub.s32 4, %v1508
  %v1533 = vsel %vm1410, %v1532, %v1508
  %v1534 = vsel %vm1409, %v298, %v1531
  %v1535 = vsel %vm1409, 0, %v1533
  %v1536 = vmul.f32 %v1534, %v1534
  %v1537 = vmul.f32 %v1536, -0.001358992
  %v1538 = vadd.f32 %v1537, 0.041655596
  %v1539 = vmul.f32 %v1536, %v1538
  %v1540 = vadd.f32 %v1539, -0.4999988
  %v1541 = vmul.f32 %v1536, %v1540
  %v1542 = vadd.f32 1.0, %v1541
  %v1543 = vmul.f32 %v1534, %v1534
  %v1544 = vmul.f32 %v1543, -0.00019511016
  %v1545 = vadd.f32 %v1544, 0.008332121
  %v1546 = vmul.f32 %v1543, %v1545
  %v1547 = vadd.f32 %v1546, -0.16666654
  %v1548 = vmul.f32 %v1543, %v1547
  %v1549 = vadd.f32 %v1548, 1.0
  %v1550 = vmul.f32 %v1549, %v1534
  %vm1551 = vweird.f32 %v298
  %v1552 = vadd.s32 %v1535, 3
  %v1553 = vand.u32 %v1552, 3
  %vm1554 = vcmp.lt.s32.totalorder %v1553, 2
  %vm1555 = vcmp.eq.s32.totalorder %v1553, 0
  %v1556 = vxor.u32 %v1550, 2147483648
  %v1557 = vsel %vm1555, %v1542, %v1556
  %vm1558 = vcmp.eq.s32.totalorder %v1553, 2
  %v1559 = vxor.u32 %v1542, 2147483648
  %v1560 = vsel %vm1558, %v1559, %v1550
  %v1561 = vsel %vm1554, %v1557, %v1560
  %v1562 = vsel %vm1551, nan, %v1561
  %v1563 = vand.u32 2147483647, %v299
  %vm1564 = vcmp.le.f32.partialorder %v1563, 0.7853982
  %vm1565 = vcmp.lt.s32.totalorder %v299, 0
  %v1566 = vand.u32 %v299, 2139095040
  %v1567 = vshrl.u32 %v1566, 23
  %v1568 = vsub.s32 %v1567, 127
  %v1569 = vand.u32 2147483647, %v299
  %v1570 = vand.u32 %v1569, 8388607
  %v1571 = vor.u32 %v1570, 8388608
  %v1572 = vsub.s32 0, %v1571
  %v1573 = vadd.s32 %v1568, 1
  %vm1574 = vcmp.gt.s32.totalorder %v1573, 0
  %v1575 = vsel %vm1574, %v1573, 0
  %v1576 = vshrl.u32 %v1575, 5
  %v1577 = vand.u32 %v1575, 31
  %v1578 = vsub.s32 32, %v1577
  %v1579 = vshrl.u32 683565275, %v1578
  %v1580 = vshll.u32 683565275, %v1577
  %v1581 = vshrl.u32 2475754826, %v1578
  %v1582 = vor.u32 %v1580, %v1581
  %v1583 = vshll.u32 2475754826, %v1577
  %v1584 = vshrl.u32 2131351028, %v1578
  %v1585 = vor.u32 %v1583, %v1584
  %v1586 = vshll.u32 2131351028, %v1577
  %v1587 = vshrl.u32 2102212464, %v1578
  %v1588 = vor.u32 %v1586, %v1587
  %v1589 = vshll.u32 2102212464, %v1577
  %v1590 = vshrl.u32 920167782, %v1578
  %v1591 = vor.u32 %v1589, %v1590
  %v1592 = vshll.u32 920167782, %v1577
  %v1593 = vshrl.u32 1326507024, %v1578
  %v1594 = vor.u32 %v1592, %v1593
  %vm1595 = vcmp.lt.s32.totalorder %v1576, 1
  %vm1596 = vcmp.lt.s32.totalorder %v1576, 2
  %vm1597 = vcmp.lt.s32.totalorder %v1576, 3
  %vm1598 = vcmp.lt.s32.totalorder %v1576, 4
  %v1599 = vsel %vm1595, %v1579, %v1582
  %v1600 = vsel %vm1598, %v1588, 2102212464
  %v1601 = vsel %vm1597, %v1585, %v1600
  %v1602 = vsel %vm1596, %v1599, %v1601
  %v1603 = vsel %vm1595, %v1582, %v1585
  %v1604 = vsel %vm1598, %v1591, 920167782
  %v1605 = vsel %vm1597, %v1588, %v1604
  %v1606 = vsel %vm1596, %v1603, %v1605
  %v1607 = vsel %vm1595, %v1585, %v1588
  %v1608 = vsel %vm1598, %v1594, 1326507024
  %v1609 = vsel %vm1597, %v1591, %v1608
  %v1610 = vsel %vm1596, %v1607, %v1609
  %v1611 = vshll.u32 %v1571, 8
  %v1612 = vand.u32 %v1611, 65535
  %v1613 = vshrl.u32 %v1611, 16
  %v1614 = vand.u32 %v1610, 65535
  %v1615 = vshrl.u32 %v1610, 16
  %v1616 = vmul.u32 %v1612, %v1614
  %v1617 = vmul.u32 %v1612, %v1615
  %v1618 = vmul.u32 %v1613, %v1614
  %v1619 = vmul.u32 %v1613, %v1615
  %v1620 = vshll.u32 %v1617, 16
  %v1621 = vshrl.u32 %v1617, 16
  %v1622 = vshll.u32 %v1618, 16
  %v1623 = vshrl.u32 %v1618, 16
  %vm1624 = vc.u32 %v1616, %v1620
  %v1625 = vsel %vm1624, 1, 0
  %v1626 = vadd.s32 %v1616, %v1620
  %v1627 = vadd.s32 %v1619, %v1625
  %vm1628 = vc.u32 %v1626, %v1622
  %v1629 = vsel %vm1628, 1, 0
  %v1630 = vadd.s32 %v1626, %v1622
  %v1631 = vadd.s32 %v1627, %v1629
  %v1632 = vadd.s32 %v1631, %v1621
  %v1633 = vadd.s32 %v1632, %v1623
  %v1634 = vand.u32 %v1611, 65535
  %v1635 = vshrl.u32 %v1611, 16
  %v1636 = vand.u32 %v1606, 65535
  %v1637 = vshrl.u32 %v1606, 16
  %v1638 = vmul.u32 %v1634, %v1636
  %v1639 = vmul.u32 %v1634, %v1637
  %v1640 = vmul.u32 %v1635, %v1636
  %v1641 = vmul.u32 %v1635, %v1637
  %v1642 = vshll.u32 %v1639, 16
  %v1643 = vshrl.u32 %v1639, 16
  %v1644 = vshll.u32 %v1640, 16
  %v1645 = vshrl.u32 %v1640, 16
  %vm1646 = vc.u32 %v1638, %v1642
  %v1647 = vsel %vm1646, 1, 0
  %v1648 = vadd.s32 %v1638, %v1642
  %v1649 = vadd.s32 %v1641, %v1647
  %vm1650 = vc.u32 %v1648, %v1644
  %v1651 = vsel %vm1650, 1, 0
  %v1652 = vadd.s32 %v1648, %v1644
  %v1653 = vadd.s32 %v1649, %v1651
  %v1654 = vadd.s32 %v1653, %v1643
  %v1655 = vadd.s32 %v1654, %v1645
  %v1656 = vmul.u32 %v1611, %v1602
  %v1657 = vadd.s32 %v1633, %v1652
  %vm1658 = vc.u32 %v1633, %v1652
  %v1659 = vadd.s32 %v1655, 1
  %v1660 = vsel %vm1658, %v1659, %v1655
  %v1661 = vadd.s32 %v1656, %v1660
  %v1662 = vadd.s32 %v1661, 536870912
  %v1663 = vshrl.u32 %v1662, 30
  %v1664 = vshll.u32 %v1663, 30
  %v1665 = vsub.s32 %v1661, %v1664
  %vm1666 = vcmp.lt.s32.totalorder %v1665, 0
  %v1667 = vsub.s32 0, %v1665
  %v1668 = vsel %vm1666, %v1667, %v1665
  %v1669 = vclz %v1668
  %v1670 = vsub.s32 %v1669, 2
  %vm1671 = vcmp.gt.s32.totalorder 0, %v1670
  %v1672 = vsel %vm1671, 0, %v1670
  %v1673 = vsub.s32 32, %v1672
  %v1674 = vshll.u32 %v1665, %v1672
  %v1675 = vshrl.u32 %v1657, %v1673
  %v1676 = vor.u32 %v1674, %v1675
  %v1677 = vsub.s32 4294967266, %v1672
  %v1678 = vadd.s32 %v1677, 127
  %v1679 = vshll.u32 %v1678, 23
  %v1680 = vor.u32 4788187, %v1679
  %v1681 = vand.u32 2147483647, %v1680
  %v1683 = vcvt.s32.f32 %v1676
  %v1684 = vmul.f32 %v1683, %v1681
  %v1685 = vxor.u32 %v1684, 2147483648
  %v1686 = vsel %vm1565, %v1685, %v1684
  %v1687 = vsub.s32 4, %v1663
  %v1688 = vsel %vm1565, %v1687, %v1663
  %v1689 = vsel %vm1564, %v299, %v1686
  %v1690 = vsel %vm1564, 0, %v1688
  %v1691 = vmul.f32 %v1689, %v1689
  %v1692 = vmul.f32 %v1691, -0.001358992
  %v1693 = vadd.f32 %v1692, 0.041655596
  %v1694 = vmul.f32 %v1691, %v1693
  %v1695 = vadd.f32 %v1694, -0.4999988
  %v1696 = vmul.f32 %v1691, %v1695
  %v1697 = vadd.f32 1.0, %v1696
  %v1698 = vmul.f32 %v1689, %v1689
  %v1699 = vmul.f32 %v1698, -0.00019511016
  %v1700 = vadd.f32 %v1699, 0.008332121
  %v1701 = vmul.f32 %v1698, %v1700
  %v1702 = vadd.f32 %v1701, -0.16666654
  %v1703 = vmul.f32 %v1698, %v1702
  %v1704 = vadd.f32 %v1703, 1.0
  %v1705 = vmul.f32 %v1704, %v1689
  %vm1706 = vweird.f32 %v299
  %v1707 = vadd.s32 %v1690, 3
  %v1708 = vand.u32 %v1707, 3
  %vm1709 = vcmp.lt.s32.totalorder %v1708, 2
  %vm1710 = vcmp.eq.s32.totalorder %v1708, 0
  %v1711 = vxor.u32 %v1705, 2147483648
  %v1712 = vsel %vm1710, %v1697, %v1711
  %vm1713 = vcmp.eq.s32.totalorder %v1708, 2
  %v1714 = vxor.u32 %v1697, 2147483648
  %v1715 = vsel %vm1713, %v1714, %v1705
  %v1716 = vsel %vm1709, %v1712, %v1715
  %v1717 = vsel %vm1706, nan, %v1716
  %v1718 = vand.u32 2147483647, %v300
  %vm1719 = vcmp.le.f32.partialorder %v1718, 0.7853982
  %vm1720 = vcmp.lt.s32.totalorder %v300, 0
  %v1721 = vand.u32 %v300, 2139095040
  %v1722 = vshrl.u32 %v1721, 23
  %v1723 = vsub.s32 %v1722, 127
  %v1724 = vand.u32 2147483647, %v300
  %v1725 = vand.u32 %v1724, 8388607
  %v1726 = vor.u32 %v1725, 8388608
  %v1727 = vsub.s32 0, %v1726
  %v1728 = vadd.s32 %v1723, 1
  %vm1729 = vcmp.gt.s32.totalorder %v1728, 0
  %v1730 = vsel %vm1729, %v1728, 0
  %v1731 = vshrl.u32 %v1730, 5
  %v1732 = vand.u32 %v1730, 31
  %v1733 = vsub.s32 32, %v1732
  %v1734 = vshrl.u32 683565275, %v1733
  %v1735 = vshll.u32 683565275, %v1732
  %v1736 = vshrl.u32 2475754826, %v1733
  %v1737 = vor.u32 %v1735, %v1736
  %v1738 = vshll.u32 2475754826, %v1732
  %v1739 = vshrl.u32 2131351028, %v1733
  %v1740 = vor.u32 %v1738, %v1739
  %v1741 = vshll.u32 2131351028, %v1732
  %v1742 = vshrl.u32 2102212464, %v1733
  %v1743 = vor.u32 %v1741, %v1742
  %v1744 = vshll.u32 2102212464, %v1732
  %v1745 = vshrl.u32 920167782, %v1733
  %v1746 = vor.u32 %v1744, %v1745
  %v1747 = vshll.u32 920167782, %v1732
  %v1748 = vshrl.u32 1326507024, %v1733
  %v1749 = vor.u32 %v1747, %v1748
  %vm1750 = vcmp.lt.s32.totalorder %v1731, 1
  %vm1751 = vcmp.lt.s32.totalorder %v1731, 2
  %vm1752 = vcmp.lt.s32.totalorder %v1731, 3
  %vm1753 = vcmp.lt.s32.totalorder %v1731, 4
  %v1754 = vsel %vm1750, %v1734, %v1737
  %v1755 = vsel %vm1753, %v1743, 2102212464
  %v1756 = vsel %vm1752, %v1740, %v1755
  %v1757 = vsel %vm1751, %v1754, %v1756
  %v1758 = vsel %vm1750, %v1737, %v1740
  %v1759 = vsel %vm1753, %v1746, 920167782
  %v1760 = vsel %vm1752, %v1743, %v1759
  %v1761 = vsel %vm1751, %v1758, %v1760
  %v1762 = vsel %vm1750, %v1740, %v1743
  %v1763 = vsel %vm1753, %v1749, 1326507024
  %v1764 = vsel %vm1752, %v1746, %v1763
  %v1765 = vsel %vm1751, %v1762, %v1764
  %v1766 = vshll.u32 %v1726, 8
  %v1767 = vand.u32 %v1766, 65535
  %v1768 = vshrl.u32 %v1766, 16
  %v1769 = vand.u32 %v1765, 65535
  %v1770 = vshrl.u32 %v1765, 16
  %v1771 = vmul.u32 %v1767, %v1769
  %v1772 = vmul.u32 %v1767, %v1770
  %v1773 = vmul.u32 %v1768, %v1769
  %v1774 = vmul.u32 %v1768, %v1770
  %v1775 = vshll.u32 %v1772, 16
  %v1776 = vshrl.u32 %v1772, 16
  %v1777 = vshll.u32 %v1773, 16
  %v1778 = vshrl.u32 %v1773, 16
  %vm1779 = vc.u32 %v1771, %v1775
  %v1780 = vsel %vm1779, 1, 0
  %v1781 = vadd.s32 %v1771, %v1775
  %v1782 = vadd.s32 %v1774, %v1780
  %vm1783 = vc.u32 %v1781, %v1777
  %v1784 = vsel %vm1783, 1, 0
  %v1785 = vadd.s32 %v1781, %v1777
  %v1786 = vadd.s32 %v1782, %v1784
  %v1787 = vadd.s32 %v1786, %v1776
  %v1788 = vadd.s32 %v1787, %v1778
  %v1789 = vand.u32 %v1766, 65535
  %v1790 = vshrl.u32 %v1766, 16
  %v1791 = vand.u32 %v1761, 65535
  %v1792 = vshrl.u32 %v1761, 16
  %v1793 = vmul.u32 %v1789, %v1791
  %v1794 = vmul.u32 %v1789, %v1792
  %v1795 = vmul.u32 %v1790, %v1791
  %v1796 = vmul.u32 %v1790, %v1792
  %v1797 = vshll.u32 %v1794, 16
  %v1798 = vshrl.u32 %v1794, 16
  %v1799 = vshll.u32 %v1795, 16
  %v1800 = vshrl.u32 %v1795, 16
  %vm1801 = vc.u32 %v1793, %v1797
  %v1802 = vsel %vm1801, 1, 0
  %v1803 = vadd.s32 %v1793, %v1797
  %v1804 = vadd.s32 %v1796, %v1802
  %vm1805 = vc.u32 %v1803, %v1799
  %v1806 = vsel %vm1805, 1, 0
  %v1807 = vadd.s32 %v1803, %v1799
  %v1808 = vadd.s32 %v1804, %v1806
  %v1809 = vadd.s32 %v1808, %v1798
  %v1810 = vadd.s32 %v1809, %v1800
  %v1811 = vmul.u32 %v1766, %v1757
  %v1812 = vadd.s32 %v1788, %v1807
  %vm1813 = vc.u32 %v1788, %v1807
  %v1814 = vadd.s32 %v1810, 1
  %v1815 = vsel %vm1813, %v1814, %v1810
  %v1816 = vadd.s32 %v1811, %v1815
  %v1817 = vadd.s32 %v1816, 536870912
  %v1818 = vshrl.u32 %v1817, 30
  %v1819 = vshll.u32 %v1818, 30
  %v1820 = vsub.s32 %v1816, %v1819
  %vm1821 = vcmp.lt.s32.totalorder %v1820, 0
  %v1822 = vsub.s32 0, %v1820
  %v1823 = vsel %vm1821, %v1822, %v1820
  %v1824 = vclz %v1823
  %v1825 = vsub.s32 %v1824, 2
  %vm1826 = vcmp.gt.s32.totalorder 0, %v1825
  %v1827 = vsel %vm1826, 0, %v1825
  %v1828 = vsub.s32 32, %v1827
  %v1829 = vshll.u32 %v1820, %v1827
  %v1830 = vshrl.u32 %v1812, %v1828
  %v1831 = vor.u32 %v1829, %v1830
  %v1832 = vsub.s32 4294967266, %v1827
  %v1833 = vadd.s32 %v1832, 127
  %v1834 = vshll.u32 %v1833, 23
  %v1835 = vor.u32 4788187, %v1834
  %v1836 = vand.u32 2147483647, %v1835
  %v1838 = vcvt.s32.f32 %v1831
  %v1839 = vmul.f32 %v1838, %v1836
  %v1840 = vxor.u32 %v1839, 2147483648
  %v1841 = vsel %vm1720, %v1840, %v1839
  %v1842 = vsub.s32 4, %v1818
  %v1843 = vsel %vm1720, %v1842, %v1818
  %v1844 = vsel %vm1719, %v300, %v1841
  %v1845 = vsel %vm1719, 0, %v1843
  %v1846 = vmul.f32 %v1844, %v1844
  %v1847 = vmul.f32 %v1846, -0.001358992
  %v1848 = vadd.f32 %v1847, 0.041655596
  %v1849 = vmul.f32 %v1846, %v1848
  %v1850 = vadd.f32 %v1849, -0.4999988
  %v1851 = vmul.f32 %v1846, %v1850
  %v1852 = vadd.f32 1.0, %v1851
  %v1853 = vmul.f32 %v1844, %v1844
  %v1854 = vmul.f32 %v1853, -0.00019511016
  %v1855 = vadd.f32 %v1854, 0.008332121
  %v1856 = vmul.f32 %v1853, %v1855
  %v1857 = vadd.f32 %v1856, -0.16666654
  %v1858 = vmul.f32 %v1853, %v1857
  %v1859 = vadd.f32 %v1858, 1.0
  %v1860 = vmul.f32 %v1859, %v1844
  %vm1861 = vweird.f32 %v300
  %v1862 = vadd.s32 %v1845, 3
  %v1863 = vand.u32 %v1862, 3
  %vm1864 = vcmp.lt.s32.totalorder %v1863, 2
  %vm1865 = vcmp.eq.s32.totalorder %v1863, 0
  %v1866 = vxor.u32 %v1860, 2147483648
  %v1867 = vsel %vm1865, %v1852, %v1866
  %vm1868 = vcmp.eq.s32.totalorder %v1863, 2
  %v1869 = vxor.u32 %v1852, 2147483648
  %v1870 = vsel %vm1868, %v1869, %v1860
  %v1871 = vsel %vm1864, %v1867, %v1870
  %v1872 = vsel %vm1861, nan, %v1871
  %v1873 = vand.u32 2147483647, %v301
  %vm1874 = vcmp.le.f32.partialorder %v1873, 0.7853982
  %vm1875 = vcmp.lt.s32.totalorder %v301, 0
  %v1876 = vand.u32 %v301, 2139095040
  %v1877 = vshrl.u32 %v1876, 23
  %v1878 = vsub.s32 %v1877, 127
  %v1879 = vand.u32 2147483647, %v301
  %v1880 = vand.u32 %v1879, 8388607
  %v1881 = vor.u32 %v1880, 8388608
  %v1882 = vsub.s32 0, %v1881
  %v1883 = vadd.s32 %v1878, 1
  %vm1884 = vcmp.gt.s32.totalorder %v1883, 0
  %v1885 = vsel %vm1884, %v1883, 0
  %v1886 = vshrl.u32 %v1885, 5
  %v1887 = vand.u32 %v1885, 31
  %v1888 = vsub.s32 32, %v1887
  %v1889 = vshrl.u32 683565275, %v1888
  %v1890 = vshll.u32 683565275, %v1887
  %v1891 = vshrl.u32 2475754826, %v1888
  %v1892 = vor.u32 %v1890, %v1891
  %v1893 = vshll.u32 2475754826, %v1887
  %v1894 = vshrl.u32 2131351028, %v1888
  %v1895 = vor.u32 %v1893, %v1894
  %v1896 = vshll.u32 2131351028, %v1887
  %v1897 = vshrl.u32 2102212464, %v1888
  %v1898 = vor.u32 %v1896, %v1897
  %v1899 = vshll.u32 2102212464, %v1887
  %v1900 = vshrl.u32 920167782, %v1888
  %v1901 = vor.u32 %v1899, %v1900
  %v1902 = vshll.u32 920167782, %v1887
  %v1903 = vshrl.u32 1326507024, %v1888
  %v1904 = vor.u32 %v1902, %v1903
  %vm1905 = vcmp.lt.s32.totalorder %v1886, 1
  %vm1906 = vcmp.lt.s32.totalorder %v1886, 2
  %vm1907 = vcmp.lt.s32.totalorder %v1886, 3
  %vm1908 = vcmp.lt.s32.totalorder %v1886, 4
  %v1909 = vsel %vm1905, %v1889, %v1892
  %v1910 = vsel %vm1908, %v1898, 2102212464
  %v1911 = vsel %vm1907, %v1895, %v1910
  %v1912 = vsel %vm1906, %v1909, %v1911
  %v1913 = vsel %vm1905, %v1892, %v1895
  %v1914 = vsel %vm1908, %v1901, 920167782
  %v1915 = vsel %vm1907, %v1898, %v1914
  %v1916 = vsel %vm1906, %v1913, %v1915
  %v1917 = vsel %vm1905, %v1895, %v1898
  %v1918 = vsel %vm1908, %v1904, 1326507024
  %v1919 = vsel %vm1907, %v1901, %v1918
  %v1920 = vsel %vm1906, %v1917, %v1919
  %v1921 = vshll.u32 %v1881, 8
  %v1922 = vand.u32 %v1921, 65535
  %v1923 = vshrl.u32 %v1921, 16
  %v1924 = vand.u32 %v1920, 65535
  %v1925 = vshrl.u32 %v1920, 16
  %v1926 = vmul.u32 %v1922, %v1924
  %v1927 = vmul.u32 %v1922, %v1925
  %v1928 = vmul.u32 %v1923, %v1924
  %v1929 = vmul.u32 %v1923, %v1925
  %v1930 = vshll.u32 %v1927, 16
  %v1931 = vshrl.u32 %v1927, 16
  %v1932 = vshll.u32 %v1928, 16
  %v1933 = vshrl.u32 %v1928, 16
  %vm1934 = vc.u32 %v1926, %v1930
  %v1935 = vsel %vm1934, 1, 0
  %v1936 = vadd.s32 %v1926, %v1930
  %v1937 = vadd.s32 %v1929, %v1935
  %vm1938 = vc.u32 %v1936, %v1932
  %v1939 = vsel %vm1938, 1, 0
  %v1940 = vadd.s32 %v1936, %v1932
  %v1941 = vadd.s32 %v1937, %v1939
  %v1942 = vadd.s32 %v1941, %v1931
  %v1943 = vadd.s32 %v1942, %v1933
  %v1944 = vand.u32 %v1921, 65535
  %v1945 = vshrl.u32 %v1921, 16
  %v1946 = vand.u32 %v1916, 65535
  %v1947 = vshrl.u32 %v1916, 16
  %v1948 = vmul.u32 %v1944, %v1946
  %v1949 = vmul.u32 %v1944, %v1947
  %v1950 = vmul.u32 %v1945, %v1946
  %v1951 = vmul.u32 %v1945, %v1947
  %v1952 = vshll.u32 %v1949, 16
  %v1953 = vshrl.u32 %v1949, 16
  %v1954 = vshll.u32 %v1950, 16
  %v1955 = vshrl.u32 %v1950, 16
  %vm1956 = vc.u32 %v1948, %v1952
  %v1957 = vsel %vm1956, 1, 0
  %v1958 = vadd.s32 %v1948, %v1952
  %v1959 = vadd.s32 %v1951, %v1957
  %vm1960 = vc.u32 %v1958, %v1954
  %v1961 = vsel %vm1960, 1, 0
  %v1962 = vadd.s32 %v1958, %v1954
  %v1963 = vadd.s32 %v1959, %v1961
  %v1964 = vadd.s32 %v1963, %v1953
  %v1965 = vadd.s32 %v1964, %v1955
  %v1966 = vmul.u32 %v1921, %v1912
  %v1967 = vadd.s32 %v1943, %v1962
  %vm1968 = vc.u32 %v1943, %v1962
  %v1969 = vadd.s32 %v1965, 1
  %v1970 = vsel %vm1968, %v1969, %v1965
  %v1971 = vadd.s32 %v1966, %v1970
  %v1972 = vadd.s32 %v1971, 536870912
  %v1973 = vshrl.u32 %v1972, 30
  %v1974 = vshll.u32 %v1973, 30
  %v1975 = vsub.s32 %v1971, %v1974
  %vm1976 = vcmp.lt.s32.totalorder %v1975, 0
  %v1977 = vsub.s32 0, %v1975
  %v1978 = vsel %vm1976, %v1977, %v1975
  %v1979 = vclz %v1978
  %v1980 = vsub.s32 %v1979, 2
  %vm1981 = vcmp.gt.s32.totalorder 0, %v1980
  %v1982 = vsel %vm1981, 0, %v1980
  %v1983 = vsub.s32 32, %v1982
  %v1984 = vshll.u32 %v1975, %v1982
  %v1985 = vshrl.u32 %v1967, %v1983
  %v1986 = vor.u32 %v1984, %v1985
  %v1987 = vsub.s32 4294967266, %v1982
  %v1988 = vadd.s32 %v1987, 127
  %v1989 = vshll.u32 %v1988, 23
  %v1990 = vor.u32 4788187, %v1989
  %v1991 = vand.u32 2147483647, %v1990
  %v1993 = vcvt.s32.f32 %v1986
  %v1994 = vmul.f32 %v1993, %v1991
  %v1995 = vxor.u32 %v1994, 2147483648
  %v1996 = vsel %vm1875, %v1995, %v1994
  %v1997 = vsub.s32 4, %v1973
  %v1998 = vsel %vm1875, %v1997, %v1973
  %v1999 = vsel %vm1874, %v301, %v1996
  %v2000 = vsel %vm1874, 0, %v1998
  %v2001 = vmul.f32 %v1999, %v1999
  %v2002 = vmul.f32 %v2001, -0.001358992
  %v2003 = vadd.f32 %v2002, 0.041655596
  %v2004 = vmul.f32 %v2001, %v2003
  %v2005 = vadd.f32 %v2004, -0.4999988
  %v2006 = vmul.f32 %v2001, %v2005
  %v2007 = vadd.f32 1.0, %v2006
  %v2008 = vmul.f32 %v1999, %v1999
  %v2009 = vmul.f32 %v2008, -0.00019511016
  %v2010 = vadd.f32 %v2009, 0.008332121
  %v2011 = vmul.f32 %v2008, %v2010
  %v2012 = vadd.f32 %v2011, -0.16666654
  %v2013 = vmul.f32 %v2008, %v2012
  %v2014 = vadd.f32 %v2013, 1.0
  %v2015 = vmul.f32 %v2014, %v1999
  %vm2016 = vweird.f32 %v301
  %v2017 = vadd.s32 %v2000, 3
  %v2018 = vand.u32 %v2017, 3
  %vm2019 = vcmp.lt.s32.totalorder %v2018, 2
  %vm2020 = vcmp.eq.s32.totalorder %v2018, 0
  %v2021 = vxor.u32 %v2015, 2147483648
  %v2022 = vsel %vm2020, %v2007, %v2021
  %vm2023 = vcmp.eq.s32.totalorder %v2018, 2
  %v2024 = vxor.u32 %v2007, 2147483648
  %v2025 = vsel %vm2023, %v2024, %v2015
  %v2026 = vsel %vm2019, %v2022, %v2025
  %v2027 = vsel %vm2016, nan, %v2026
  %v2028 = vand.u32 2147483647, %v302
  %vm2029 = vcmp.le.f32.partialorder %v2028, 0.7853982
  %vm2030 = vcmp.lt.s32.totalorder %v302, 0
  %v2031 = vand.u32 %v302, 2139095040
  %v2032 = vshrl.u32 %v2031, 23
  %v2033 = vsub.s32 %v2032, 127
  %v2034 = vand.u32 2147483647, %v302
  %v2035 = vand.u32 %v2034, 8388607
  %v2036 = vor.u32 %v2035, 8388608
  %v2037 = vsub.s32 0, %v2036
  %v2038 = vadd.s32 %v2033, 1
  %vm2039 = vcmp.gt.s32.totalorder %v2038, 0
  %v2040 = vsel %vm2039, %v2038, 0
  %v2041 = vshrl.u32 %v2040, 5
  %v2042 = vand.u32 %v2040, 31
  %v2043 = vsub.s32 32, %v2042
  %v2044 = vshrl.u32 683565275, %v2043
  %v2045 = vshll.u32 683565275, %v2042
  %v2046 = vshrl.u32 2475754826, %v2043
  %v2047 = vor.u32 %v2045, %v2046
  %v2048 = vshll.u32 2475754826, %v2042
  %v2049 = vshrl.u32 2131351028, %v2043
  %v2050 = vor.u32 %v2048, %v2049
  %v2051 = vshll.u32 2131351028, %v2042
  %v2052 = vshrl.u32 2102212464, %v2043
  %v2053 = vor.u32 %v2051, %v2052
  %v2054 = vshll.u32 2102212464, %v2042
  %v2055 = vshrl.u32 920167782, %v2043
  %v2056 = vor.u32 %v2054, %v2055
  %v2057 = vshll.u32 920167782, %v2042
  %v2058 = vshrl.u32 1326507024, %v2043
  %v2059 = vor.u32 %v2057, %v2058
  %vm2060 = vcmp.lt.s32.totalorder %v2041, 1
  %vm2061 = vcmp.lt.s32.totalorder %v2041, 2
  %vm2062 = vcmp.lt.s32.totalorder %v2041, 3
  %vm2063 = vcmp.lt.s32.totalorder %v2041, 4
  %v2064 = vsel %vm2060, %v2044, %v2047
  %v2065 = vsel %vm2063, %v2053, 2102212464
  %v2066 = vsel %vm2062, %v2050, %v2065
  %v2067 = vsel %vm2061, %v2064, %v2066
  %v2068 = vsel %vm2060, %v2047, %v2050
  %v2069 = vsel %vm2063, %v2056, 920167782
  %v2070 = vsel %vm2062, %v2053, %v2069
  %v2071 = vsel %vm2061, %v2068, %v2070
  %v2072 = vsel %vm2060, %v2050, %v2053
  %v2073 = vsel %vm2063, %v2059, 1326507024
  %v2074 = vsel %vm2062, %v2056, %v2073
  %v2075 = vsel %vm2061, %v2072, %v2074
  %v2076 = vshll.u32 %v2036, 8
  %v2077 = vand.u32 %v2076, 65535
  %v2078 = vshrl.u32 %v2076, 16
  %v2079 = vand.u32 %v2075, 65535
  %v2080 = vshrl.u32 %v2075, 16
  %v2081 = vmul.u32 %v2077, %v2079
  %v2082 = vmul.u32 %v2077, %v2080
  %v2083 = vmul.u32 %v2078, %v2079
  %v2084 = vmul.u32 %v2078, %v2080
  %v2085 = vshll.u32 %v2082, 16
  %v2086 = vshrl.u32 %v2082, 16
  %v2087 = vshll.u32 %v2083, 16
  %v2088 = vshrl.u32 %v2083, 16
  %vm2089 = vc.u32 %v2081, %v2085
  %v2090 = vsel %vm2089, 1, 0
  %v2091 = vadd.s32 %v2081, %v2085
  %v2092 = vadd.s32 %v2084, %v2090
  %vm2093 = vc.u32 %v2091, %v2087
  %v2094 = vsel %vm2093, 1, 0
  %v2095 = vadd.s32 %v2091, %v2087
  %v2096 = vadd.s32 %v2092, %v2094
  %v2097 = vadd.s32 %v2096, %v2086
  %v2098 = vadd.s32 %v2097, %v2088
  %v2099 = vand.u32 %v2076, 65535
  %v2100 = vshrl.u32 %v2076, 16
  %v2101 = vand.u32 %v2071, 65535
  %v2102 = vshrl.u32 %v2071, 16
  %v2103 = vmul.u32 %v2099, %v2101
  %v2104 = vmul.u32 %v2099, %v2102
  %v2105 = vmul.u32 %v2100, %v2101
  %v2106 = vmul.u32 %v2100, %v2102
  %v2107 = vshll.u32 %v2104, 16
  %v2108 = vshrl.u32 %v2104, 16
  %v2109 = vshll.u32 %v2105, 16
  %v2110 = vshrl.u32 %v2105, 16
  %vm2111 = vc.u32 %v2103, %v2107
  %v2112 = vsel %vm2111, 1, 0
  %v2113 = vadd.s32 %v2103, %v2107
  %v2114 = vadd.s32 %v2106, %v2112
  %vm2115 = vc.u32 %v2113, %v2109
  %v2116 = vsel %vm2115, 1, 0
  %v2117 = vadd.s32 %v2113, %v2109
  %v2118 = vadd.s32 %v2114, %v2116
  %v2119 = vadd.s32 %v2118, %v2108
  %v2120 = vadd.s32 %v2119, %v2110
  %v2121 = vmul.u32 %v2076, %v2067
  %v2122 = vadd.s32 %v2098, %v2117
  %vm2123 = vc.u32 %v2098, %v2117
  %v2124 = vadd.s32 %v2120, 1
  %v2125 = vsel %vm2123, %v2124, %v2120
  %v2126 = vadd.s32 %v2121, %v2125
  %v2127 = vadd.s32 %v2126, 536870912
  %v2128 = vshrl.u32 %v2127, 30
  %v2129 = vshll.u32 %v2128, 30
  %v2130 = vsub.s32 %v2126, %v2129
  %vm2131 = vcmp.lt.s32.totalorder %v2130, 0
  %v2132 = vsub.s32 0, %v2130
  %v2133 = vsel %vm2131, %v2132, %v2130
  %v2134 = vclz %v2133
  %v2135 = vsub.s32 %v2134, 2
  %vm2136 = vcmp.gt.s32.totalorder 0, %v2135
  %v2137 = vsel %vm2136, 0, %v2135
  %v2138 = vsub.s32 32, %v2137
  %v2139 = vshll.u32 %v2130, %v2137
  %v2140 = vshrl.u32 %v2122, %v2138
  %v2141 = vor.u32 %v2139, %v2140
  %v2142 = vsub.s32 4294967266, %v2137
  %v2143 = vadd.s32 %v2142, 127
  %v2144 = vshll.u32 %v2143, 23
  %v2145 = vor.u32 4788187, %v2144
  %v2146 = vand.u32 2147483647, %v2145
  %v2148 = vcvt.s32.f32 %v2141
  %v2149 = vmul.f32 %v2148, %v2146
  %v2150 = vxor.u32 %v2149, 2147483648
  %v2151 = vsel %vm2030, %v2150, %v2149
  %v2152 = vsub.s32 4, %v2128
  %v2153 = vsel %vm2030, %v2152, %v2128
  %v2154 = vsel %vm2029, %v302, %v2151
  %v2155 = vsel %vm2029, 0, %v2153
  %v2156 = vmul.f32 %v2154, %v2154
  %v2157 = vmul.f32 %v2156, -0.001358992
  %v2158 = vadd.f32 %v2157, 0.041655596
  %v2159 = vmul.f32 %v2156, %v2158
  %v2160 = vadd.f32 %v2159, -0.4999988
  %v2161 = vmul.f32 %v2156, %v2160
  %v2162 = vadd.f32 1.0, %v2161
  %v2163 = vmul.f32 %v2154, %v2154
  %v2164 = vmul.f32 %v2163, -0.00019511016
  %v2165 = vadd.f32 %v2164, 0.008332121
  %v2166 = vmul.f32 %v2163, %v2165
  %v2167 = vadd.f32 %v2166, -0.16666654
  %v2168 = vmul.f32 %v2163, %v2167
  %v2169 = vadd.f32 %v2168, 1.0
  %v2170 = vmul.f32 %v2169, %v2154
  %vm2171 = vweird.f32 %v302
  %v2172 = vadd.s32 %v2155, 3
  %v2173 = vand.u32 %v2172, 3
  %vm2174 = vcmp.lt.s32.totalorder %v2173, 2
  %vm2175 = vcmp.eq.s32.totalorder %v2173, 0
  %v2176 = vxor.u32 %v2170, 2147483648
  %v2177 = vsel %vm2175, %v2162, %v2176
  %vm2178 = vcmp.eq.s32.totalorder %v2173, 2
  %v2179 = vxor.u32 %v2162, 2147483648
  %v2180 = vsel %vm2178, %v2179, %v2170
  %v2181 = vsel %vm2174, %v2177, %v2180
  %v2182 = vsel %vm2171, nan, %v2181
  %v2183 = vand.u32 2147483647, %v303
  %vm2184 = vcmp.le.f32.partialorder %v2183, 0.7853982
  %vm2185 = vcmp.lt.s32.totalorder %v303, 0
  %v2186 = vand.u32 %v303, 2139095040
  %v2187 = vshrl.u32 %v2186, 23
  %v2188 = vsub.s32 %v2187, 127
  %v2189 = vand.u32 2147483647, %v303
  %v2190 = vand.u32 %v2189, 8388607
  %v2191 = vor.u32 %v2190, 8388608
  %v2192 = vsub.s32 0, %v2191
  %v2193 = vadd.s32 %v2188, 1
  %vm2194 = vcmp.gt.s32.totalorder %v2193, 0
  %v2195 = vsel %vm2194, %v2193, 0
  %v2196 = vshrl.u32 %v2195, 5
  %v2197 = vand.u32 %v2195, 31
  %v2198 = vsub.s32 32, %v2197
  %v2199 = vshrl.u32 683565275, %v2198
  %v2200 = vshll.u32 683565275, %v2197
  %v2201 = vshrl.u32 2475754826, %v2198
  %v2202 = vor.u32 %v2200, %v2201
  %v2203 = vshll.u32 2475754826, %v2197
  %v2204 = vshrl.u32 2131351028, %v2198
  %v2205 = vor.u32 %v2203, %v2204
  %v2206 = vshll.u32 2131351028, %v2197
  %v2207 = vshrl.u32 2102212464, %v2198
  %v2208 = vor.u32 %v2206, %v2207
  %v2209 = vshll.u32 2102212464, %v2197
  %v2210 = vshrl.u32 920167782, %v2198
  %v2211 = vor.u32 %v2209, %v2210
  %v2212 = vshll.u32 920167782, %v2197
  %v2213 = vshrl.u32 1326507024, %v2198
  %v2214 = vor.u32 %v2212, %v2213
  %vm2215 = vcmp.lt.s32.totalorder %v2196, 1
  %vm2216 = vcmp.lt.s32.totalorder %v2196, 2
  %vm2217 = vcmp.lt.s32.totalorder %v2196, 3
  %vm2218 = vcmp.lt.s32.totalorder %v2196, 4
  %v2219 = vsel %vm2215, %v2199, %v2202
  %v2220 = vsel %vm2218, %v2208, 2102212464
  %v2221 = vsel %vm2217, %v2205, %v2220
  %v2222 = vsel %vm2216, %v2219, %v2221
  %v2223 = vsel %vm2215, %v2202, %v2205
  %v2224 = vsel %vm2218, %v2211, 920167782
  %v2225 = vsel %vm2217, %v2208, %v2224
  %v2226 = vsel %vm2216, %v2223, %v2225
  %v2227 = vsel %vm2215, %v2205, %v2208
  %v2228 = vsel %vm2218, %v2214, 1326507024
  %v2229 = vsel %vm2217, %v2211, %v2228
  %v2230 = vsel %vm2216, %v2227, %v2229
  %v2231 = vshll.u32 %v2191, 8
  %v2232 = vand.u32 %v2231, 65535
  %v2233 = vshrl.u32 %v2231, 16
  %v2234 = vand.u32 %v2230, 65535
  %v2235 = vshrl.u32 %v2230, 16
  %v2236 = vmul.u32 %v2232, %v2234
  %v2237 = vmul.u32 %v2232, %v2235
  %v2238 = vmul.u32 %v2233, %v2234
  %v2239 = vmul.u32 %v2233, %v2235
  %v2240 = vshll.u32 %v2237, 16
  %v2241 = vshrl.u32 %v2237, 16
  %v2242 = vshll.u32 %v2238, 16
  %v2243 = vshrl.u32 %v2238, 16
  %vm2244 = vc.u32 %v2236, %v2240
  %v2245 = vsel %vm2244, 1, 0
  %v2246 = vadd.s32 %v2236, %v2240
  %v2247 = vadd.s32 %v2239, %v2245
  %vm2248 = vc.u32 %v2246, %v2242
  %v2249 = vsel %vm2248, 1, 0
  %v2250 = vadd.s32 %v2246, %v2242
  %v2251 = vadd.s32 %v2247, %v2249
  %v2252 = vadd.s32 %v2251, %v2241
  %v2253 = vadd.s32 %v2252, %v2243
  %v2254 = vand.u32 %v2231, 65535
  %v2255 = vshrl.u32 %v2231, 16
  %v2256 = vand.u32 %v2226, 65535
  %v2257 = vshrl.u32 %v2226, 16
  %v2258 = vmul.u32 %v2254, %v2256
  %v2259 = vmul.u32 %v2254, %v2257
  %v2260 = vmul.u32 %v2255, %v2256
  %v2261 = vmul.u32 %v2255, %v2257
  %v2262 = vshll.u32 %v2259, 16
  %v2263 = vshrl.u32 %v2259, 16
  %v2264 = vshll.u32 %v2260, 16
  %v2265 = vshrl.u32 %v2260, 16
  %vm2266 = vc.u32 %v2258, %v2262
  %v2267 = vsel %vm2266, 1, 0
  %v2268 = vadd.s32 %v2258, %v2262
  %v2269 = vadd.s32 %v2261, %v2267
  %vm2270 = vc.u32 %v2268, %v2264
  %v2271 = vsel %vm2270, 1, 0
  %v2272 = vadd.s32 %v2268, %v2264
  %v2273 = vadd.s32 %v2269, %v2271
  %v2274 = vadd.s32 %v2273, %v2263
  %v2275 = vadd.s32 %v2274, %v2265
  %v2276 = vmul.u32 %v2231, %v2222
  %v2277 = vadd.s32 %v2253, %v2272
  %vm2278 = vc.u32 %v2253, %v2272
  %v2279 = vadd.s32 %v2275, 1
  %v2280 = vsel %vm2278, %v2279, %v2275
  %v2281 = vadd.s32 %v2276, %v2280
  %v2282 = vadd.s32 %v2281, 536870912
  %v2283 = vshrl.u32 %v2282, 30
  %v2284 = vshll.u32 %v2283, 30
  %v2285 = vsub.s32 %v2281, %v2284
  %vm2286 = vcmp.lt.s32.totalorder %v2285, 0
  %v2287 = vsub.s32 0, %v2285
  %v2288 = vsel %vm2286, %v2287, %v2285
  %v2289 = vclz %v2288
  %v2290 = vsub.s32 %v2289, 2
  %vm2291 = vcmp.gt.s32.totalorder 0, %v2290
  %v2292 = vsel %vm2291, 0, %v2290
  %v2293 = vsub.s32 32, %v2292
  %v2294 = vshll.u32 %v2285, %v2292
  %v2295 = vshrl.u32 %v2277, %v2293
  %v2296 = vor.u32 %v2294, %v2295
  %v2297 = vsub.s32 4294967266, %v2292
  %v2298 = vadd.s32 %v2297, 127
  %v2299 = vshll.u32 %v2298, 23
  %v2300 = vor.u32 4788187, %v2299
  %v2301 = vand.u32 2147483647, %v2300
  %v2303 = vcvt.s32.f32 %v2296
  %v2304 = vmul.f32 %v2303, %v2301
  %v2305 = vxor.u32 %v2304, 2147483648
  %v2306 = vsel %vm2185, %v2305, %v2304
  %v2307 = vsub.s32 4, %v2283
  %v2308 = vsel %vm2185, %v2307, %v2283
  %v2309 = vsel %vm2184, %v303, %v2306
  %v2310 = vsel %vm2184, 0, %v2308
  %v2311 = vmul.f32 %v2309, %v2309
  %v2312 = vmul.f32 %v2311, -0.001358992
  %v2313 = vadd.f32 %v2312, 0.041655596
  %v2314 = vmul.f32 %v2311, %v2313
  %v2315 = vadd.f32 %v2314, -0.4999988
  %v2316 = vmul.f32 %v2311, %v2315
  %v2317 = vadd.f32 1.0, %v2316
  %v2318 = vmul.f32 %v2309, %v2309
  %v2319 = vmul.f32 %v2318, -0.00019511016
  %v2320 = vadd.f32 %v2319, 0.008332121
  %v2321 = vmul.f32 %v2318, %v2320
  %v2322 = vadd.f32 %v2321, -0.16666654
  %v2323 = vmul.f32 %v2318, %v2322
  %v2324 = vadd.f32 %v2323, 1.0
  %v2325 = vmul.f32 %v2324, %v2309
  %vm2326 = vweird.f32 %v303
  %v2327 = vadd.s32 %v2310, 3
  %v2328 = vand.u32 %v2327, 3
  %vm2329 = vcmp.lt.s32.totalorder %v2328, 2
  %vm2330 = vcmp.eq.s32.totalorder %v2328, 0
  %v2331 = vxor.u32 %v2325, 2147483648
  %v2332 = vsel %vm2330, %v2317, %v2331
  %vm2333 = vcmp.eq.s32.totalorder %v2328, 2
  %v2334 = vxor.u32 %v2317, 2147483648
  %v2335 = vsel %vm2333, %v2334, %v2325
  %v2336 = vsel %vm2329, %v2332, %v2335
  %v2337 = vsel %vm2326, nan, %v2336
  %v2338 = vand.u32 2147483647, %v304
  %vm2339 = vcmp.le.f32.partialorder %v2338, 0.7853982
  %vm2340 = vcmp.lt.s32.totalorder %v304, 0
  %v2341 = vand.u32 %v304, 2139095040
  %v2342 = vshrl.u32 %v2341, 23
  %v2343 = vsub.s32 %v2342, 127
  %v2344 = vand.u32 2147483647, %v304
  %v2345 = vand.u32 %v2344, 8388607
  %v2346 = vor.u32 %v2345, 8388608
  %v2347 = vsub.s32 0, %v2346
  %v2348 = vadd.s32 %v2343, 1
  %vm2349 = vcmp.gt.s32.totalorder %v2348, 0
  %v2350 = vsel %vm2349, %v2348, 0
  %v2351 = vshrl.u32 %v2350, 5
  %v2352 = vand.u32 %v2350, 31
  %v2353 = vsub.s32 32, %v2352
  %v2354 = vshrl.u32 683565275, %v2353
  %v2355 = vshll.u32 683565275, %v2352
  %v2356 = vshrl.u32 2475754826, %v2353
  %v2357 = vor.u32 %v2355, %v2356
  %v2358 = vshll.u32 2475754826, %v2352
  %v2359 = vshrl.u32 2131351028, %v2353
  %v2360 = vor.u32 %v2358, %v2359
  %v2361 = vshll.u32 2131351028, %v2352
  %v2362 = vshrl.u32 2102212464, %v2353
  %v2363 = vor.u32 %v2361, %v2362
  %v2364 = vshll.u32 2102212464, %v2352
  %v2365 = vshrl.u32 920167782, %v2353
  %v2366 = vor.u32 %v2364, %v2365
  %v2367 = vshll.u32 920167782, %v2352
  %v2368 = vshrl.u32 1326507024, %v2353
  %v2369 = vor.u32 %v2367, %v2368
  %vm2370 = vcmp.lt.s32.totalorder %v2351, 1
  %vm2371 = vcmp.lt.s32.totalorder %v2351, 2
  %vm2372 = vcmp.lt.s32.totalorder %v2351, 3
  %vm2373 = vcmp.lt.s32.totalorder %v2351, 4
  %v2374 = vsel %vm2370, %v2354, %v2357
  %v2375 = vsel %vm2373, %v2363, 2102212464
  %v2376 = vsel %vm2372, %v2360, %v2375
  %v2377 = vsel %vm2371, %v2374, %v2376
  %v2378 = vsel %vm2370, %v2357, %v2360
  %v2379 = vsel %vm2373, %v2366, 920167782
  %v2380 = vsel %vm2372, %v2363, %v2379
  %v2381 = vsel %vm2371, %v2378, %v2380
  %v2382 = vsel %vm2370, %v2360, %v2363
  %v2383 = vsel %vm2373, %v2369, 1326507024
  %v2384 = vsel %vm2372, %v2366, %v2383
  %v2385 = vsel %vm2371, %v2382, %v2384
  %v2386 = vshll.u32 %v2346, 8
  %v2387 = vand.u32 %v2386, 65535
  %v2388 = vshrl.u32 %v2386, 16
  %v2389 = vand.u32 %v2385, 65535
  %v2390 = vshrl.u32 %v2385, 16
  %v2391 = vmul.u32 %v2387, %v2389
  %v2392 = vmul.u32 %v2387, %v2390
  %v2393 = vmul.u32 %v2388, %v2389
  %v2394 = vmul.u32 %v2388, %v2390
  %v2395 = vshll.u32 %v2392, 16
  %v2396 = vshrl.u32 %v2392, 16
  %v2397 = vshll.u32 %v2393, 16
  %v2398 = vshrl.u32 %v2393, 16
  %vm2399 = vc.u32 %v2391, %v2395
  %v2400 = vsel %vm2399, 1, 0
  %v2401 = vadd.s32 %v2391, %v2395
  %v2402 = vadd.s32 %v2394, %v2400
  %vm2403 = vc.u32 %v2401, %v2397
  %v2404 = vsel %vm2403, 1, 0
  %v2405 = vadd.s32 %v2401, %v2397
  %v2406 = vadd.s32 %v2402, %v2404
  %v2407 = vadd.s32 %v2406, %v2396
  %v2408 = vadd.s32 %v2407, %v2398
  %v2409 = vand.u32 %v2386, 65535
  %v2410 = vshrl.u32 %v2386, 16
  %v2411 = vand.u32 %v2381, 65535
  %v2412 = vshrl.u32 %v2381, 16
  %v2413 = vmul.u32 %v2409, %v2411
  %v2414 = vmul.u32 %v2409, %v2412
  %v2415 = vmul.u32 %v2410, %v2411
  %v2416 = vmul.u32 %v2410, %v2412
  %v2417 = vshll.u32 %v2414, 16
  %v2418 = vshrl.u32 %v2414, 16
  %v2419 = vshll.u32 %v2415, 16
  %v2420 = vshrl.u32 %v2415, 16
  %vm2421 = vc.u32 %v2413, %v2417
  %v2422 = vsel %vm2421, 1, 0
  %v2423 = vadd.s32 %v2413, %v2417
  %v2424 = vadd.s32 %v2416, %v2422
  %vm2425 = vc.u32 %v2423, %v2419
  %v2426 = vsel %vm2425, 1, 0
  %v2427 = vadd.s32 %v2423, %v2419
  %v2428 = vadd.s32 %v2424, %v2426
  %v2429 = vadd.s32 %v2428, %v2418
  %v2430 = vadd.s32 %v2429, %v2420
  %v2431 = vmul.u32 %v2386, %v2377
  %v2432 = vadd.s32 %v2408, %v2427
  %vm2433 = vc.u32 %v2408, %v2427
  %v2434 = vadd.s32 %v2430, 1
  %v2435 = vsel %vm2433, %v2434, %v2430
  %v2436 = vadd.s32 %v2431, %v2435
  %v2437 = vadd.s32 %v2436, 536870912
  %v2438 = vshrl.u32 %v2437, 30
  %v2439 = vshll.u32 %v2438, 30
  %v2440 = vsub.s32 %v2436, %v2439
  %vm2441 = vcmp.lt.s32.totalorder %v2440, 0
  %v2442 = vsub.s32 0, %v2440
  %v2443 = vsel %vm2441, %v2442, %v2440
  %v2444 = vclz %v2443
  %v2445 = vsub.s32 %v2444, 2
  %vm2446 = vcmp.gt.s32.totalorder 0, %v2445
  %v2447 = vsel %vm2446, 0, %v2445
  %v2448 = vsub.s32 32, %v2447
  %v2449 = vshll.u32 %v2440, %v2447
  %v2450 = vshrl.u32 %v2432, %v2448
  %v2451 = vor.u32 %v2449, %v2450
  %v2452 = vsub.s32 4294967266, %v2447
  %v2453 = vadd.s32 %v2452, 127
  %v2454 = vshll.u32 %v2453, 23
  %v2455 = vor.u32 4788187, %v2454
  %v2456 = vand.u32 2147483647, %v2455
  %v2458 = vcvt.s32.f32 %v2451
  %v2459 = vmul.f32 %v2458, %v2456
  %v2460 = vxor.u32 %v2459, 2147483648
  %v2461 = vsel %vm2340, %v2460, %v2459
  %v2462 = vsub.s32 4, %v2438
  %v2463 = vsel %vm2340, %v2462, %v2438
  %v2464 = vsel %vm2339, %v304, %v2461
  %v2465 = vsel %vm2339, 0, %v2463
  %v2466 = vmul.f32 %v2464, %v2464
  %v2467 = vmul.f32 %v2466, -0.001358992
  %v2468 = vadd.f32 %v2467, 0.041655596
  %v2469 = vmul.f32 %v2466, %v2468
  %v2470 = vadd.f32 %v2469, -0.4999988
  %v2471 = vmul.f32 %v2466, %v2470
  %v2472 = vadd.f32 1.0, %v2471
  %v2473 = vmul.f32 %v2464, %v2464
  %v2474 = vmul.f32 %v2473, -0.00019511016
  %v2475 = vadd.f32 %v2474, 0.008332121
  %v2476 = vmul.f32 %v2473, %v2475
  %v2477 = vadd.f32 %v2476, -0.16666654
  %v2478 = vmul.f32 %v2473, %v2477
  %v2479 = vadd.f32 %v2478, 1.0
  %v2480 = vmul.f32 %v2479, %v2464
  %vm2481 = vweird.f32 %v304
  %v2482 = vadd.s32 %v2465, 3
  %v2483 = vand.u32 %v2482, 3
  %vm2484 = vcmp.lt.s32.totalorder %v2483, 2
  %vm2485 = vcmp.eq.s32.totalorder %v2483, 0
  %v2486 = vxor.u32 %v2480, 2147483648
  %v2487 = vsel %vm2485, %v2472, %v2486
  %vm2488 = vcmp.eq.s32.totalorder %v2483, 2
  %v2489 = vxor.u32 %v2472, 2147483648
  %v2490 = vsel %vm2488, %v2489, %v2480
  %v2491 = vsel %vm2484, %v2487, %v2490
  %v2492 = vsel %vm2481, nan, %v2491
  %v2493 = vand.u32 2147483647, %v305
  %vm2494 = vcmp.le.f32.partialorder %v2493, 0.7853982
  %vm2495 = vcmp.lt.s32.totalorder %v305, 0
  %v2496 = vand.u32 %v305, 2139095040
  %v2497 = vshrl.u32 %v2496, 23
  %v2498 = vsub.s32 %v2497, 127
  %v2499 = vand.u32 2147483647, %v305
  %v2500 = vand.u32 %v2499, 8388607
  %v2501 = vor.u32 %v2500, 8388608
  %v2502 = vsub.s32 0, %v2501
  %v2503 = vadd.s32 %v2498, 1
  %vm2504 = vcmp.gt.s32.totalorder %v2503, 0
  %v2505 = vsel %vm2504, %v2503, 0
  %v2506 = vshrl.u32 %v2505, 5
  %v2507 = vand.u32 %v2505, 31
  %v2508 = vsub.s32 32, %v2507
  %v2509 = vshrl.u32 683565275, %v2508
  %v2510 = vshll.u32 683565275, %v2507
  %v2511 = vshrl.u32 2475754826, %v2508
  %v2512 = vor.u32 %v2510, %v2511
  %v2513 = vshll.u32 2475754826, %v2507
  %v2514 = vshrl.u32 2131351028, %v2508
  %v2515 = vor.u32 %v2513, %v2514
  %v2516 = vshll.u32 2131351028, %v2507
  %v2517 = vshrl.u32 2102212464, %v2508
  %v2518 = vor.u32 %v2516, %v2517
  %v2519 = vshll.u32 2102212464, %v2507
  %v2520 = vshrl.u32 920167782, %v2508
  %v2521 = vor.u32 %v2519, %v2520
  %v2522 = vshll.u32 920167782, %v2507
  %v2523 = vshrl.u32 1326507024, %v2508
  %v2524 = vor.u32 %v2522, %v2523
  %vm2525 = vcmp.lt.s32.totalorder %v2506, 1
  %vm2526 = vcmp.lt.s32.totalorder %v2506, 2
  %vm2527 = vcmp.lt.s32.totalorder %v2506, 3
  %vm2528 = vcmp.lt.s32.totalorder %v2506, 4
  %v2529 = vsel %vm2525, %v2509, %v2512
  %v2530 = vsel %vm2528, %v2518, 2102212464
  %v2531 = vsel %vm2527, %v2515, %v2530
  %v2532 = vsel %vm2526, %v2529, %v2531
  %v2533 = vsel %vm2525, %v2512, %v2515
  %v2534 = vsel %vm2528, %v2521, 920167782
  %v2535 = vsel %vm2527, %v2518, %v2534
  %v2536 = vsel %vm2526, %v2533, %v2535
  %v2537 = vsel %vm2525, %v2515, %v2518
  %v2538 = vsel %vm2528, %v2524, 1326507024
  %v2539 = vsel %vm2527, %v2521, %v2538
  %v2540 = vsel %vm2526, %v2537, %v2539
  %v2541 = vshll.u32 %v2501, 8
  %v2542 = vand.u32 %v2541, 65535
  %v2543 = vshrl.u32 %v2541, 16
  %v2544 = vand.u32 %v2540, 65535
  %v2545 = vshrl.u32 %v2540, 16
  %v2546 = vmul.u32 %v2542, %v2544
  %v2547 = vmul.u32 %v2542, %v2545
  %v2548 = vmul.u32 %v2543, %v2544
  %v2549 = vmul.u32 %v2543, %v2545
  %v2550 = vshll.u32 %v2547, 16
  %v2551 = vshrl.u32 %v2547, 16
  %v2552 = vshll.u32 %v2548, 16
  %v2553 = vshrl.u32 %v2548, 16
  %vm2554 = vc.u32 %v2546, %v2550
  %v2555 = vsel %vm2554, 1, 0
  %v2556 = vadd.s32 %v2546, %v2550
  %v2557 = vadd.s32 %v2549, %v2555
  %vm2558 = vc.u32 %v2556, %v2552
  %v2559 = vsel %vm2558, 1, 0
  %v2560 = vadd.s32 %v2556, %v2552
  %v2561 = vadd.s32 %v2557, %v2559
  %v2562 = vadd.s32 %v2561, %v2551
  %v2563 = vadd.s32 %v2562, %v2553
  %v2564 = vand.u32 %v2541, 65535
  %v2565 = vshrl.u32 %v2541, 16
  %v2566 = vand.u32 %v2536, 65535
  %v2567 = vshrl.u32 %v2536, 16
  %v2568 = vmul.u32 %v2564, %v2566
  %v2569 = vmul.u32 %v2564, %v2567
  %v2570 = vmul.u32 %v2565, %v2566
  %v2571 = vmul.u32 %v2565, %v2567
  %v2572 = vshll.u32 %v2569, 16
  %v2573 = vshrl.u32 %v2569, 16
  %v2574 = vshll.u32 %v2570, 16
  %v2575 = vshrl.u32 %v2570, 16
  %vm2576 = vc.u32 %v2568, %v2572
  %v2577 = vsel %vm2576, 1, 0
  %v2578 = vadd.s32 %v2568, %v2572
  %v2579 = vadd.s32 %v2571, %v2577
  %vm2580 = vc.u32 %v2578, %v2574
  %v2581 = vsel %vm2580, 1, 0
  %v2582 = vadd.s32 %v2578, %v2574
  %v2583 = vadd.s32 %v2579, %v2581
  %v2584 = vadd.s32 %v2583, %v2573
  %v2585 = vadd.s32 %v2584, %v2575
  %v2586 = vmul.u32 %v2541, %v2532
  %v2587 = vadd.s32 %v2563, %v2582
  %vm2588 = vc.u32 %v2563, %v2582
  %v2589 = vadd.s32 %v2585, 1
  %v2590 = vsel %vm2588, %v2589, %v2585
  %v2591 = vadd.s32 %v2586, %v2590
  %v2592 = vadd.s32 %v2591, 536870912
  %v2593 = vshrl.u32 %v2592, 30
  %v2594 = vshll.u32 %v2593, 30
  %v2595 = vsub.s32 %v2591, %v2594
  %vm2596 = vcmp.lt.s32.totalorder %v2595, 0
  %v2597 = vsub.s32 0, %v2595
  %v2598 = vsel %vm2596, %v2597, %v2595
  %v2599 = vclz %v2598
  %v2600 = vsub.s32 %v2599, 2
  %vm2601 = vcmp.gt.s32.totalorder 0, %v2600
  %v2602 = vsel %vm2601, 0, %v2600
  %v2603 = vsub.s32 32, %v2602
  %v2604 = vshll.u32 %v2595, %v2602
  %v2605 = vshrl.u32 %v2587, %v2603
  %v2606 = vor.u32 %v2604, %v2605
  %v2607 = vsub.s32 4294967266, %v2602
  %v2608 = vadd.s32 %v2607, 127
  %v2609 = vshll.u32 %v2608, 23
  %v2610 = vor.u32 4788187, %v2609
  %v2611 = vand.u32 2147483647, %v2610
  %v2613 = vcvt.s32.f32 %v2606
  %v2614 = vmul.f32 %v2613, %v2611
  %v2615 = vxor.u32 %v2614, 2147483648
  %v2616 = vsel %vm2495, %v2615, %v2614
  %v2617 = vsub.s32 4, %v2593
  %v2618 = vsel %vm2495, %v2617, %v2593
  %v2619 = vsel %vm2494, %v305, %v2616
  %v2620 = vsel %vm2494, 0, %v2618
  %v2621 = vmul.f32 %v2619, %v2619
  %v2622 = vmul.f32 %v2621, -0.001358992
  %v2623 = vadd.f32 %v2622, 0.041655596
  %v2624 = vmul.f32 %v2621, %v2623
  %v2625 = vadd.f32 %v2624, -0.4999988
  %v2626 = vmul.f32 %v2621, %v2625
  %v2627 = vadd.f32 1.0, %v2626
  %v2628 = vmul.f32 %v2619, %v2619
  %v2629 = vmul.f32 %v2628, -0.00019511016
  %v2630 = vadd.f32 %v2629, 0.008332121
  %v2631 = vmul.f32 %v2628, %v2630
  %v2632 = vadd.f32 %v2631, -0.16666654
  %v2633 = vmul.f32 %v2628, %v2632
  %v2634 = vadd.f32 %v2633, 1.0
  %v2635 = vmul.f32 %v2634, %v2619
  %vm2636 = vweird.f32 %v305
  %v2637 = vadd.s32 %v2620, 3
  %v2638 = vand.u32 %v2637, 3
  %vm2639 = vcmp.lt.s32.totalorder %v2638, 2
  %vm2640 = vcmp.eq.s32.totalorder %v2638, 0
  %v2641 = vxor.u32 %v2635, 2147483648
  %v2642 = vsel %vm2640, %v2627, %v2641
  %vm2643 = vcmp.eq.s32.totalorder %v2638, 2
  %v2644 = vxor.u32 %v2627, 2147483648
  %v2645 = vsel %vm2643, %v2644, %v2635
  %v2646 = vsel %vm2639, %v2642, %v2645
  %v2647 = vsel %vm2636, nan, %v2646
  %v2648 = vand.u32 2147483647, %v306
  %vm2649 = vcmp.le.f32.partialorder %v2648, 0.7853982
  %vm2650 = vcmp.lt.s32.totalorder %v306, 0
  %v2651 = vand.u32 %v306, 2139095040
  %v2652 = vshrl.u32 %v2651, 23
  %v2653 = vsub.s32 %v2652, 127
  %v2654 = vand.u32 2147483647, %v306
  %v2655 = vand.u32 %v2654, 8388607
  %v2656 = vor.u32 %v2655, 8388608
  %v2657 = vsub.s32 0, %v2656
  %v2658 = vadd.s32 %v2653, 1
  %vm2659 = vcmp.gt.s32.totalorder %v2658, 0
  %v2660 = vsel %vm2659, %v2658, 0
  %v2661 = vshrl.u32 %v2660, 5
  %v2662 = vand.u32 %v2660, 31
  %v2663 = vsub.s32 32, %v2662
  %v2664 = vshrl.u32 683565275, %v2663
  %v2665 = vshll.u32 683565275, %v2662
  %v2666 = vshrl.u32 2475754826, %v2663
  %v2667 = vor.u32 %v2665, %v2666
  %v2668 = vshll.u32 2475754826, %v2662
  %v2669 = vshrl.u32 2131351028, %v2663
  %v2670 = vor.u32 %v2668, %v2669
  %v2671 = vshll.u32 2131351028, %v2662
  %v2672 = vshrl.u32 2102212464, %v2663
  %v2673 = vor.u32 %v2671, %v2672
  %v2674 = vshll.u32 2102212464, %v2662
  %v2675 = vshrl.u32 920167782, %v2663
  %v2676 = vor.u32 %v2674, %v2675
  %v2677 = vshll.u32 920167782, %v2662
  %v2678 = vshrl.u32 1326507024, %v2663
  %v2679 = vor.u32 %v2677, %v2678
  %vm2680 = vcmp.lt.s32.totalorder %v2661, 1
  %vm2681 = vcmp.lt.s32.totalorder %v2661, 2
  %vm2682 = vcmp.lt.s32.totalorder %v2661, 3
  %vm2683 = vcmp.lt.s32.totalorder %v2661, 4
  %v2684 = vsel %vm2680, %v2664, %v2667
  %v2685 = vsel %vm2683, %v2673, 2102212464
  %v2686 = vsel %vm2682, %v2670, %v2685
  %v2687 = vsel %vm2681, %v2684, %v2686
  %v2688 = vsel %vm2680, %v2667, %v2670
  %v2689 = vsel %vm2683, %v2676, 920167782
  %v2690 = vsel %vm2682, %v2673, %v2689
  %v2691 = vsel %vm2681, %v2688, %v2690
  %v2692 = vsel %vm2680, %v2670, %v2673
  %v2693 = vsel %vm2683, %v2679, 1326507024
  %v2694 = vsel %vm2682, %v2676, %v2693
  %v2695 = vsel %vm2681, %v2692, %v2694
  %v2696 = vshll.u32 %v2656, 8
  %v2697 = vand.u32 %v2696, 65535
  %v2698 = vshrl.u32 %v2696, 16
  %v2699 = vand.u32 %v2695, 65535
  %v2700 = vshrl.u32 %v2695, 16
  %v2701 = vmul.u32 %v2697, %v2699
  %v2702 = vmul.u32 %v2697, %v2700
  %v2703 = vmul.u32 %v2698, %v2699
  %v2704 = vmul.u32 %v2698, %v2700
  %v2705 = vshll.u32 %v2702, 16
  %v2706 = vshrl.u32 %v2702, 16
  %v2707 = vshll.u32 %v2703, 16
  %v2708 = vshrl.u32 %v2703, 16
  %vm2709 = vc.u32 %v2701, %v2705
  %v2710 = vsel %vm2709, 1, 0
  %v2711 = vadd.s32 %v2701, %v2705
  %v2712 = vadd.s32 %v2704, %v2710
  %vm2713 = vc.u32 %v2711, %v2707
  %v2714 = vsel %vm2713, 1, 0
  %v2715 = vadd.s32 %v2711, %v2707
  %v2716 = vadd.s32 %v2712, %v2714
  %v2717 = vadd.s32 %v2716, %v2706
  %v2718 = vadd.s32 %v2717, %v2708
  %v2719 = vand.u32 %v2696, 65535
  %v2720 = vshrl.u32 %v2696, 16
  %v2721 = vand.u32 %v2691, 65535
  %v2722 = vshrl.u32 %v2691, 16
  %v2723 = vmul.u32 %v2719, %v2721
  %v2724 = vmul.u32 %v2719, %v2722
  %v2725 = vmul.u32 %v2720, %v2721
  %v2726 = vmul.u32 %v2720, %v2722
  %v2727 = vshll.u32 %v2724, 16
  %v2728 = vshrl.u32 %v2724, 16
  %v2729 = vshll.u32 %v2725, 16
  %v2730 = vshrl.u32 %v2725, 16
  %vm2731 = vc.u32 %v2723, %v2727
  %v2732 = vsel %vm2731, 1, 0
  %v2733 = vadd.s32 %v2723, %v2727
  %v2734 = vadd.s32 %v2726, %v2732
  %vm2735 = vc.u32 %v2733, %v2729
  %v2736 = vsel %vm2735, 1, 0
  %v2737 = vadd.s32 %v2733, %v2729
  %v2738 = vadd.s32 %v2734, %v2736
  %v2739 = vadd.s32 %v2738, %v2728
  %v2740 = vadd.s32 %v2739, %v2730
  %v2741 = vmul.u32 %v2696, %v2687
  %v2742 = vadd.s32 %v2718, %v2737
  %vm2743 = vc.u32 %v2718, %v2737
  %v2744 = vadd.s32 %v2740, 1
  %v2745 = vsel %vm2743, %v2744, %v2740
  %v2746 = vadd.s32 %v2741, %v2745
  %v2747 = vadd.s32 %v2746, 536870912
  %v2748 = vshrl.u32 %v2747, 30
  %v2749 = vshll.u32 %v2748, 30
  %v2750 = vsub.s32 %v2746, %v2749
  %vm2751 = vcmp.lt.s32.totalorder %v2750, 0
  %v2752 = vsub.s32 0, %v2750
  %v2753 = vsel %vm2751, %v2752, %v2750
  %v2754 = vclz %v2753
  %v2755 = vsub.s32 %v2754, 2
  %vm2756 = vcmp.gt.s32.totalorder 0, %v2755
  %v2757 = vsel %vm2756, 0, %v2755
  %v2758 = vsub.s32 32, %v2757
  %v2759 = vshll.u32 %v2750, %v2757
  %v2760 = vshrl.u32 %v2742, %v2758
  %v2761 = vor.u32 %v2759, %v2760
  %v2762 = vsub.s32 4294967266, %v2757
  %v2763 = vadd.s32 %v2762, 127
  %v2764 = vshll.u32 %v2763, 23
  %v2765 = vor.u32 4788187, %v2764
  %v2766 = vand.u32 2147483647, %v2765
  %v2768 = vcvt.s32.f32 %v2761
  %v2769 = vmul.f32 %v2768, %v2766
  %v2770 = vxor.u32 %v2769, 2147483648
  %v2771 = vsel %vm2650, %v2770, %v2769
  %v2772 = vsub.s32 4, %v2748
  %v2773 = vsel %vm2650, %v2772, %v2748
  %v2774 = vsel %vm2649, %v306, %v2771
  %v2775 = vsel %vm2649, 0, %v2773
  %v2776 = vmul.f32 %v2774, %v2774
  %v2777 = vmul.f32 %v2776, -0.001358992
  %v2778 = vadd.f32 %v2777, 0.041655596
  %v2779 = vmul.f32 %v2776, %v2778
  %v2780 = vadd.f32 %v2779, -0.4999988
  %v2781 = vmul.f32 %v2776, %v2780
  %v2782 = vadd.f32 1.0, %v2781
  %v2783 = vmul.f32 %v2774, %v2774
  %v2784 = vmul.f32 %v2783, -0.00019511016
  %v2785 = vadd.f32 %v2784, 0.008332121
  %v2786 = vmul.f32 %v2783, %v2785
  %v2787 = vadd.f32 %v2786, -0.16666654
  %v2788 = vmul.f32 %v2783, %v2787
  %v2789 = vadd.f32 %v2788, 1.0
  %v2790 = vmul.f32 %v2789, %v2774
  %vm2791 = vweird.f32 %v306
  %v2792 = vadd.s32 %v2775, 3
  %v2793 = vand.u32 %v2792, 3
  %vm2794 = vcmp.lt.s32.totalorder %v2793, 2
  %vm2795 = vcmp.eq.s32.totalorder %v2793, 0
  %v2796 = vxor.u32 %v2790, 2147483648
  %v2797 = vsel %vm2795, %v2782, %v2796
  %vm2798 = vcmp.eq.s32.totalorder %v2793, 2
  %v2799 = vxor.u32 %v2782, 2147483648
  %v2800 = vsel %vm2798, %v2799, %v2790
  %v2801 = vsel %vm2794, %v2797, %v2800
  %v2802 = vsel %vm2791, nan, %v2801
  %v2803 = vand.u32 2147483647, %v307
  %vm2804 = vcmp.le.f32.partialorder %v2803, 0.7853982
  %vm2805 = vcmp.lt.s32.totalorder %v307, 0
  %v2806 = vand.u32 %v307, 2139095040
  %v2807 = vshrl.u32 %v2806, 23
  %v2808 = vsub.s32 %v2807, 127
  %v2809 = vand.u32 2147483647, %v307
  %v2810 = vand.u32 %v2809, 8388607
  %v2811 = vor.u32 %v2810, 8388608
  %v2812 = vsub.s32 0, %v2811
  %v2813 = vadd.s32 %v2808, 1
  %vm2814 = vcmp.gt.s32.totalorder %v2813, 0
  %v2815 = vsel %vm2814, %v2813, 0
  %v2816 = vshrl.u32 %v2815, 5
  %v2817 = vand.u32 %v2815, 31
  %v2818 = vsub.s32 32, %v2817
  %v2819 = vshrl.u32 683565275, %v2818
  %v2820 = vshll.u32 683565275, %v2817
  %v2821 = vshrl.u32 2475754826, %v2818
  %v2822 = vor.u32 %v2820, %v2821
  %v2823 = vshll.u32 2475754826, %v2817
  %v2824 = vshrl.u32 2131351028, %v2818
  %v2825 = vor.u32 %v2823, %v2824
  %v2826 = vshll.u32 2131351028, %v2817
  %v2827 = vshrl.u32 2102212464, %v2818
  %v2828 = vor.u32 %v2826, %v2827
  %v2829 = vshll.u32 2102212464, %v2817
  %v2830 = vshrl.u32 920167782, %v2818
  %v2831 = vor.u32 %v2829, %v2830
  %v2832 = vshll.u32 920167782, %v2817
  %v2833 = vshrl.u32 1326507024, %v2818
  %v2834 = vor.u32 %v2832, %v2833
  %vm2835 = vcmp.lt.s32.totalorder %v2816, 1
  %vm2836 = vcmp.lt.s32.totalorder %v2816, 2
  %vm2837 = vcmp.lt.s32.totalorder %v2816, 3
  %vm2838 = vcmp.lt.s32.totalorder %v2816, 4
  %v2839 = vsel %vm2835, %v2819, %v2822
  %v2840 = vsel %vm2838, %v2828, 2102212464
  %v2841 = vsel %vm2837, %v2825, %v2840
  %v2842 = vsel %vm2836, %v2839, %v2841
  %v2843 = vsel %vm2835, %v2822, %v2825
  %v2844 = vsel %vm2838, %v2831, 920167782
  %v2845 = vsel %vm2837, %v2828, %v2844
  %v2846 = vsel %vm2836, %v2843, %v2845
  %v2847 = vsel %vm2835, %v2825, %v2828
  %v2848 = vsel %vm2838, %v2834, 1326507024
  %v2849 = vsel %vm2837, %v2831, %v2848
  %v2850 = vsel %vm2836, %v2847, %v2849
  %v2851 = vshll.u32 %v2811, 8
  %v2852 = vand.u32 %v2851, 65535
  %v2853 = vshrl.u32 %v2851, 16
  %v2854 = vand.u32 %v2850, 65535
  %v2855 = vshrl.u32 %v2850, 16
  %v2856 = vmul.u32 %v2852, %v2854
  %v2857 = vmul.u32 %v2852, %v2855
  %v2858 = vmul.u32 %v2853, %v2854
  %v2859 = vmul.u32 %v2853, %v2855
  %v2860 = vshll.u32 %v2857, 16
  %v2861 = vshrl.u32 %v2857, 16
  %v2862 = vshll.u32 %v2858, 16
  %v2863 = vshrl.u32 %v2858, 16
  %vm2864 = vc.u32 %v2856, %v2860
  %v2865 = vsel %vm2864, 1, 0
  %v2866 = vadd.s32 %v2856, %v2860
  %v2867 = vadd.s32 %v2859, %v2865
  %vm2868 = vc.u32 %v2866, %v2862
  %v2869 = vsel %vm2868, 1, 0
  %v2870 = vadd.s32 %v2866, %v2862
  %v2871 = vadd.s32 %v2867, %v2869
  %v2872 = vadd.s32 %v2871, %v2861
  %v2873 = vadd.s32 %v2872, %v2863
  %v2874 = vand.u32 %v2851, 65535
  %v2875 = vshrl.u32 %v2851, 16
  %v2876 = vand.u32 %v2846, 65535
  %v2877 = vshrl.u32 %v2846, 16
  %v2878 = vmul.u32 %v2874, %v2876
  %v2879 = vmul.u32 %v2874, %v2877
  %v2880 = vmul.u32 %v2875, %v2876
  %v2881 = vmul.u32 %v2875, %v2877
  %v2882 = vshll.u32 %v2879, 16
  %v2883 = vshrl.u32 %v2879, 16
  %v2884 = vshll.u32 %v2880, 16
  %v2885 = vshrl.u32 %v2880, 16
  %vm2886 = vc.u32 %v2878, %v2882
  %v2887 = vsel %vm2886, 1, 0
  %v2888 = vadd.s32 %v2878, %v2882
  %v2889 = vadd.s32 %v2881, %v2887
  %vm2890 = vc.u32 %v2888, %v2884
  %v2891 = vsel %vm2890, 1, 0
  %v2892 = vadd.s32 %v2888, %v2884
  %v2893 = vadd.s32 %v2889, %v2891
  %v2894 = vadd.s32 %v2893, %v2883
  %v2895 = vadd.s32 %v2894, %v2885
  %v2896 = vmul.u32 %v2851, %v2842
  %v2897 = vadd.s32 %v2873, %v2892
  %vm2898 = vc.u32 %v2873, %v2892
  %v2899 = vadd.s32 %v2895, 1
  %v2900 = vsel %vm2898, %v2899, %v2895
  %v2901 = vadd.s32 %v2896, %v2900
  %v2902 = vadd.s32 %v2901, 536870912
  %v2903 = vshrl.u32 %v2902, 30
  %v2904 = vshll.u32 %v2903, 30
  %v2905 = vsub.s32 %v2901, %v2904
  %vm2906 = vcmp.lt.s32.totalorder %v2905, 0
  %v2907 = vsub.s32 0, %v2905
  %v2908 = vsel %vm2906, %v2907, %v2905
  %v2909 = vclz %v2908
  %v2910 = vsub.s32 %v2909, 2
  %vm2911 = vcmp.gt.s32.totalorder 0, %v2910
  %v2912 = vsel %vm2911, 0, %v2910
  %v2913 = vsub.s32 32, %v2912
  %v2914 = vshll.u32 %v2905, %v2912
  %v2915 = vshrl.u32 %v2897, %v2913
  %v2916 = vor.u32 %v2914, %v2915
  %v2917 = vsub.s32 4294967266, %v2912
  %v2918 = vadd.s32 %v2917, 127
  %v2919 = vshll.u32 %v2918, 23
  %v2920 = vor.u32 4788187, %v2919
  %v2921 = vand.u32 2147483647, %v2920
  %v2923 = vcvt.s32.f32 %v2916
  %v2924 = vmul.f32 %v2923, %v2921
  %v2925 = vxor.u32 %v2924, 2147483648
  %v2926 = vsel %vm2805, %v2925, %v2924
  %v2927 = vsub.s32 4, %v2903
  %v2928 = vsel %vm2805, %v2927, %v2903
  %v2929 = vsel %vm2804, %v307, %v2926
  %v2930 = vsel %vm2804, 0, %v2928
  %v2931 = vmul.f32 %v2929, %v2929
  %v2932 = vmul.f32 %v2931, -0.001358992
  %v2933 = vadd.f32 %v2932, 0.041655596
  %v2934 = vmul.f32 %v2931, %v2933
  %v2935 = vadd.f32 %v2934, -0.4999988
  %v2936 = vmul.f32 %v2931, %v2935
  %v2937 = vadd.f32 1.0, %v2936
  %v2938 = vmul.f32 %v2929, %v2929
  %v2939 = vmul.f32 %v2938, -0.00019511016
  %v2940 = vadd.f32 %v2939, 0.008332121
  %v2941 = vmul.f32 %v2938, %v2940
  %v2942 = vadd.f32 %v2941, -0.16666654
  %v2943 = vmul.f32 %v2938, %v2942
  %v2944 = vadd.f32 %v2943, 1.0
  %v2945 = vmul.f32 %v2944, %v2929
  %vm2946 = vweird.f32 %v307
  %v2947 = vadd.s32 %v2930, 3
  %v2948 = vand.u32 %v2947, 3
  %vm2949 = vcmp.lt.s32.totalorder %v2948, 2
  %vm2950 = vcmp.eq.s32.totalorder %v2948, 0
  %v2951 = vxor.u32 %v2945, 2147483648
  %v2952 = vsel %vm2950, %v2937, %v2951
  %vm2953 = vcmp.eq.s32.totalorder %v2948, 2
  %v2954 = vxor.u32 %v2937, 2147483648
  %v2955 = vsel %vm2953, %v2954, %v2945
  %v2956 = vsel %vm2949, %v2952, %v2955
  %v2957 = vsel %vm2946, nan, %v2956
  %v2958 = vand.u32 2147483647, %v308
  %vm2959 = vcmp.le.f32.partialorder %v2958, 0.7853982
  %vm2960 = vcmp.lt.s32.totalorder %v308, 0
  %v2961 = vand.u32 %v308, 2139095040
  %v2962 = vshrl.u32 %v2961, 23
  %v2963 = vsub.s32 %v2962, 127
  %v2964 = vand.u32 2147483647, %v308
  %v2965 = vand.u32 %v2964, 8388607
  %v2966 = vor.u32 %v2965, 8388608
  %v2967 = vsub.s32 0, %v2966
  %v2968 = vadd.s32 %v2963, 1
  %vm2969 = vcmp.gt.s32.totalorder %v2968, 0
  %v2970 = vsel %vm2969, %v2968, 0
  %v2971 = vshrl.u32 %v2970, 5
  %v2972 = vand.u32 %v2970, 31
  %v2973 = vsub.s32 32, %v2972
  %v2974 = vshrl.u32 683565275, %v2973
  %v2975 = vshll.u32 683565275, %v2972
  %v2976 = vshrl.u32 2475754826, %v2973
  %v2977 = vor.u32 %v2975, %v2976
  %v2978 = vshll.u32 2475754826, %v2972
  %v2979 = vshrl.u32 2131351028, %v2973
  %v2980 = vor.u32 %v2978, %v2979
  %v2981 = vshll.u32 2131351028, %v2972
  %v2982 = vshrl.u32 2102212464, %v2973
  %v2983 = vor.u32 %v2981, %v2982
  %v2984 = vshll.u32 2102212464, %v2972
  %v2985 = vshrl.u32 920167782, %v2973
  %v2986 = vor.u32 %v2984, %v2985
  %v2987 = vshll.u32 920167782, %v2972
  %v2988 = vshrl.u32 1326507024, %v2973
  %v2989 = vor.u32 %v2987, %v2988
  %vm2990 = vcmp.lt.s32.totalorder %v2971, 1
  %vm2991 = vcmp.lt.s32.totalorder %v2971, 2
  %vm2992 = vcmp.lt.s32.totalorder %v2971, 3
  %vm2993 = vcmp.lt.s32.totalorder %v2971, 4
  %v2994 = vsel %vm2990, %v2974, %v2977
  %v2995 = vsel %vm2993, %v2983, 2102212464
  %v2996 = vsel %vm2992, %v2980, %v2995
  %v2997 = vsel %vm2991, %v2994, %v2996
  %v2998 = vsel %vm2990, %v2977, %v2980
  %v2999 = vsel %vm2993, %v2986, 920167782
  %v3000 = vsel %vm2992, %v2983, %v2999
  %v3001 = vsel %vm2991, %v2998, %v3000
  %v3002 = vsel %vm2990, %v2980, %v2983
  %v3003 = vsel %vm2993, %v2989, 1326507024
  %v3004 = vsel %vm2992, %v2986, %v3003
  %v3005 = vsel %vm2991, %v3002, %v3004
  %v3006 = vshll.u32 %v2966, 8
  %v3007 = vand.u32 %v3006, 65535
  %v3008 = vshrl.u32 %v3006, 16
  %v3009 = vand.u32 %v3005, 65535
  %v3010 = vshrl.u32 %v3005, 16
  %v3011 = vmul.u32 %v3007, %v3009
  %v3012 = vmul.u32 %v3007, %v3010
  %v3013 = vmul.u32 %v3008, %v3009
  %v3014 = vmul.u32 %v3008, %v3010
  %v3015 = vshll.u32 %v3012, 16
  %v3016 = vshrl.u32 %v3012, 16
  %v3017 = vshll.u32 %v3013, 16
  %v3018 = vshrl.u32 %v3013, 16
  %vm3019 = vc.u32 %v3011, %v3015
  %v3020 = vsel %vm3019, 1, 0
  %v3021 = vadd.s32 %v3011, %v3015
  %v3022 = vadd.s32 %v3014, %v3020
  %vm3023 = vc.u32 %v3021, %v3017
  %v3024 = vsel %vm3023, 1, 0
  %v3025 = vadd.s32 %v3021, %v3017
  %v3026 = vadd.s32 %v3022, %v3024
  %v3027 = vadd.s32 %v3026, %v3016
  %v3028 = vadd.s32 %v3027, %v3018
  %v3029 = vand.u32 %v3006, 65535
  %v3030 = vshrl.u32 %v3006, 16
  %v3031 = vand.u32 %v3001, 65535
  %v3032 = vshrl.u32 %v3001, 16
  %v3033 = vmul.u32 %v3029, %v3031
  %v3034 = vmul.u32 %v3029, %v3032
  %v3035 = vmul.u32 %v3030, %v3031
  %v3036 = vmul.u32 %v3030, %v3032
  %v3037 = vshll.u32 %v3034, 16
  %v3038 = vshrl.u32 %v3034, 16
  %v3039 = vshll.u32 %v3035, 16
  %v3040 = vshrl.u32 %v3035, 16
  %vm3041 = vc.u32 %v3033, %v3037
  %v3042 = vsel %vm3041, 1, 0
  %v3043 = vadd.s32 %v3033, %v3037
  %v3044 = vadd.s32 %v3036, %v3042
  %vm3045 = vc.u32 %v3043, %v3039
  %v3046 = vsel %vm3045, 1, 0
  %v3047 = vadd.s32 %v3043, %v3039
  %v3048 = vadd.s32 %v3044, %v3046
  %v3049 = vadd.s32 %v3048, %v3038
  %v3050 = vadd.s32 %v3049, %v3040
  %v3051 = vmul.u32 %v3006, %v2997
  %v3052 = vadd.s32 %v3028, %v3047
  %vm3053 = vc.u32 %v3028, %v3047
  %v3054 = vadd.s32 %v3050, 1
  %v3055 = vsel %vm3053, %v3054, %v3050
  %v3056 = vadd.s32 %v3051, %v3055
  %v3057 = vadd.s32 %v3056, 536870912
  %v3058 = vshrl.u32 %v3057, 30
  %v3059 = vshll.u32 %v3058, 30
  %v3060 = vsub.s32 %v3056, %v3059
  %vm3061 = vcmp.lt.s32.totalorder %v3060, 0
  %v3062 = vsub.s32 0, %v3060
  %v3063 = vsel %vm3061, %v3062, %v3060
  %v3064 = vclz %v3063
  %v3065 = vsub.s32 %v3064, 2
  %vm3066 = vcmp.gt.s32.totalorder 0, %v3065
  %v3067 = vsel %vm3066, 0, %v3065
  %v3068 = vsub.s32 32, %v3067
  %v3069 = vshll.u32 %v3060, %v3067
  %v3070 = vshrl.u32 %v3052, %v3068
  %v3071 = vor.u32 %v3069, %v3070
  %v3072 = vsub.s32 4294967266, %v3067
  %v3073 = vadd.s32 %v3072, 127
  %v3074 = vshll.u32 %v3073, 23
  %v3075 = vor.u32 4788187, %v3074
  %v3076 = vand.u32 2147483647, %v3075
  %v3078 = vcvt.s32.f32 %v3071
  %v3079 = vmul.f32 %v3078, %v3076
  %v3080 = vxor.u32 %v3079, 2147483648
  %v3081 = vsel %vm2960, %v3080, %v3079
  %v3082 = vsub.s32 4, %v3058
  %v3083 = vsel %vm2960, %v3082, %v3058
  %v3084 = vsel %vm2959, %v308, %v3081
  %v3085 = vsel %vm2959, 0, %v3083
  %v3086 = vmul.f32 %v3084, %v3084
  %v3087 = vmul.f32 %v3086, -0.001358992
  %v3088 = vadd.f32 %v3087, 0.041655596
  %v3089 = vmul.f32 %v3086, %v3088
  %v3090 = vadd.f32 %v3089, -0.4999988
  %v3091 = vmul.f32 %v3086, %v3090
  %v3092 = vadd.f32 1.0, %v3091
  %v3093 = vmul.f32 %v3084, %v3084
  %v3094 = vmul.f32 %v3093, -0.00019511016
  %v3095 = vadd.f32 %v3094, 0.008332121
  %v3096 = vmul.f32 %v3093, %v3095
  %v3097 = vadd.f32 %v3096, -0.16666654
  %v3098 = vmul.f32 %v3093, %v3097
  %v3099 = vadd.f32 %v3098, 1.0
  %v3100 = vmul.f32 %v3099, %v3084
  %vm3101 = vweird.f32 %v308
  %v3102 = vadd.s32 %v3085, 3
  %v3103 = vand.u32 %v3102, 3
  %vm3104 = vcmp.lt.s32.totalorder %v3103, 2
  %vm3105 = vcmp.eq.s32.totalorder %v3103, 0
  %v3106 = vxor.u32 %v3100, 2147483648
  %v3107 = vsel %vm3105, %v3092, %v3106
  %vm3108 = vcmp.eq.s32.totalorder %v3103, 2
  %v3109 = vxor.u32 %v3092, 2147483648
  %v3110 = vsel %vm3108, %v3109, %v3100
  %v3111 = vsel %vm3104, %v3107, %v3110
  %v3112 = vsel %vm3101, nan, %v3111
  %v3113 = vand.u32 2147483647, %v309
  %vm3114 = vcmp.le.f32.partialorder %v3113, 0.7853982
  %vm3115 = vcmp.lt.s32.totalorder %v309, 0
  %v3116 = vand.u32 %v309, 2139095040
  %v3117 = vshrl.u32 %v3116, 23
  %v3118 = vsub.s32 %v3117, 127
  %v3119 = vand.u32 2147483647, %v309
  %v3120 = vand.u32 %v3119, 8388607
  %v3121 = vor.u32 %v3120, 8388608
  %v3122 = vsub.s32 0, %v3121
  %v3123 = vadd.s32 %v3118, 1
  %vm3124 = vcmp.gt.s32.totalorder %v3123, 0
  %v3125 = vsel %vm3124, %v3123, 0
  %v3126 = vshrl.u32 %v3125, 5
  %v3127 = vand.u32 %v3125, 31
  %v3128 = vsub.s32 32, %v3127
  %v3129 = vshrl.u32 683565275, %v3128
  %v3130 = vshll.u32 683565275, %v3127
  %v3131 = vshrl.u32 2475754826, %v3128
  %v3132 = vor.u32 %v3130, %v3131
  %v3133 = vshll.u32 2475754826, %v3127
  %v3134 = vshrl.u32 2131351028, %v3128
  %v3135 = vor.u32 %v3133, %v3134
  %v3136 = vshll.u32 2131351028, %v3127
  %v3137 = vshrl.u32 2102212464, %v3128
  %v3138 = vor.u32 %v3136, %v3137
  %v3139 = vshll.u32 2102212464, %v3127
  %v3140 = vshrl.u32 920167782, %v3128
  %v3141 = vor.u32 %v3139, %v3140
  %v3142 = vshll.u32 920167782, %v3127
  %v3143 = vshrl.u32 1326507024, %v3128
  %v3144 = vor.u32 %v3142, %v3143
  %vm3145 = vcmp.lt.s32.totalorder %v3126, 1
  %vm3146 = vcmp.lt.s32.totalorder %v3126, 2
  %vm3147 = vcmp.lt.s32.totalorder %v3126, 3
  %vm3148 = vcmp.lt.s32.totalorder %v3126, 4
  %v3149 = vsel %vm3145, %v3129, %v3132
  %v3150 = vsel %vm3148, %v3138, 2102212464
  %v3151 = vsel %vm3147, %v3135, %v3150
  %v3152 = vsel %vm3146, %v3149, %v3151
  %v3153 = vsel %vm3145, %v3132, %v3135
  %v3154 = vsel %vm3148, %v3141, 920167782
  %v3155 = vsel %vm3147, %v3138, %v3154
  %v3156 = vsel %vm3146, %v3153, %v3155
  %v3157 = vsel %vm3145, %v3135, %v3138
  %v3158 = vsel %vm3148, %v3144, 1326507024
  %v3159 = vsel %vm3147, %v3141, %v3158
  %v3160 = vsel %vm3146, %v3157, %v3159
  %v3161 = vshll.u32 %v3121, 8
  %v3162 = vand.u32 %v3161, 65535
  %v3163 = vshrl.u32 %v3161, 16
  %v3164 = vand.u32 %v3160, 65535
  %v3165 = vshrl.u32 %v3160, 16
  %v3166 = vmul.u32 %v3162, %v3164
  %v3167 = vmul.u32 %v3162, %v3165
  %v3168 = vmul.u32 %v3163, %v3164
  %v3169 = vmul.u32 %v3163, %v3165
  %v3170 = vshll.u32 %v3167, 16
  %v3171 = vshrl.u32 %v3167, 16
  %v3172 = vshll.u32 %v3168, 16
  %v3173 = vshrl.u32 %v3168, 16
  %vm3174 = vc.u32 %v3166, %v3170
  %v3175 = vsel %vm3174, 1, 0
  %v3176 = vadd.s32 %v3166, %v3170
  %v3177 = vadd.s32 %v3169, %v3175
  %vm3178 = vc.u32 %v3176, %v3172
  %v3179 = vsel %vm3178, 1, 0
  %v3180 = vadd.s32 %v3176, %v3172
  %v3181 = vadd.s32 %v3177, %v3179
  %v3182 = vadd.s32 %v3181, %v3171
  %v3183 = vadd.s32 %v3182, %v3173
  %v3184 = vand.u32 %v3161, 65535
  %v3185 = vshrl.u32 %v3161, 16
  %v3186 = vand.u32 %v3156, 65535
  %v3187 = vshrl.u32 %v3156, 16
  %v3188 = vmul.u32 %v3184, %v3186
  %v3189 = vmul.u32 %v3184, %v3187
  %v3190 = vmul.u32 %v3185, %v3186
  %v3191 = vmul.u32 %v3185, %v3187
  %v3192 = vshll.u32 %v3189, 16
  %v3193 = vshrl.u32 %v3189, 16
  %v3194 = vshll.u32 %v3190, 16
  %v3195 = vshrl.u32 %v3190, 16
  %vm3196 = vc.u32 %v3188, %v3192
  %v3197 = vsel %vm3196, 1, 0
  %v3198 = vadd.s32 %v3188, %v3192
  %v3199 = vadd.s32 %v3191, %v3197
  %vm3200 = vc.u32 %v3198, %v3194
  %v3201 = vsel %vm3200, 1, 0
  %v3202 = vadd.s32 %v3198, %v3194
  %v3203 = vadd.s32 %v3199, %v3201
  %v3204 = vadd.s32 %v3203, %v3193
  %v3205 = vadd.s32 %v3204, %v3195
  %v3206 = vmul.u32 %v3161, %v3152
  %v3207 = vadd.s32 %v3183, %v3202
  %vm3208 = vc.u32 %v3183, %v3202
  %v3209 = vadd.s32 %v3205, 1
  %v3210 = vsel %vm3208, %v3209, %v3205
  %v3211 = vadd.s32 %v3206, %v3210
  %v3212 = vadd.s32 %v3211, 536870912
  %v3213 = vshrl.u32 %v3212, 30
  %v3214 = vshll.u32 %v3213, 30
  %v3215 = vsub.s32 %v3211, %v3214
  %vm3216 = vcmp.lt.s32.totalorder %v3215, 0
  %v3217 = vsub.s32 0, %v3215
  %v3218 = vsel %vm3216, %v3217, %v3215
  %v3219 = vclz %v3218
  %v3220 = vsub.s32 %v3219, 2
  %vm3221 = vcmp.gt.s32.totalorder 0, %v3220
  %v3222 = vsel %vm3221, 0, %v3220
  %v3223 = vsub.s32 32, %v3222
  %v3224 = vshll.u32 %v3215, %v3222
  %v3225 = vshrl.u32 %v3207, %v3223
  %v3226 = vor.u32 %v3224, %v3225
  %v3227 = vsub.s32 4294967266, %v3222
  %v3228 = vadd.s32 %v3227, 127
  %v3229 = vshll.u32 %v3228, 23
  %v3230 = vor.u32 4788187, %v3229
  %v3231 = vand.u32 2147483647, %v3230
  %v3233 = vcvt.s32.f32 %v3226
  %v3234 = vmul.f32 %v3233, %v3231
  %v3235 = vxor.u32 %v3234, 2147483648
  %v3236 = vsel %vm3115, %v3235, %v3234
  %v3237 = vsub.s32 4, %v3213
  %v3238 = vsel %vm3115, %v3237, %v3213
  %v3239 = vsel %vm3114, %v309, %v3236
  %v3240 = vsel %vm3114, 0, %v3238
  %v3241 = vmul.f32 %v3239, %v3239
  %v3242 = vmul.f32 %v3241, -0.001358992
  %v3243 = vadd.f32 %v3242, 0.041655596
  %v3244 = vmul.f32 %v3241, %v3243
  %v3245 = vadd.f32 %v3244, -0.4999988
  %v3246 = vmul.f32 %v3241, %v3245
  %v3247 = vadd.f32 1.0, %v3246
  %v3248 = vmul.f32 %v3239, %v3239
  %v3249 = vmul.f32 %v3248, -0.00019511016
  %v3250 = vadd.f32 %v3249, 0.008332121
  %v3251 = vmul.f32 %v3248, %v3250
  %v3252 = vadd.f32 %v3251, -0.16666654
  %v3253 = vmul.f32 %v3248, %v3252
  %v3254 = vadd.f32 %v3253, 1.0
  %v3255 = vmul.f32 %v3254, %v3239
  %vm3256 = vweird.f32 %v309
  %v3257 = vadd.s32 %v3240, 3
  %v3258 = vand.u32 %v3257, 3
  %vm3259 = vcmp.lt.s32.totalorder %v3258, 2
  %vm3260 = vcmp.eq.s32.totalorder %v3258, 0
  %v3261 = vxor.u32 %v3255, 2147483648
  %v3262 = vsel %vm3260, %v3247, %v3261
  %vm3263 = vcmp.eq.s32.totalorder %v3258, 2
  %v3264 = vxor.u32 %v3247, 2147483648
  %v3265 = vsel %vm3263, %v3264, %v3255
  %v3266 = vsel %vm3259, %v3262, %v3265
  %v3267 = vsel %vm3256, nan, %v3266
  %v3268 = vand.u32 2147483647, %v310
  %vm3269 = vcmp.le.f32.partialorder %v3268, 0.7853982
  %vm3270 = vcmp.lt.s32.totalorder %v310, 0
  %v3271 = vand.u32 %v310, 2139095040
  %v3272 = vshrl.u32 %v3271, 23
  %v3273 = vsub.s32 %v3272, 127
  %v3274 = vand.u32 2147483647, %v310
  %v3275 = vand.u32 %v3274, 8388607
  %v3276 = vor.u32 %v3275, 8388608
  %v3277 = vsub.s32 0, %v3276
  %v3278 = vadd.s32 %v3273, 1
  %vm3279 = vcmp.gt.s32.totalorder %v3278, 0
  %v3280 = vsel %vm3279, %v3278, 0
  %v3281 = vshrl.u32 %v3280, 5
  %v3282 = vand.u32 %v3280, 31
  %v3283 = vsub.s32 32, %v3282
  %v3284 = vshrl.u32 683565275, %v3283
  %v3285 = vshll.u32 683565275, %v3282
  %v3286 = vshrl.u32 2475754826, %v3283
  %v3287 = vor.u32 %v3285, %v3286
  %v3288 = vshll.u32 2475754826, %v3282
  %v3289 = vshrl.u32 2131351028, %v3283
  %v3290 = vor.u32 %v3288, %v3289
  %v3291 = vshll.u32 2131351028, %v3282
  %v3292 = vshrl.u32 2102212464, %v3283
  %v3293 = vor.u32 %v3291, %v3292
  %v3294 = vshll.u32 2102212464, %v3282
  %v3295 = vshrl.u32 920167782, %v3283
  %v3296 = vor.u32 %v3294, %v3295
  %v3297 = vshll.u32 920167782, %v3282
  %v3298 = vshrl.u32 1326507024, %v3283
  %v3299 = vor.u32 %v3297, %v3298
  %vm3300 = vcmp.lt.s32.totalorder %v3281, 1
  %vm3301 = vcmp.lt.s32.totalorder %v3281, 2
  %vm3302 = vcmp.lt.s32.totalorder %v3281, 3
  %vm3303 = vcmp.lt.s32.totalorder %v3281, 4
  %v3304 = vsel %vm3300, %v3284, %v3287
  %v3305 = vsel %vm3303, %v3293, 2102212464
  %v3306 = vsel %vm3302, %v3290, %v3305
  %v3307 = vsel %vm3301, %v3304, %v3306
  %v3308 = vsel %vm3300, %v3287, %v3290
  %v3309 = vsel %vm3303, %v3296, 920167782
  %v3310 = vsel %vm3302, %v3293, %v3309
  %v3311 = vsel %vm3301, %v3308, %v3310
  %v3312 = vsel %vm3300, %v3290, %v3293
  %v3313 = vsel %vm3303, %v3299, 1326507024
  %v3314 = vsel %vm3302, %v3296, %v3313
  %v3315 = vsel %vm3301, %v3312, %v3314
  %v3316 = vshll.u32 %v3276, 8
  %v3317 = vand.u32 %v3316, 65535
  %v3318 = vshrl.u32 %v3316, 16
  %v3319 = vand.u32 %v3315, 65535
  %v3320 = vshrl.u32 %v3315, 16
  %v3321 = vmul.u32 %v3317, %v3319
  %v3322 = vmul.u32 %v3317, %v3320
  %v3323 = vmul.u32 %v3318, %v3319
  %v3324 = vmul.u32 %v3318, %v3320
  %v3325 = vshll.u32 %v3322, 16
  %v3326 = vshrl.u32 %v3322, 16
  %v3327 = vshll.u32 %v3323, 16
  %v3328 = vshrl.u32 %v3323, 16
  %vm3329 = vc.u32 %v3321, %v3325
  %v3330 = vsel %vm3329, 1, 0
  %v3331 = vadd.s32 %v3321, %v3325
  %v3332 = vadd.s32 %v3324, %v3330
  %vm3333 = vc.u32 %v3331, %v3327
  %v3334 = vsel %vm3333, 1, 0
  %v3335 = vadd.s32 %v3331, %v3327
  %v3336 = vadd.s32 %v3332, %v3334
  %v3337 = vadd.s32 %v3336, %v3326
  %v3338 = vadd.s32 %v3337, %v3328
  %v3339 = vand.u32 %v3316, 65535
  %v3340 = vshrl.u32 %v3316, 16
  %v3341 = vand.u32 %v3311, 65535
  %v3342 = vshrl.u32 %v3311, 16
  %v3343 = vmul.u32 %v3339, %v3341
  %v3344 = vmul.u32 %v3339, %v3342
  %v3345 = vmul.u32 %v3340, %v3341
  %v3346 = vmul.u32 %v3340, %v3342
  %v3347 = vshll.u32 %v3344, 16
  %v3348 = vshrl.u32 %v3344, 16
  %v3349 = vshll.u32 %v3345, 16
  %v3350 = vshrl.u32 %v3345, 16
  %vm3351 = vc.u32 %v3343, %v3347
  %v3352 = vsel %vm3351, 1, 0
  %v3353 = vadd.s32 %v3343, %v3347
  %v3354 = vadd.s32 %v3346, %v3352
  %vm3355 = vc.u32 %v3353, %v3349
  %v3356 = vsel %vm3355, 1, 0
  %v3357 = vadd.s32 %v3353, %v3349
  %v3358 = vadd.s32 %v3354, %v3356
  %v3359 = vadd.s32 %v3358, %v3348
  %v3360 = vadd.s32 %v3359, %v3350
  %v3361 = vmul.u32 %v3316, %v3307
  %v3362 = vadd.s32 %v3338, %v3357
  %vm3363 = vc.u32 %v3338, %v3357
  %v3364 = vadd.s32 %v3360, 1
  %v3365 = vsel %vm3363, %v3364, %v3360
  %v3366 = vadd.s32 %v3361, %v3365
  %v3367 = vadd.s32 %v3366, 536870912
  %v3368 = vshrl.u32 %v3367, 30
  %v3369 = vshll.u32 %v3368, 30
  %v3370 = vsub.s32 %v3366, %v3369
  %vm3371 = vcmp.lt.s32.totalorder %v3370, 0
  %v3372 = vsub.s32 0, %v3370
  %v3373 = vsel %vm3371, %v3372, %v3370
  %v3374 = vclz %v3373
  %v3375 = vsub.s32 %v3374, 2
  %vm3376 = vcmp.gt.s32.totalorder 0, %v3375
  %v3377 = vsel %vm3376, 0, %v3375
  %v3378 = vsub.s32 32, %v3377
  %v3379 = vshll.u32 %v3370, %v3377
  %v3380 = vshrl.u32 %v3362, %v3378
  %v3381 = vor.u32 %v3379, %v3380
  %v3382 = vsub.s32 4294967266, %v3377
  %v3383 = vadd.s32 %v3382, 127
  %v3384 = vshll.u32 %v3383, 23
  %v3385 = vor.u32 4788187, %v3384
  %v3386 = vand.u32 2147483647, %v3385
  %v3388 = vcvt.s32.f32 %v3381
  %v3389 = vmul.f32 %v3388, %v3386
  %v3390 = vxor.u32 %v3389, 2147483648
  %v3391 = vsel %vm3270, %v3390, %v3389
  %v3392 = vsub.s32 4, %v3368
  %v3393 = vsel %vm3270, %v3392, %v3368
  %v3394 = vsel %vm3269, %v310, %v3391
  %v3395 = vsel %vm3269, 0, %v3393
  %v3396 = vmul.f32 %v3394, %v3394
  %v3397 = vmul.f32 %v3396, -0.001358992
  %v3398 = vadd.f32 %v3397, 0.041655596
  %v3399 = vmul.f32 %v3396, %v3398
  %v3400 = vadd.f32 %v3399, -0.4999988
  %v3401 = vmul.f32 %v3396, %v3400
  %v3402 = vadd.f32 1.0, %v3401
  %v3403 = vmul.f32 %v3394, %v3394
  %v3404 = vmul.f32 %v3403, -0.00019511016
  %v3405 = vadd.f32 %v3404, 0.008332121
  %v3406 = vmul.f32 %v3403, %v3405
  %v3407 = vadd.f32 %v3406, -0.16666654
  %v3408 = vmul.f32 %v3403, %v3407
  %v3409 = vadd.f32 %v3408, 1.0
  %v3410 = vmul.f32 %v3409, %v3394
  %vm3411 = vweird.f32 %v310
  %v3412 = vadd.s32 %v3395, 3
  %v3413 = vand.u32 %v3412, 3
  %vm3414 = vcmp.lt.s32.totalorder %v3413, 2
  %vm3415 = vcmp.eq.s32.totalorder %v3413, 0
  %v3416 = vxor.u32 %v3410, 2147483648
  %v3417 = vsel %vm3415, %v3402, %v3416
  %vm3418 = vcmp.eq.s32.totalorder %v3413, 2
  %v3419 = vxor.u32 %v3402, 2147483648
  %v3420 = vsel %vm3418, %v3419, %v3410
  %v3421 = vsel %vm3414, %v3417, %v3420
  %v3422 = vsel %vm3411, nan, %v3421
  %v3423 = vand.u32 2147483647, %v311
  %vm3424 = vcmp.le.f32.partialorder %v3423, 0.7853982
  %vm3425 = vcmp.lt.s32.totalorder %v311, 0
  %v3426 = vand.u32 %v311, 2139095040
  %v3427 = vshrl.u32 %v3426, 23
  %v3428 = vsub.s32 %v3427, 127
  %v3429 = vand.u32 2147483647, %v311
  %v3430 = vand.u32 %v3429, 8388607
  %v3431 = vor.u32 %v3430, 8388608
  %v3432 = vsub.s32 0, %v3431
  %v3433 = vadd.s32 %v3428, 1
  %vm3434 = vcmp.gt.s32.totalorder %v3433, 0
  %v3435 = vsel %vm3434, %v3433, 0
  %v3436 = vshrl.u32 %v3435, 5
  %v3437 = vand.u32 %v3435, 31
  %v3438 = vsub.s32 32, %v3437
  %v3439 = vshrl.u32 683565275, %v3438
  %v3440 = vshll.u32 683565275, %v3437
  %v3441 = vshrl.u32 2475754826, %v3438
  %v3442 = vor.u32 %v3440, %v3441
  %v3443 = vshll.u32 2475754826, %v3437
  %v3444 = vshrl.u32 2131351028, %v3438
  %v3445 = vor.u32 %v3443, %v3444
  %v3446 = vshll.u32 2131351028, %v3437
  %v3447 = vshrl.u32 2102212464, %v3438
  %v3448 = vor.u32 %v3446, %v3447
  %v3449 = vshll.u32 2102212464, %v3437
  %v3450 = vshrl.u32 920167782, %v3438
  %v3451 = vor.u32 %v3449, %v3450
  %v3452 = vshll.u32 920167782, %v3437
  %v3453 = vshrl.u32 1326507024, %v3438
  %v3454 = vor.u32 %v3452, %v3453
  %vm3455 = vcmp.lt.s32.totalorder %v3436, 1
  %vm3456 = vcmp.lt.s32.totalorder %v3436, 2
  %vm3457 = vcmp.lt.s32.totalorder %v3436, 3
  %vm3458 = vcmp.lt.s32.totalorder %v3436, 4
  %v3459 = vsel %vm3455, %v3439, %v3442
  %v3460 = vsel %vm3458, %v3448, 2102212464
  %v3461 = vsel %vm3457, %v3445, %v3460
  %v3462 = vsel %vm3456, %v3459, %v3461
  %v3463 = vsel %vm3455, %v3442, %v3445
  %v3464 = vsel %vm3458, %v3451, 920167782
  %v3465 = vsel %vm3457, %v3448, %v3464
  %v3466 = vsel %vm3456, %v3463, %v3465
  %v3467 = vsel %vm3455, %v3445, %v3448
  %v3468 = vsel %vm3458, %v3454, 1326507024
  %v3469 = vsel %vm3457, %v3451, %v3468
  %v3470 = vsel %vm3456, %v3467, %v3469
  %v3471 = vshll.u32 %v3431, 8
  %v3472 = vand.u32 %v3471, 65535
  %v3473 = vshrl.u32 %v3471, 16
  %v3474 = vand.u32 %v3470, 65535
  %v3475 = vshrl.u32 %v3470, 16
  %v3476 = vmul.u32 %v3472, %v3474
  %v3477 = vmul.u32 %v3472, %v3475
  %v3478 = vmul.u32 %v3473, %v3474
  %v3479 = vmul.u32 %v3473, %v3475
  %v3480 = vshll.u32 %v3477, 16
  %v3481 = vshrl.u32 %v3477, 16
  %v3482 = vshll.u32 %v3478, 16
  %v3483 = vshrl.u32 %v3478, 16
  %vm3484 = vc.u32 %v3476, %v3480
  %v3485 = vsel %vm3484, 1, 0
  %v3486 = vadd.s32 %v3476, %v3480
  %v3487 = vadd.s32 %v3479, %v3485
  %vm3488 = vc.u32 %v3486, %v3482
  %v3489 = vsel %vm3488, 1, 0
  %v3490 = vadd.s32 %v3486, %v3482
  %v3491 = vadd.s32 %v3487, %v3489
  %v3492 = vadd.s32 %v3491, %v3481
  %v3493 = vadd.s32 %v3492, %v3483
  %v3494 = vand.u32 %v3471, 65535
  %v3495 = vshrl.u32 %v3471, 16
  %v3496 = vand.u32 %v3466, 65535
  %v3497 = vshrl.u32 %v3466, 16
  %v3498 = vmul.u32 %v3494, %v3496
  %v3499 = vmul.u32 %v3494, %v3497
  %v3500 = vmul.u32 %v3495, %v3496
  %v3501 = vmul.u32 %v3495, %v3497
  %v3502 = vshll.u32 %v3499, 16
  %v3503 = vshrl.u32 %v3499, 16
  %v3504 = vshll.u32 %v3500, 16
  %v3505 = vshrl.u32 %v3500, 16
  %vm3506 = vc.u32 %v3498, %v3502
  %v3507 = vsel %vm3506, 1, 0
  %v3508 = vadd.s32 %v3498, %v3502
  %v3509 = vadd.s32 %v3501, %v3507
  %vm3510 = vc.u32 %v3508, %v3504
  %v3511 = vsel %vm3510, 1, 0
  %v3512 = vadd.s32 %v3508, %v3504
  %v3513 = vadd.s32 %v3509, %v3511
  %v3514 = vadd.s32 %v3513, %v3503
  %v3515 = vadd.s32 %v3514, %v3505
  %v3516 = vmul.u32 %v3471, %v3462
  %v3517 = vadd.s32 %v3493, %v3512
  %vm3518 = vc.u32 %v3493, %v3512
  %v3519 = vadd.s32 %v3515, 1
  %v3520 = vsel %vm3518, %v3519, %v3515
  %v3521 = vadd.s32 %v3516, %v3520
  %v3522 = vadd.s32 %v3521, 536870912
  %v3523 = vshrl.u32 %v3522, 30
  %v3524 = vshll.u32 %v3523, 30
  %v3525 = vsub.s32 %v3521, %v3524
  %vm3526 = vcmp.lt.s32.totalorder %v3525, 0
  %v3527 = vsub.s32 0, %v3525
  %v3528 = vsel %vm3526, %v3527, %v3525
  %v3529 = vclz %v3528
  %v3530 = vsub.s32 %v3529, 2
  %vm3531 = vcmp.gt.s32.totalorder 0, %v3530
  %v3532 = vsel %vm3531, 0, %v3530
  %v3533 = vsub.s32 32, %v3532
  %v3534 = vshll.u32 %v3525, %v3532
  %v3535 = vshrl.u32 %v3517, %v3533
  %v3536 = vor.u32 %v3534, %v3535
  %v3537 = vsub.s32 4294967266, %v3532
  %v3538 = vadd.s32 %v3537, 127
  %v3539 = vshll.u32 %v3538, 23
  %v3540 = vor.u32 4788187, %v3539
  %v3541 = vand.u32 2147483647, %v3540
  %v3543 = vcvt.s32.f32 %v3536
  %v3544 = vmul.f32 %v3543, %v3541
  %v3545 = vxor.u32 %v3544, 2147483648
  %v3546 = vsel %vm3425, %v3545, %v3544
  %v3547 = vsub.s32 4, %v3523
  %v3548 = vsel %vm3425, %v3547, %v3523
  %v3549 = vsel %vm3424, %v311, %v3546
  %v3550 = vsel %vm3424, 0, %v3548
  %v3551 = vmul.f32 %v3549, %v3549
  %v3552 = vmul.f32 %v3551, -0.001358992
  %v3553 = vadd.f32 %v3552, 0.041655596
  %v3554 = vmul.f32 %v3551, %v3553
  %v3555 = vadd.f32 %v3554, -0.4999988
  %v3556 = vmul.f32 %v3551, %v3555
  %v3557 = vadd.f32 1.0, %v3556
  %v3558 = vmul.f32 %v3549, %v3549
  %v3559 = vmul.f32 %v3558, -0.00019511016
  %v3560 = vadd.f32 %v3559, 0.008332121
  %v3561 = vmul.f32 %v3558, %v3560
  %v3562 = vadd.f32 %v3561, -0.16666654
  %v3563 = vmul.f32 %v3558, %v3562
  %v3564 = vadd.f32 %v3563, 1.0
  %v3565 = vmul.f32 %v3564, %v3549
  %vm3566 = vweird.f32 %v311
  %v3567 = vadd.s32 %v3550, 3
  %v3568 = vand.u32 %v3567, 3
  %vm3569 = vcmp.lt.s32.totalorder %v3568, 2
  %vm3570 = vcmp.eq.s32.totalorder %v3568, 0
  %v3571 = vxor.u32 %v3565, 2147483648
  %v3572 = vsel %vm3570, %v3557, %v3571
  %vm3573 = vcmp.eq.s32.totalorder %v3568, 2
  %v3574 = vxor.u32 %v3557, 2147483648
  %v3575 = vsel %vm3573, %v3574, %v3565
  %v3576 = vsel %vm3569, %v3572, %v3575
  %v3577 = vsel %vm3566, nan, %v3576
  %v3578 = vand.u32 2147483647, %v312
  %vm3579 = vcmp.le.f32.partialorder %v3578, 0.7853982
  %vm3580 = vcmp.lt.s32.totalorder %v312, 0
  %v3581 = vand.u32 %v312, 2139095040
  %v3582 = vshrl.u32 %v3581, 23
  %v3583 = vsub.s32 %v3582, 127
  %v3584 = vand.u32 2147483647, %v312
  %v3585 = vand.u32 %v3584, 8388607
  %v3586 = vor.u32 %v3585, 8388608
  %v3587 = vsub.s32 0, %v3586
  %v3588 = vadd.s32 %v3583, 1
  %vm3589 = vcmp.gt.s32.totalorder %v3588, 0
  %v3590 = vsel %vm3589, %v3588, 0
  %v3591 = vshrl.u32 %v3590, 5
  %v3592 = vand.u32 %v3590, 31
  %v3593 = vsub.s32 32, %v3592
  %v3594 = vshrl.u32 683565275, %v3593
  %v3595 = vshll.u32 683565275, %v3592
  %v3596 = vshrl.u32 2475754826, %v3593
  %v3597 = vor.u32 %v3595, %v3596
  %v3598 = vshll.u32 2475754826, %v3592
  %v3599 = vshrl.u32 2131351028, %v3593
  %v3600 = vor.u32 %v3598, %v3599
  %v3601 = vshll.u32 2131351028, %v3592
  %v3602 = vshrl.u32 2102212464, %v3593
  %v3603 = vor.u32 %v3601, %v3602
  %v3604 = vshll.u32 2102212464, %v3592
  %v3605 = vshrl.u32 920167782, %v3593
  %v3606 = vor.u32 %v3604, %v3605
  %v3607 = vshll.u32 920167782, %v3592
  %v3608 = vshrl.u32 1326507024, %v3593
  %v3609 = vor.u32 %v3607, %v3608
  %vm3610 = vcmp.lt.s32.totalorder %v3591, 1
  %vm3611 = vcmp.lt.s32.totalorder %v3591, 2
  %vm3612 = vcmp.lt.s32.totalorder %v3591, 3
  %vm3613 = vcmp.lt.s32.totalorder %v3591, 4
  %v3614 = vsel %vm3610, %v3594, %v3597
  %v3615 = vsel %vm3613, %v3603, 2102212464
  %v3616 = vsel %vm3612, %v3600, %v3615
  %v3617 = vsel %vm3611, %v3614, %v3616
  %v3618 = vsel %vm3610, %v3597, %v3600
  %v3619 = vsel %vm3613, %v3606, 920167782
  %v3620 = vsel %vm3612, %v3603, %v3619
  %v3621 = vsel %vm3611, %v3618, %v3620
  %v3622 = vsel %vm3610, %v3600, %v3603
  %v3623 = vsel %vm3613, %v3609, 1326507024
  %v3624 = vsel %vm3612, %v3606, %v3623
  %v3625 = vsel %vm3611, %v3622, %v3624
  %v3626 = vshll.u32 %v3586, 8
  %v3627 = vand.u32 %v3626, 65535
  %v3628 = vshrl.u32 %v3626, 16
  %v3629 = vand.u32 %v3625, 65535
  %v3630 = vshrl.u32 %v3625, 16
  %v3631 = vmul.u32 %v3627, %v3629
  %v3632 = vmul.u32 %v3627, %v3630
  %v3633 = vmul.u32 %v3628, %v3629
  %v3634 = vmul.u32 %v3628, %v3630
  %v3635 = vshll.u32 %v3632, 16
  %v3636 = vshrl.u32 %v3632, 16
  %v3637 = vshll.u32 %v3633, 16
  %v3638 = vshrl.u32 %v3633, 16
  %vm3639 = vc.u32 %v3631, %v3635
  %v3640 = vsel %vm3639, 1, 0
  %v3641 = vadd.s32 %v3631, %v3635
  %v3642 = vadd.s32 %v3634, %v3640
  %vm3643 = vc.u32 %v3641, %v3637
  %v3644 = vsel %vm3643, 1, 0
  %v3645 = vadd.s32 %v3641, %v3637
  %v3646 = vadd.s32 %v3642, %v3644
  %v3647 = vadd.s32 %v3646, %v3636
  %v3648 = vadd.s32 %v3647, %v3638
  %v3649 = vand.u32 %v3626, 65535
  %v3650 = vshrl.u32 %v3626, 16
  %v3651 = vand.u32 %v3621, 65535
  %v3652 = vshrl.u32 %v3621, 16
  %v3653 = vmul.u32 %v3649, %v3651
  %v3654 = vmul.u32 %v3649, %v3652
  %v3655 = vmul.u32 %v3650, %v3651
  %v3656 = vmul.u32 %v3650, %v3652
  %v3657 = vshll.u32 %v3654, 16
  %v3658 = vshrl.u32 %v3654, 16
  %v3659 = vshll.u32 %v3655, 16
  %v3660 = vshrl.u32 %v3655, 16
  %vm3661 = vc.u32 %v3653, %v3657
  %v3662 = vsel %vm3661, 1, 0
  %v3663 = vadd.s32 %v3653, %v3657
  %v3664 = vadd.s32 %v3656, %v3662
  %vm3665 = vc.u32 %v3663, %v3659
  %v3666 = vsel %vm3665, 1, 0
  %v3667 = vadd.s32 %v3663, %v3659
  %v3668 = vadd.s32 %v3664, %v3666
  %v3669 = vadd.s32 %v3668, %v3658
  %v3670 = vadd.s32 %v3669, %v3660
  %v3671 = vmul.u32 %v3626, %v3617
  %v3672 = vadd.s32 %v3648, %v3667
  %vm3673 = vc.u32 %v3648, %v3667
  %v3674 = vadd.s32 %v3670, 1
  %v3675 = vsel %vm3673, %v3674, %v3670
  %v3676 = vadd.s32 %v3671, %v3675
  %v3677 = vadd.s32 %v3676, 536870912
  %v3678 = vshrl.u32 %v3677, 30
  %v3679 = vshll.u32 %v3678, 30
  %v3680 = vsub.s32 %v3676, %v3679
  %vm3681 = vcmp.lt.s32.totalorder %v3680, 0
  %v3682 = vsub.s32 0, %v3680
  %v3683 = vsel %vm3681, %v3682, %v3680
  %v3684 = vclz %v3683
  %v3685 = vsub.s32 %v3684, 2
  %vm3686 = vcmp.gt.s32.totalorder 0, %v3685
  %v3687 = vsel %vm3686, 0, %v3685
  %v3688 = vsub.s32 32, %v3687
  %v3689 = vshll.u32 %v3680, %v3687
  %v3690 = vshrl.u32 %v3672, %v3688
  %v3691 = vor.u32 %v3689, %v3690
  %v3692 = vsub.s32 4294967266, %v3687
  %v3693 = vadd.s32 %v3692, 127
  %v3694 = vshll.u32 %v3693, 23
  %v3695 = vor.u32 4788187, %v3694
  %v3696 = vand.u32 2147483647, %v3695
  %v3698 = vcvt.s32.f32 %v3691
  %v3699 = vmul.f32 %v3698, %v3696
  %v3700 = vxor.u32 %v3699, 2147483648
  %v3701 = vsel %vm3580, %v3700, %v3699
  %v3702 = vsub.s32 4, %v3678
  %v3703 = vsel %vm3580, %v3702, %v3678
  %v3704 = vsel %vm3579, %v312, %v3701
  %v3705 = vsel %vm3579, 0, %v3703
  %v3706 = vmul.f32 %v3704, %v3704
  %v3707 = vmul.f32 %v3706, -0.001358992
  %v3708 = vadd.f32 %v3707, 0.041655596
  %v3709 = vmul.f32 %v3706, %v3708
  %v3710 = vadd.f32 %v3709, -0.4999988
  %v3711 = vmul.f32 %v3706, %v3710
  %v3712 = vadd.f32 1.0, %v3711
  %v3713 = vmul.f32 %v3704, %v3704
  %v3714 = vmul.f32 %v3713, -0.00019511016
  %v3715 = vadd.f32 %v3714, 0.008332121
  %v3716 = vmul.f32 %v3713, %v3715
  %v3717 = vadd.f32 %v3716, -0.16666654
  %v3718 = vmul.f32 %v3713, %v3717
  %v3719 = vadd.f32 %v3718, 1.0
  %v3720 = vmul.f32 %v3719, %v3704
  %vm3721 = vweird.f32 %v312
  %v3722 = vadd.s32 %v3705, 3
  %v3723 = vand.u32 %v3722, 3
  %vm3724 = vcmp.lt.s32.totalorder %v3723, 2
  %vm3725 = vcmp.eq.s32.totalorder %v3723, 0
  %v3726 = vxor.u32 %v3720, 2147483648
  %v3727 = vsel %vm3725, %v3712, %v3726
  %vm3728 = vcmp.eq.s32.totalorder %v3723, 2
  %v3729 = vxor.u32 %v3712, 2147483648
  %v3730 = vsel %vm3728, %v3729, %v3720
  %v3731 = vsel %vm3724, %v3727, %v3730
  %v3732 = vsel %vm3721, nan, %v3731
  %v3733 = vand.u32 2147483647, %v313
  %vm3734 = vcmp.le.f32.partialorder %v3733, 0.7853982
  %vm3735 = vcmp.lt.s32.totalorder %v313, 0
  %v3736 = vand.u32 %v313, 2139095040
  %v3737 = vshrl.u32 %v3736, 23
  %v3738 = vsub.s32 %v3737, 127
  %v3739 = vand.u32 2147483647, %v313
  %v3740 = vand.u32 %v3739, 8388607
  %v3741 = vor.u32 %v3740, 8388608
  %v3742 = vsub.s32 0, %v3741
  %v3743 = vadd.s32 %v3738, 1
  %vm3744 = vcmp.gt.s32.totalorder %v3743, 0
  %v3745 = vsel %vm3744, %v3743, 0
  %v3746 = vshrl.u32 %v3745, 5
  %v3747 = vand.u32 %v3745, 31
  %v3748 = vsub.s32 32, %v3747
  %v3749 = vshrl.u32 683565275, %v3748
  %v3750 = vshll.u32 683565275, %v3747
  %v3751 = vshrl.u32 2475754826, %v3748
  %v3752 = vor.u32 %v3750, %v3751
  %v3753 = vshll.u32 2475754826, %v3747
  %v3754 = vshrl.u32 2131351028, %v3748
  %v3755 = vor.u32 %v3753, %v3754
  %v3756 = vshll.u32 2131351028, %v3747
  %v3757 = vshrl.u32 2102212464, %v3748
  %v3758 = vor.u32 %v3756, %v3757
  %v3759 = vshll.u32 2102212464, %v3747
  %v3760 = vshrl.u32 920167782, %v3748
  %v3761 = vor.u32 %v3759, %v3760
  %v3762 = vshll.u32 920167782, %v3747
  %v3763 = vshrl.u32 1326507024, %v3748
  %v3764 = vor.u32 %v3762, %v3763
  %vm3765 = vcmp.lt.s32.totalorder %v3746, 1
  %vm3766 = vcmp.lt.s32.totalorder %v3746, 2
  %vm3767 = vcmp.lt.s32.totalorder %v3746, 3
  %vm3768 = vcmp.lt.s32.totalorder %v3746, 4
  %v3769 = vsel %vm3765, %v3749, %v3752
  %v3770 = vsel %vm3768, %v3758, 2102212464
  %v3771 = vsel %vm3767, %v3755, %v3770
  %v3772 = vsel %vm3766, %v3769, %v3771
  %v3773 = vsel %vm3765, %v3752, %v3755
  %v3774 = vsel %vm3768, %v3761, 920167782
  %v3775 = vsel %vm3767, %v3758, %v3774
  %v3776 = vsel %vm3766, %v3773, %v3775
  %v3777 = vsel %vm3765, %v3755, %v3758
  %v3778 = vsel %vm3768, %v3764, 1326507024
  %v3779 = vsel %vm3767, %v3761, %v3778
  %v3780 = vsel %vm3766, %v3777, %v3779
  %v3781 = vshll.u32 %v3741, 8
  %v3782 = vand.u32 %v3781, 65535
  %v3783 = vshrl.u32 %v3781, 16
  %v3784 = vand.u32 %v3780, 65535
  %v3785 = vshrl.u32 %v3780, 16
  %v3786 = vmul.u32 %v3782, %v3784
  %v3787 = vmul.u32 %v3782, %v3785
  %v3788 = vmul.u32 %v3783, %v3784
  %v3789 = vmul.u32 %v3783, %v3785
  %v3790 = vshll.u32 %v3787, 16
  %v3791 = vshrl.u32 %v3787, 16
  %v3792 = vshll.u32 %v3788, 16
  %v3793 = vshrl.u32 %v3788, 16
  %vm3794 = vc.u32 %v3786, %v3790
  %v3795 = vsel %vm3794, 1, 0
  %v3796 = vadd.s32 %v3786, %v3790
  %v3797 = vadd.s32 %v3789, %v3795
  %vm3798 = vc.u32 %v3796, %v3792
  %v3799 = vsel %vm3798, 1, 0
  %v3800 = vadd.s32 %v3796, %v3792
  %v3801 = vadd.s32 %v3797, %v3799
  %v3802 = vadd.s32 %v3801, %v3791
  %v3803 = vadd.s32 %v3802, %v3793
  %v3804 = vand.u32 %v3781, 65535
  %v3805 = vshrl.u32 %v3781, 16
  %v3806 = vand.u32 %v3776, 65535
  %v3807 = vshrl.u32 %v3776, 16
  %v3808 = vmul.u32 %v3804, %v3806
  %v3809 = vmul.u32 %v3804, %v3807
  %v3810 = vmul.u32 %v3805, %v3806
  %v3811 = vmul.u32 %v3805, %v3807
  %v3812 = vshll.u32 %v3809, 16
  %v3813 = vshrl.u32 %v3809, 16
  %v3814 = vshll.u32 %v3810, 16
  %v3815 = vshrl.u32 %v3810, 16
  %vm3816 = vc.u32 %v3808, %v3812
  %v3817 = vsel %vm3816, 1, 0
  %v3818 = vadd.s32 %v3808, %v3812
  %v3819 = vadd.s32 %v3811, %v3817
  %vm3820 = vc.u32 %v3818, %v3814
  %v3821 = vsel %vm3820, 1, 0
  %v3822 = vadd.s32 %v3818, %v3814
  %v3823 = vadd.s32 %v3819, %v3821
  %v3824 = vadd.s32 %v3823, %v3813
  %v3825 = vadd.s32 %v3824, %v3815
  %v3826 = vmul.u32 %v3781, %v3772
  %v3827 = vadd.s32 %v3803, %v3822
  %vm3828 = vc.u32 %v3803, %v3822
  %v3829 = vadd.s32 %v3825, 1
  %v3830 = vsel %vm3828, %v3829, %v3825
  %v3831 = vadd.s32 %v3826, %v3830
  %v3832 = vadd.s32 %v3831, 536870912
  %v3833 = vshrl.u32 %v3832, 30
  %v3834 = vshll.u32 %v3833, 30
  %v3835 = vsub.s32 %v3831, %v3834
  %vm3836 = vcmp.lt.s32.totalorder %v3835, 0
  %v3837 = vsub.s32 0, %v3835
  %v3838 = vsel %vm3836, %v3837, %v3835
  %v3839 = vclz %v3838
  %v3840 = vsub.s32 %v3839, 2
  %vm3841 = vcmp.gt.s32.totalorder 0, %v3840
  %v3842 = vsel %vm3841, 0, %v3840
  %v3843 = vsub.s32 32, %v3842
  %v3844 = vshll.u32 %v3835, %v3842
  %v3845 = vshrl.u32 %v3827, %v3843
  %v3846 = vor.u32 %v3844, %v3845
  %v3847 = vsub.s32 4294967266, %v3842
  %v3848 = vadd.s32 %v3847, 127
  %v3849 = vshll.u32 %v3848, 23
  %v3850 = vor.u32 4788187, %v3849
  %v3851 = vand.u32 2147483647, %v3850
  %v3853 = vcvt.s32.f32 %v3846
  %v3854 = vmul.f32 %v3853, %v3851
  %v3855 = vxor.u32 %v3854, 2147483648
  %v3856 = vsel %vm3735, %v3855, %v3854
  %v3857 = vsub.s32 4, %v3833
  %v3858 = vsel %vm3735, %v3857, %v3833
  %v3859 = vsel %vm3734, %v313, %v3856
  %v3860 = vsel %vm3734, 0, %v3858
  %v3861 = vmul.f32 %v3859, %v3859
  %v3862 = vmul.f32 %v3861, -0.001358992
  %v3863 = vadd.f32 %v3862, 0.041655596
  %v3864 = vmul.f32 %v3861, %v3863
  %v3865 = vadd.f32 %v3864, -0.4999988
  %v3866 = vmul.f32 %v3861, %v3865
  %v3867 = vadd.f32 1.0, %v3866
  %v3868 = vmul.f32 %v3859, %v3859
  %v3869 = vmul.f32 %v3868, -0.00019511016
  %v3870 = vadd.f32 %v3869, 0.008332121
  %v3871 = vmul.f32 %v3868, %v3870
  %v3872 = vadd.f32 %v3871, -0.16666654
  %v3873 = vmul.f32 %v3868, %v3872
  %v3874 = vadd.f32 %v3873, 1.0
  %v3875 = vmul.f32 %v3874, %v3859
  %vm3876 = vweird.f32 %v313
  %v3877 = vadd.s32 %v3860, 3
  %v3878 = vand.u32 %v3877, 3
  %vm3879 = vcmp.lt.s32.totalorder %v3878, 2
  %vm3880 = vcmp.eq.s32.totalorder %v3878, 0
  %v3881 = vxor.u32 %v3875, 2147483648
  %v3882 = vsel %vm3880, %v3867, %v3881
  %vm3883 = vcmp.eq.s32.totalorder %v3878, 2
  %v3884 = vxor.u32 %v3867, 2147483648
  %v3885 = vsel %vm3883, %v3884, %v3875
  %v3886 = vsel %vm3879, %v3882, %v3885
  %v3887 = vsel %vm3876, nan, %v3886
  %v3888 = vand.u32 2147483647, %v314
  %vm3889 = vcmp.le.f32.partialorder %v3888, 0.7853982
  %vm3890 = vcmp.lt.s32.totalorder %v314, 0
  %v3891 = vand.u32 %v314, 2139095040
  %v3892 = vshrl.u32 %v3891, 23
  %v3893 = vsub.s32 %v3892, 127
  %v3894 = vand.u32 2147483647, %v314
  %v3895 = vand.u32 %v3894, 8388607
  %v3896 = vor.u32 %v3895, 8388608
  %v3897 = vsub.s32 0, %v3896
  %v3898 = vadd.s32 %v3893, 1
  %vm3899 = vcmp.gt.s32.totalorder %v3898, 0
  %v3900 = vsel %vm3899, %v3898, 0
  %v3901 = vshrl.u32 %v3900, 5
  %v3902 = vand.u32 %v3900, 31
  %v3903 = vsub.s32 32, %v3902
  %v3904 = vshrl.u32 683565275, %v3903
  %v3905 = vshll.u32 683565275, %v3902
  %v3906 = vshrl.u32 2475754826, %v3903
  %v3907 = vor.u32 %v3905, %v3906
  %v3908 = vshll.u32 2475754826, %v3902
  %v3909 = vshrl.u32 2131351028, %v3903
  %v3910 = vor.u32 %v3908, %v3909
  %v3911 = vshll.u32 2131351028, %v3902
  %v3912 = vshrl.u32 2102212464, %v3903
  %v3913 = vor.u32 %v3911, %v3912
  %v3914 = vshll.u32 2102212464, %v3902
  %v3915 = vshrl.u32 920167782, %v3903
  %v3916 = vor.u32 %v3914, %v3915
  %v3917 = vshll.u32 920167782, %v3902
  %v3918 = vshrl.u32 1326507024, %v3903
  %v3919 = vor.u32 %v3917, %v3918
  %vm3920 = vcmp.lt.s32.totalorder %v3901, 1
  %vm3921 = vcmp.lt.s32.totalorder %v3901, 2
  %vm3922 = vcmp.lt.s32.totalorder %v3901, 3
  %vm3923 = vcmp.lt.s32.totalorder %v3901, 4
  %v3924 = vsel %vm3920, %v3904, %v3907
  %v3925 = vsel %vm3923, %v3913, 2102212464
  %v3926 = vsel %vm3922, %v3910, %v3925
  %v3927 = vsel %vm3921, %v3924, %v3926
  %v3928 = vsel %vm3920, %v3907, %v3910
  %v3929 = vsel %vm3923, %v3916, 920167782
  %v3930 = vsel %vm3922, %v3913, %v3929
  %v3931 = vsel %vm3921, %v3928, %v3930
  %v3932 = vsel %vm3920, %v3910, %v3913
  %v3933 = vsel %vm3923, %v3919, 1326507024
  %v3934 = vsel %vm3922, %v3916, %v3933
  %v3935 = vsel %vm3921, %v3932, %v3934
  %v3936 = vshll.u32 %v3896, 8
  %v3937 = vand.u32 %v3936, 65535
  %v3938 = vshrl.u32 %v3936, 16
  %v3939 = vand.u32 %v3935, 65535
  %v3940 = vshrl.u32 %v3935, 16
  %v3941 = vmul.u32 %v3937, %v3939
  %v3942 = vmul.u32 %v3937, %v3940
  %v3943 = vmul.u32 %v3938, %v3939
  %v3944 = vmul.u32 %v3938, %v3940
  %v3945 = vshll.u32 %v3942, 16
  %v3946 = vshrl.u32 %v3942, 16
  %v3947 = vshll.u32 %v3943, 16
  %v3948 = vshrl.u32 %v3943, 16
  %vm3949 = vc.u32 %v3941, %v3945
  %v3950 = vsel %vm3949, 1, 0
  %v3951 = vadd.s32 %v3941, %v3945
  %v3952 = vadd.s32 %v3944, %v3950
  %vm3953 = vc.u32 %v3951, %v3947
  %v3954 = vsel %vm3953, 1, 0
  %v3955 = vadd.s32 %v3951, %v3947
  %v3956 = vadd.s32 %v3952, %v3954
  %v3957 = vadd.s32 %v3956, %v3946
  %v3958 = vadd.s32 %v3957, %v3948
  %v3959 = vand.u32 %v3936, 65535
  %v3960 = vshrl.u32 %v3936, 16
  %v3961 = vand.u32 %v3931, 65535
  %v3962 = vshrl.u32 %v3931, 16
  %v3963 = vmul.u32 %v3959, %v3961
  %v3964 = vmul.u32 %v3959, %v3962
  %v3965 = vmul.u32 %v3960, %v3961
  %v3966 = vmul.u32 %v3960, %v3962
  %v3967 = vshll.u32 %v3964, 16
  %v3968 = vshrl.u32 %v3964, 16
  %v3969 = vshll.u32 %v3965, 16
  %v3970 = vshrl.u32 %v3965, 16
  %vm3971 = vc.u32 %v3963, %v3967
  %v3972 = vsel %vm3971, 1, 0
  %v3973 = vadd.s32 %v3963, %v3967
  %v3974 = vadd.s32 %v3966, %v3972
  %vm3975 = vc.u32 %v3973, %v3969
  %v3976 = vsel %vm3975, 1, 0
  %v3977 = vadd.s32 %v3973, %v3969
  %v3978 = vadd.s32 %v3974, %v3976
  %v3979 = vadd.s32 %v3978, %v3968
  %v3980 = vadd.s32 %v3979, %v3970
  %v3981 = vmul.u32 %v3936, %v3927
  %v3982 = vadd.s32 %v3958, %v3977
  %vm3983 = vc.u32 %v3958, %v3977
  %v3984 = vadd.s32 %v3980, 1
  %v3985 = vsel %vm3983, %v3984, %v3980
  %v3986 = vadd.s32 %v3981, %v3985
  %v3987 = vadd.s32 %v3986, 536870912
  %v3988 = vshrl.u32 %v3987, 30
  %v3989 = vshll.u32 %v3988, 30
  %v3990 = vsub.s32 %v3986, %v3989
  %vm3991 = vcmp.lt.s32.totalorder %v3990, 0
  %v3992 = vsub.s32 0, %v3990
  %v3993 = vsel %vm3991, %v3992, %v3990
  %v3994 = vclz %v3993
  %v3995 = vsub.s32 %v3994, 2
  %vm3996 = vcmp.gt.s32.totalorder 0, %v3995
  %v3997 = vsel %vm3996, 0, %v3995
  %v3998 = vsub.s32 32, %v3997
  %v3999 = vshll.u32 %v3990, %v3997
  %v4000 = vshrl.u32 %v3982, %v3998
  %v4001 = vor.u32 %v3999, %v4000
  %v4002 = vsub.s32 4294967266, %v3997
  %v4003 = vadd.s32 %v4002, 127
  %v4004 = vshll.u32 %v4003, 23
  %v4005 = vor.u32 4788187, %v4004
  %v4006 = vand.u32 2147483647, %v4005
  %v4008 = vcvt.s32.f32 %v4001
  %v4009 = vmul.f32 %v4008, %v4006
  %v4010 = vxor.u32 %v4009, 2147483648
  %v4011 = vsel %vm3890, %v4010, %v4009
  %v4012 = vsub.s32 4, %v3988
  %v4013 = vsel %vm3890, %v4012, %v3988
  %v4014 = vsel %vm3889, %v314, %v4011
  %v4015 = vsel %vm3889, 0, %v4013
  %v4016 = vmul.f32 %v4014, %v4014
  %v4017 = vmul.f32 %v4016, -0.001358992
  %v4018 = vadd.f32 %v4017, 0.041655596
  %v4019 = vmul.f32 %v4016, %v4018
  %v4020 = vadd.f32 %v4019, -0.4999988
  %v4021 = vmul.f32 %v4016, %v4020
  %v4022 = vadd.f32 1.0, %v4021
  %v4023 = vmul.f32 %v4014, %v4014
  %v4024 = vmul.f32 %v4023, -0.00019511016
  %v4025 = vadd.f32 %v4024, 0.008332121
  %v4026 = vmul.f32 %v4023, %v4025
  %v4027 = vadd.f32 %v4026, -0.16666654
  %v4028 = vmul.f32 %v4023, %v4027
  %v4029 = vadd.f32 %v4028, 1.0
  %v4030 = vmul.f32 %v4029, %v4014
  %vm4031 = vweird.f32 %v314
  %v4032 = vadd.s32 %v4015, 3
  %v4033 = vand.u32 %v4032, 3
  %vm4034 = vcmp.lt.s32.totalorder %v4033, 2
  %vm4035 = vcmp.eq.s32.totalorder %v4033, 0
  %v4036 = vxor.u32 %v4030, 2147483648
  %v4037 = vsel %vm4035, %v4022, %v4036
  %vm4038 = vcmp.eq.s32.totalorder %v4033, 2
  %v4039 = vxor.u32 %v4022, 2147483648
  %v4040 = vsel %vm4038, %v4039, %v4030
  %v4041 = vsel %vm4034, %v4037, %v4040
  %v4042 = vsel %vm4031, nan, %v4041
  %v4043 = vand.u32 2147483647, %v315
  %vm4044 = vcmp.le.f32.partialorder %v4043, 0.7853982
  %vm4045 = vcmp.lt.s32.totalorder %v315, 0
  %v4046 = vand.u32 %v315, 2139095040
  %v4047 = vshrl.u32 %v4046, 23
  %v4048 = vsub.s32 %v4047, 127
  %v4049 = vand.u32 2147483647, %v315
  %v4050 = vand.u32 %v4049, 8388607
  %v4051 = vor.u32 %v4050, 8388608
  %v4052 = vsub.s32 0, %v4051
  %v4053 = vadd.s32 %v4048, 1
  %vm4054 = vcmp.gt.s32.totalorder %v4053, 0
  %v4055 = vsel %vm4054, %v4053, 0
  %v4056 = vshrl.u32 %v4055, 5
  %v4057 = vand.u32 %v4055, 31
  %v4058 = vsub.s32 32, %v4057
  %v4059 = vshrl.u32 683565275, %v4058
  %v4060 = vshll.u32 683565275, %v4057
  %v4061 = vshrl.u32 2475754826, %v4058
  %v4062 = vor.u32 %v4060, %v4061
  %v4063 = vshll.u32 2475754826, %v4057
  %v4064 = vshrl.u32 2131351028, %v4058
  %v4065 = vor.u32 %v4063, %v4064
  %v4066 = vshll.u32 2131351028, %v4057
  %v4067 = vshrl.u32 2102212464, %v4058
  %v4068 = vor.u32 %v4066, %v4067
  %v4069 = vshll.u32 2102212464, %v4057
  %v4070 = vshrl.u32 920167782, %v4058
  %v4071 = vor.u32 %v4069, %v4070
  %v4072 = vshll.u32 920167782, %v4057
  %v4073 = vshrl.u32 1326507024, %v4058
  %v4074 = vor.u32 %v4072, %v4073
  %vm4075 = vcmp.lt.s32.totalorder %v4056, 1
  %vm4076 = vcmp.lt.s32.totalorder %v4056, 2
  %vm4077 = vcmp.lt.s32.totalorder %v4056, 3
  %vm4078 = vcmp.lt.s32.totalorder %v4056, 4
  %v4079 = vsel %vm4075, %v4059, %v4062
  %v4080 = vsel %vm4078, %v4068, 2102212464
  %v4081 = vsel %vm4077, %v4065, %v4080
  %v4082 = vsel %vm4076, %v4079, %v4081
  %v4083 = vsel %vm4075, %v4062, %v4065
  %v4084 = vsel %vm4078, %v4071, 920167782
  %v4085 = vsel %vm4077, %v4068, %v4084
  %v4086 = vsel %vm4076, %v4083, %v4085
  %v4087 = vsel %vm4075, %v4065, %v4068
  %v4088 = vsel %vm4078, %v4074, 1326507024
  %v4089 = vsel %vm4077, %v4071, %v4088
  %v4090 = vsel %vm4076, %v4087, %v4089
  %v4091 = vshll.u32 %v4051, 8
  %v4092 = vand.u32 %v4091, 65535
  %v4093 = vshrl.u32 %v4091, 16
  %v4094 = vand.u32 %v4090, 65535
  %v4095 = vshrl.u32 %v4090, 16
  %v4096 = vmul.u32 %v4092, %v4094
  %v4097 = vmul.u32 %v4092, %v4095
  %v4098 = vmul.u32 %v4093, %v4094
  %v4099 = vmul.u32 %v4093, %v4095
  %v4100 = vshll.u32 %v4097, 16
  %v4101 = vshrl.u32 %v4097, 16
  %v4102 = vshll.u32 %v4098, 16
  %v4103 = vshrl.u32 %v4098, 16
  %vm4104 = vc.u32 %v4096, %v4100
  %v4105 = vsel %vm4104, 1, 0
  %v4106 = vadd.s32 %v4096, %v4100
  %v4107 = vadd.s32 %v4099, %v4105
  %vm4108 = vc.u32 %v4106, %v4102
  %v4109 = vsel %vm4108, 1, 0
  %v4110 = vadd.s32 %v4106, %v4102
  %v4111 = vadd.s32 %v4107, %v4109
  %v4112 = vadd.s32 %v4111, %v4101
  %v4113 = vadd.s32 %v4112, %v4103
  %v4114 = vand.u32 %v4091, 65535
  %v4115 = vshrl.u32 %v4091, 16
  %v4116 = vand.u32 %v4086, 65535
  %v4117 = vshrl.u32 %v4086, 16
  %v4118 = vmul.u32 %v4114, %v4116
  %v4119 = vmul.u32 %v4114, %v4117
  %v4120 = vmul.u32 %v4115, %v4116
  %v4121 = vmul.u32 %v4115, %v4117
  %v4122 = vshll.u32 %v4119, 16
  %v4123 = vshrl.u32 %v4119, 16
  %v4124 = vshll.u32 %v4120, 16
  %v4125 = vshrl.u32 %v4120, 16
  %vm4126 = vc.u32 %v4118, %v4122
  %v4127 = vsel %vm4126, 1, 0
  %v4128 = vadd.s32 %v4118, %v4122
  %v4129 = vadd.s32 %v4121, %v4127
  %vm4130 = vc.u32 %v4128, %v4124
  %v4131 = vsel %vm4130, 1, 0
  %v4132 = vadd.s32 %v4128, %v4124
  %v4133 = vadd.s32 %v4129, %v4131
  %v4134 = vadd.s32 %v4133, %v4123
  %v4135 = vadd.s32 %v4134, %v4125
  %v4136 = vmul.u32 %v4091, %v4082
  %v4137 = vadd.s32 %v4113, %v4132
  %vm4138 = vc.u32 %v4113, %v4132
  %v4139 = vadd.s32 %v4135, 1
  %v4140 = vsel %vm4138, %v4139, %v4135
  %v4141 = vadd.s32 %v4136, %v4140
  %v4142 = vadd.s32 %v4141, 536870912
  %v4143 = vshrl.u32 %v4142, 30
  %v4144 = vshll.u32 %v4143, 30
  %v4145 = vsub.s32 %v4141, %v4144
  %vm4146 = vcmp.lt.s32.totalorder %v4145, 0
  %v4147 = vsub.s32 0, %v4145
  %v4148 = vsel %vm4146, %v4147, %v4145
  %v4149 = vclz %v4148
  %v4150 = vsub.s32 %v4149, 2
  %vm4151 = vcmp.gt.s32.totalorder 0, %v4150
  %v4152 = vsel %vm4151, 0, %v4150
  %v4153 = vsub.s32 32, %v4152
  %v4154 = vshll.u32 %v4145, %v4152
  %v4155 = vshrl.u32 %v4137, %v4153
  %v4156 = vor.u32 %v4154, %v4155
  %v4157 = vsub.s32 4294967266, %v4152
  %v4158 = vadd.s32 %v4157, 127
  %v4159 = vshll.u32 %v4158, 23
  %v4160 = vor.u32 4788187, %v4159
  %v4161 = vand.u32 2147483647, %v4160
  %v4163 = vcvt.s32.f32 %v4156
  %v4164 = vmul.f32 %v4163, %v4161
  %v4165 = vxor.u32 %v4164, 2147483648
  %v4166 = vsel %vm4045, %v4165, %v4164
  %v4167 = vsub.s32 4, %v4143
  %v4168 = vsel %vm4045, %v4167, %v4143
  %v4169 = vsel %vm4044, %v315, %v4166
  %v4170 = vsel %vm4044, 0, %v4168
  %v4171 = vmul.f32 %v4169, %v4169
  %v4172 = vmul.f32 %v4171, -0.001358992
  %v4173 = vadd.f32 %v4172, 0.041655596
  %v4174 = vmul.f32 %v4171, %v4173
  %v4175 = vadd.f32 %v4174, -0.4999988
  %v4176 = vmul.f32 %v4171, %v4175
  %v4177 = vadd.f32 1.0, %v4176
  %v4178 = vmul.f32 %v4169, %v4169
  %v4179 = vmul.f32 %v4178, -0.00019511016
  %v4180 = vadd.f32 %v4179, 0.008332121
  %v4181 = vmul.f32 %v4178, %v4180
  %v4182 = vadd.f32 %v4181, -0.16666654
  %v4183 = vmul.f32 %v4178, %v4182
  %v4184 = vadd.f32 %v4183, 1.0
  %v4185 = vmul.f32 %v4184, %v4169
  %vm4186 = vweird.f32 %v315
  %v4187 = vadd.s32 %v4170, 3
  %v4188 = vand.u32 %v4187, 3
  %vm4189 = vcmp.lt.s32.totalorder %v4188, 2
  %vm4190 = vcmp.eq.s32.totalorder %v4188, 0
  %v4191 = vxor.u32 %v4185, 2147483648
  %v4192 = vsel %vm4190, %v4177, %v4191
  %vm4193 = vcmp.eq.s32.totalorder %v4188, 2
  %v4194 = vxor.u32 %v4177, 2147483648
  %v4195 = vsel %vm4193, %v4194, %v4185
  %v4196 = vsel %vm4189, %v4192, %v4195
  %v4197 = vsel %vm4186, nan, %v4196
  %v4198 = vand.u32 2147483647, %v316
  %vm4199 = vcmp.le.f32.partialorder %v4198, 0.7853982
  %vm4200 = vcmp.lt.s32.totalorder %v316, 0
  %v4201 = vand.u32 %v316, 2139095040
  %v4202 = vshrl.u32 %v4201, 23
  %v4203 = vsub.s32 %v4202, 127
  %v4204 = vand.u32 2147483647, %v316
  %v4205 = vand.u32 %v4204, 8388607
  %v4206 = vor.u32 %v4205, 8388608
  %v4207 = vsub.s32 0, %v4206
  %v4208 = vadd.s32 %v4203, 1
  %vm4209 = vcmp.gt.s32.totalorder %v4208, 0
  %v4210 = vsel %vm4209, %v4208, 0
  %v4211 = vshrl.u32 %v4210, 5
  %v4212 = vand.u32 %v4210, 31
  %v4213 = vsub.s32 32, %v4212
  %v4214 = vshrl.u32 683565275, %v4213
  %v4215 = vshll.u32 683565275, %v4212
  %v4216 = vshrl.u32 2475754826, %v4213
  %v4217 = vor.u32 %v4215, %v4216
  %v4218 = vshll.u32 2475754826, %v4212
  %v4219 = vshrl.u32 2131351028, %v4213
  %v4220 = vor.u32 %v4218, %v4219
  %v4221 = vshll.u32 2131351028, %v4212
  %v4222 = vshrl.u32 2102212464, %v4213
  %v4223 = vor.u32 %v4221, %v4222
  %v4224 = vshll.u32 2102212464, %v4212
  %v4225 = vshrl.u32 920167782, %v4213
  %v4226 = vor.u32 %v4224, %v4225
  %v4227 = vshll.u32 920167782, %v4212
  %v4228 = vshrl.u32 1326507024, %v4213
  %v4229 = vor.u32 %v4227, %v4228
  %vm4230 = vcmp.lt.s32.totalorder %v4211, 1
  %vm4231 = vcmp.lt.s32.totalorder %v4211, 2
  %vm4232 = vcmp.lt.s32.totalorder %v4211, 3
  %vm4233 = vcmp.lt.s32.totalorder %v4211, 4
  %v4234 = vsel %vm4230, %v4214, %v4217
  %v4235 = vsel %vm4233, %v4223, 2102212464
  %v4236 = vsel %vm4232, %v4220, %v4235
  %v4237 = vsel %vm4231, %v4234, %v4236
  %v4238 = vsel %vm4230, %v4217, %v4220
  %v4239 = vsel %vm4233, %v4226, 920167782
  %v4240 = vsel %vm4232, %v4223, %v4239
  %v4241 = vsel %vm4231, %v4238, %v4240
  %v4242 = vsel %vm4230, %v4220, %v4223
  %v4243 = vsel %vm4233, %v4229, 1326507024
  %v4244 = vsel %vm4232, %v4226, %v4243
  %v4245 = vsel %vm4231, %v4242, %v4244
  %v4246 = vshll.u32 %v4206, 8
  %v4247 = vand.u32 %v4246, 65535
  %v4248 = vshrl.u32 %v4246, 16
  %v4249 = vand.u32 %v4245, 65535
  %v4250 = vshrl.u32 %v4245, 16
  %v4251 = vmul.u32 %v4247, %v4249
  %v4252 = vmul.u32 %v4247, %v4250
  %v4253 = vmul.u32 %v4248, %v4249
  %v4254 = vmul.u32 %v4248, %v4250
  %v4255 = vshll.u32 %v4252, 16
  %v4256 = vshrl.u32 %v4252, 16
  %v4257 = vshll.u32 %v4253, 16
  %v4258 = vshrl.u32 %v4253, 16
  %vm4259 = vc.u32 %v4251, %v4255
  %v4260 = vsel %vm4259, 1, 0
  %v4261 = vadd.s32 %v4251, %v4255
  %v4262 = vadd.s32 %v4254, %v4260
  %vm4263 = vc.u32 %v4261, %v4257
  %v4264 = vsel %vm4263, 1, 0
  %v4265 = vadd.s32 %v4261, %v4257
  %v4266 = vadd.s32 %v4262, %v4264
  %v4267 = vadd.s32 %v4266, %v4256
  %v4268 = vadd.s32 %v4267, %v4258
  %v4269 = vand.u32 %v4246, 65535
  %v4270 = vshrl.u32 %v4246, 16
  %v4271 = vand.u32 %v4241, 65535
  %v4272 = vshrl.u32 %v4241, 16
  %v4273 = vmul.u32 %v4269, %v4271
  %v4274 = vmul.u32 %v4269, %v4272
  %v4275 = vmul.u32 %v4270, %v4271
  %v4276 = vmul.u32 %v4270, %v4272
  %v4277 = vshll.u32 %v4274, 16
  %v4278 = vshrl.u32 %v4274, 16
  %v4279 = vshll.u32 %v4275, 16
  %v4280 = vshrl.u32 %v4275, 16
  %vm4281 = vc.u32 %v4273, %v4277
  %v4282 = vsel %vm4281, 1, 0
  %v4283 = vadd.s32 %v4273, %v4277
  %v4284 = vadd.s32 %v4276, %v4282
  %vm4285 = vc.u32 %v4283, %v4279
  %v4286 = vsel %vm4285, 1, 0
  %v4287 = vadd.s32 %v4283, %v4279
  %v4288 = vadd.s32 %v4284, %v4286
  %v4289 = vadd.s32 %v4288, %v4278
  %v4290 = vadd.s32 %v4289, %v4280
  %v4291 = vmul.u32 %v4246, %v4237
  %v4292 = vadd.s32 %v4268, %v4287
  %vm4293 = vc.u32 %v4268, %v4287
  %v4294 = vadd.s32 %v4290, 1
  %v4295 = vsel %vm4293, %v4294, %v4290
  %v4296 = vadd.s32 %v4291, %v4295
  %v4297 = vadd.s32 %v4296, 536870912
  %v4298 = vshrl.u32 %v4297, 30
  %v4299 = vshll.u32 %v4298, 30
  %v4300 = vsub.s32 %v4296, %v4299
  %vm4301 = vcmp.lt.s32.totalorder %v4300, 0
  %v4302 = vsub.s32 0, %v4300
  %v4303 = vsel %vm4301, %v4302, %v4300
  %v4304 = vclz %v4303
  %v4305 = vsub.s32 %v4304, 2
  %vm4306 = vcmp.gt.s32.totalorder 0, %v4305
  %v4307 = vsel %vm4306, 0, %v4305
  %v4308 = vsub.s32 32, %v4307
  %v4309 = vshll.u32 %v4300, %v4307
  %v4310 = vshrl.u32 %v4292, %v4308
  %v4311 = vor.u32 %v4309, %v4310
  %v4312 = vsub.s32 4294967266, %v4307
  %v4313 = vadd.s32 %v4312, 127
  %v4314 = vshll.u32 %v4313, 23
  %v4315 = vor.u32 4788187, %v4314
  %v4316 = vand.u32 2147483647, %v4315
  %v4318 = vcvt.s32.f32 %v4311
  %v4319 = vmul.f32 %v4318, %v4316
  %v4320 = vxor.u32 %v4319, 2147483648
  %v4321 = vsel %vm4200, %v4320, %v4319
  %v4322 = vsub.s32 4, %v4298
  %v4323 = vsel %vm4200, %v4322, %v4298
  %v4324 = vsel %vm4199, %v316, %v4321
  %v4325 = vsel %vm4199, 0, %v4323
  %v4326 = vmul.f32 %v4324, %v4324
  %v4327 = vmul.f32 %v4326, -0.001358992
  %v4328 = vadd.f32 %v4327, 0.041655596
  %v4329 = vmul.f32 %v4326, %v4328
  %v4330 = vadd.f32 %v4329, -0.4999988
  %v4331 = vmul.f32 %v4326, %v4330
  %v4332 = vadd.f32 1.0, %v4331
  %v4333 = vmul.f32 %v4324, %v4324
  %v4334 = vmul.f32 %v4333, -0.00019511016
  %v4335 = vadd.f32 %v4334, 0.008332121
  %v4336 = vmul.f32 %v4333, %v4335
  %v4337 = vadd.f32 %v4336, -0.16666654
  %v4338 = vmul.f32 %v4333, %v4337
  %v4339 = vadd.f32 %v4338, 1.0
  %v4340 = vmul.f32 %v4339, %v4324
  %vm4341 = vweird.f32 %v316
  %v4342 = vadd.s32 %v4325, 3
  %v4343 = vand.u32 %v4342, 3
  %vm4344 = vcmp.lt.s32.totalorder %v4343, 2
  %vm4345 = vcmp.eq.s32.totalorder %v4343, 0
  %v4346 = vxor.u32 %v4340, 2147483648
  %v4347 = vsel %vm4345, %v4332, %v4346
  %vm4348 = vcmp.eq.s32.totalorder %v4343, 2
  %v4349 = vxor.u32 %v4332, 2147483648
  %v4350 = vsel %vm4348, %v4349, %v4340
  %v4351 = vsel %vm4344, %v4347, %v4350
  %v4352 = vsel %vm4341, nan, %v4351
  %v4353 = vand.u32 2147483647, %v317
  %vm4354 = vcmp.le.f32.partialorder %v4353, 0.7853982
  %vm4355 = vcmp.lt.s32.totalorder %v317, 0
  %v4356 = vand.u32 %v317, 2139095040
  %v4357 = vshrl.u32 %v4356, 23
  %v4358 = vsub.s32 %v4357, 127
  %v4359 = vand.u32 2147483647, %v317
  %v4360 = vand.u32 %v4359, 8388607
  %v4361 = vor.u32 %v4360, 8388608
  %v4362 = vsub.s32 0, %v4361
  %v4363 = vadd.s32 %v4358, 1
  %vm4364 = vcmp.gt.s32.totalorder %v4363, 0
  %v4365 = vsel %vm4364, %v4363, 0
  %v4366 = vshrl.u32 %v4365, 5
  %v4367 = vand.u32 %v4365, 31
  %v4368 = vsub.s32 32, %v4367
  %v4369 = vshrl.u32 683565275, %v4368
  %v4370 = vshll.u32 683565275, %v4367
  %v4371 = vshrl.u32 2475754826, %v4368
  %v4372 = vor.u32 %v4370, %v4371
  %v4373 = vshll.u32 2475754826, %v4367
  %v4374 = vshrl.u32 2131351028, %v4368
  %v4375 = vor.u32 %v4373, %v4374
  %v4376 = vshll.u32 2131351028, %v4367
  %v4377 = vshrl.u32 2102212464, %v4368
  %v4378 = vor.u32 %v4376, %v4377
  %v4379 = vshll.u32 2102212464, %v4367
  %v4380 = vshrl.u32 920167782, %v4368
  %v4381 = vor.u32 %v4379, %v4380
  %v4382 = vshll.u32 920167782, %v4367
  %v4383 = vshrl.u32 1326507024, %v4368
  %v4384 = vor.u32 %v4382, %v4383
  %vm4385 = vcmp.lt.s32.totalorder %v4366, 1
  %vm4386 = vcmp.lt.s32.totalorder %v4366, 2
  %vm4387 = vcmp.lt.s32.totalorder %v4366, 3
  %vm4388 = vcmp.lt.s32.totalorder %v4366, 4
  %v4389 = vsel %vm4385, %v4369, %v4372
  %v4390 = vsel %vm4388, %v4378, 2102212464
  %v4391 = vsel %vm4387, %v4375, %v4390
  %v4392 = vsel %vm4386, %v4389, %v4391
  %v4393 = vsel %vm4385, %v4372, %v4375
  %v4394 = vsel %vm4388, %v4381, 920167782
  %v4395 = vsel %vm4387, %v4378, %v4394
  %v4396 = vsel %vm4386, %v4393, %v4395
  %v4397 = vsel %vm4385, %v4375, %v4378
  %v4398 = vsel %vm4388, %v4384, 1326507024
  %v4399 = vsel %vm4387, %v4381, %v4398
  %v4400 = vsel %vm4386, %v4397, %v4399
  %v4401 = vshll.u32 %v4361, 8
  %v4402 = vand.u32 %v4401, 65535
  %v4403 = vshrl.u32 %v4401, 16
  %v4404 = vand.u32 %v4400, 65535
  %v4405 = vshrl.u32 %v4400, 16
  %v4406 = vmul.u32 %v4402, %v4404
  %v4407 = vmul.u32 %v4402, %v4405
  %v4408 = vmul.u32 %v4403, %v4404
  %v4409 = vmul.u32 %v4403, %v4405
  %v4410 = vshll.u32 %v4407, 16
  %v4411 = vshrl.u32 %v4407, 16
  %v4412 = vshll.u32 %v4408, 16
  %v4413 = vshrl.u32 %v4408, 16
  %vm4414 = vc.u32 %v4406, %v4410
  %v4415 = vsel %vm4414, 1, 0
  %v4416 = vadd.s32 %v4406, %v4410
  %v4417 = vadd.s32 %v4409, %v4415
  %vm4418 = vc.u32 %v4416, %v4412
  %v4419 = vsel %vm4418, 1, 0
  %v4420 = vadd.s32 %v4416, %v4412
  %v4421 = vadd.s32 %v4417, %v4419
  %v4422 = vadd.s32 %v4421, %v4411
  %v4423 = vadd.s32 %v4422, %v4413
  %v4424 = vand.u32 %v4401, 65535
  %v4425 = vshrl.u32 %v4401, 16
  %v4426 = vand.u32 %v4396, 65535
  %v4427 = vshrl.u32 %v4396, 16
  %v4428 = vmul.u32 %v4424, %v4426
  %v4429 = vmul.u32 %v4424, %v4427
  %v4430 = vmul.u32 %v4425, %v4426
  %v4431 = vmul.u32 %v4425, %v4427
  %v4432 = vshll.u32 %v4429, 16
  %v4433 = vshrl.u32 %v4429, 16
  %v4434 = vshll.u32 %v4430, 16
  %v4435 = vshrl.u32 %v4430, 16
  %vm4436 = vc.u32 %v4428, %v4432
  %v4437 = vsel %vm4436, 1, 0
  %v4438 = vadd.s32 %v4428, %v4432
  %v4439 = vadd.s32 %v4431, %v4437
  %vm4440 = vc.u32 %v4438, %v4434
  %v4441 = vsel %vm4440, 1, 0
  %v4442 = vadd.s32 %v4438, %v4434
  %v4443 = vadd.s32 %v4439, %v4441
  %v4444 = vadd.s32 %v4443, %v4433
  %v4445 = vadd.s32 %v4444, %v4435
  %v4446 = vmul.u32 %v4401, %v4392
  %v4447 = vadd.s32 %v4423, %v4442
  %vm4448 = vc.u32 %v4423, %v4442
  %v4449 = vadd.s32 %v4445, 1
  %v4450 = vsel %vm4448, %v4449, %v4445
  %v4451 = vadd.s32 %v4446, %v4450
  %v4452 = vadd.s32 %v4451, 536870912
  %v4453 = vshrl.u32 %v4452, 30
  %v4454 = vshll.u32 %v4453, 30
  %v4455 = vsub.s32 %v4451, %v4454
  %vm4456 = vcmp.lt.s32.totalorder %v4455, 0
  %v4457 = vsub.s32 0, %v4455
  %v4458 = vsel %vm4456, %v4457, %v4455
  %v4459 = vclz %v4458
  %v4460 = vsub.s32 %v4459, 2
  %vm4461 = vcmp.gt.s32.totalorder 0, %v4460
  %v4462 = vsel %vm4461, 0, %v4460
  %v4463 = vsub.s32 32, %v4462
  %v4464 = vshll.u32 %v4455, %v4462
  %v4465 = vshrl.u32 %v4447, %v4463
  %v4466 = vor.u32 %v4464, %v4465
  %v4467 = vsub.s32 4294967266, %v4462
  %v4468 = vadd.s32 %v4467, 127
  %v4469 = vshll.u32 %v4468, 23
  %v4470 = vor.u32 4788187, %v4469
  %v4471 = vand.u32 2147483647, %v4470
  %v4473 = vcvt.s32.f32 %v4466
  %v4474 = vmul.f32 %v4473, %v4471
  %v4475 = vxor.u32 %v4474, 2147483648
  %v4476 = vsel %vm4355, %v4475, %v4474
  %v4477 = vsub.s32 4, %v4453
  %v4478 = vsel %vm4355, %v4477, %v4453
  %v4479 = vsel %vm4354, %v317, %v4476
  %v4480 = vsel %vm4354, 0, %v4478
  %v4481 = vmul.f32 %v4479, %v4479
  %v4482 = vmul.f32 %v4481, -0.001358992
  %v4483 = vadd.f32 %v4482, 0.041655596
  %v4484 = vmul.f32 %v4481, %v4483
  %v4485 = vadd.f32 %v4484, -0.4999988
  %v4486 = vmul.f32 %v4481, %v4485
  %v4487 = vadd.f32 1.0, %v4486
  %v4488 = vmul.f32 %v4479, %v4479
  %v4489 = vmul.f32 %v4488, -0.00019511016
  %v4490 = vadd.f32 %v4489, 0.008332121
  %v4491 = vmul.f32 %v4488, %v4490
  %v4492 = vadd.f32 %v4491, -0.16666654
  %v4493 = vmul.f32 %v4488, %v4492
  %v4494 = vadd.f32 %v4493, 1.0
  %v4495 = vmul.f32 %v4494, %v4479
  %vm4496 = vweird.f32 %v317
  %v4497 = vadd.s32 %v4480, 3
  %v4498 = vand.u32 %v4497, 3
  %vm4499 = vcmp.lt.s32.totalorder %v4498, 2
  %vm4500 = vcmp.eq.s32.totalorder %v4498, 0
  %v4501 = vxor.u32 %v4495, 2147483648
  %v4502 = vsel %vm4500, %v4487, %v4501
  %vm4503 = vcmp.eq.s32.totalorder %v4498, 2
  %v4504 = vxor.u32 %v4487, 2147483648
  %v4505 = vsel %vm4503, %v4504, %v4495
  %v4506 = vsel %vm4499, %v4502, %v4505
  %v4507 = vsel %vm4496, nan, %v4506
  %v4508 = vand.u32 2147483647, %v318
  %vm4509 = vcmp.le.f32.partialorder %v4508, 0.7853982
  %vm4510 = vcmp.lt.s32.totalorder %v318, 0
  %v4511 = vand.u32 %v318, 2139095040
  %v4512 = vshrl.u32 %v4511, 23
  %v4513 = vsub.s32 %v4512, 127
  %v4514 = vand.u32 2147483647, %v318
  %v4515 = vand.u32 %v4514, 8388607
  %v4516 = vor.u32 %v4515, 8388608
  %v4517 = vsub.s32 0, %v4516
  %v4518 = vadd.s32 %v4513, 1
  %vm4519 = vcmp.gt.s32.totalorder %v4518, 0
  %v4520 = vsel %vm4519, %v4518, 0
  %v4521 = vshrl.u32 %v4520, 5
  %v4522 = vand.u32 %v4520, 31
  %v4523 = vsub.s32 32, %v4522
  %v4524 = vshrl.u32 683565275, %v4523
  %v4525 = vshll.u32 683565275, %v4522
  %v4526 = vshrl.u32 2475754826, %v4523
  %v4527 = vor.u32 %v4525, %v4526
  %v4528 = vshll.u32 2475754826, %v4522
  %v4529 = vshrl.u32 2131351028, %v4523
  %v4530 = vor.u32 %v4528, %v4529
  %v4531 = vshll.u32 2131351028, %v4522
  %v4532 = vshrl.u32 2102212464, %v4523
  %v4533 = vor.u32 %v4531, %v4532
  %v4534 = vshll.u32 2102212464, %v4522
  %v4535 = vshrl.u32 920167782, %v4523
  %v4536 = vor.u32 %v4534, %v4535
  %v4537 = vshll.u32 920167782, %v4522
  %v4538 = vshrl.u32 1326507024, %v4523
  %v4539 = vor.u32 %v4537, %v4538
  %vm4540 = vcmp.lt.s32.totalorder %v4521, 1
  %vm4541 = vcmp.lt.s32.totalorder %v4521, 2
  %vm4542 = vcmp.lt.s32.totalorder %v4521, 3
  %vm4543 = vcmp.lt.s32.totalorder %v4521, 4
  %v4544 = vsel %vm4540, %v4524, %v4527
  %v4545 = vsel %vm4543, %v4533, 2102212464
  %v4546 = vsel %vm4542, %v4530, %v4545
  %v4547 = vsel %vm4541, %v4544, %v4546
  %v4548 = vsel %vm4540, %v4527, %v4530
  %v4549 = vsel %vm4543, %v4536, 920167782
  %v4550 = vsel %vm4542, %v4533, %v4549
  %v4551 = vsel %vm4541, %v4548, %v4550
  %v4552 = vsel %vm4540, %v4530, %v4533
  %v4553 = vsel %vm4543, %v4539, 1326507024
  %v4554 = vsel %vm4542, %v4536, %v4553
  %v4555 = vsel %vm4541, %v4552, %v4554
  %v4556 = vshll.u32 %v4516, 8
  %v4557 = vand.u32 %v4556, 65535
  %v4558 = vshrl.u32 %v4556, 16
  %v4559 = vand.u32 %v4555, 65535
  %v4560 = vshrl.u32 %v4555, 16
  %v4561 = vmul.u32 %v4557, %v4559
  %v4562 = vmul.u32 %v4557, %v4560
  %v4563 = vmul.u32 %v4558, %v4559
  %v4564 = vmul.u32 %v4558, %v4560
  %v4565 = vshll.u32 %v4562, 16
  %v4566 = vshrl.u32 %v4562, 16
  %v4567 = vshll.u32 %v4563, 16
  %v4568 = vshrl.u32 %v4563, 16
  %vm4569 = vc.u32 %v4561, %v4565
  %v4570 = vsel %vm4569, 1, 0
  %v4571 = vadd.s32 %v4561, %v4565
  %v4572 = vadd.s32 %v4564, %v4570
  %vm4573 = vc.u32 %v4571, %v4567
  %v4574 = vsel %vm4573, 1, 0
  %v4575 = vadd.s32 %v4571, %v4567
  %v4576 = vadd.s32 %v4572, %v4574
  %v4577 = vadd.s32 %v4576, %v4566
  %v4578 = vadd.s32 %v4577, %v4568
  %v4579 = vand.u32 %v4556, 65535
  %v4580 = vshrl.u32 %v4556, 16
  %v4581 = vand.u32 %v4551, 65535
  %v4582 = vshrl.u32 %v4551, 16
  %v4583 = vmul.u32 %v4579, %v4581
  %v4584 = vmul.u32 %v4579, %v4582
  %v4585 = vmul.u32 %v4580, %v4581
  %v4586 = vmul.u32 %v4580, %v4582
  %v4587 = vshll.u32 %v4584, 16
  %v4588 = vshrl.u32 %v4584, 16
  %v4589 = vshll.u32 %v4585, 16
  %v4590 = vshrl.u32 %v4585, 16
  %vm4591 = vc.u32 %v4583, %v4587
  %v4592 = vsel %vm4591, 1, 0
  %v4593 = vadd.s32 %v4583, %v4587
  %v4594 = vadd.s32 %v4586, %v4592
  %vm4595 = vc.u32 %v4593, %v4589
  %v4596 = vsel %vm4595, 1, 0
  %v4597 = vadd.s32 %v4593, %v4589
  %v4598 = vadd.s32 %v4594, %v4596
  %v4599 = vadd.s32 %v4598, %v4588
  %v4600 = vadd.s32 %v4599, %v4590
  %v4601 = vmul.u32 %v4556, %v4547
  %v4602 = vadd.s32 %v4578, %v4597
  %vm4603 = vc.u32 %v4578, %v4597
  %v4604 = vadd.s32 %v4600, 1
  %v4605 = vsel %vm4603, %v4604, %v4600
  %v4606 = vadd.s32 %v4601, %v4605
  %v4607 = vadd.s32 %v4606, 536870912
  %v4608 = vshrl.u32 %v4607, 30
  %v4609 = vshll.u32 %v4608, 30
  %v4610 = vsub.s32 %v4606, %v4609
  %vm4611 = vcmp.lt.s32.totalorder %v4610, 0
  %v4612 = vsub.s32 0, %v4610
  %v4613 = vsel %vm4611, %v4612, %v4610
  %v4614 = vclz %v4613
  %v4615 = vsub.s32 %v4614, 2
  %vm4616 = vcmp.gt.s32.totalorder 0, %v4615
  %v4617 = vsel %vm4616, 0, %v4615
  %v4618 = vsub.s32 32, %v4617
  %v4619 = vshll.u32 %v4610, %v4617
  %v4620 = vshrl.u32 %v4602, %v4618
  %v4621 = vor.u32 %v4619, %v4620
  %v4622 = vsub.s32 4294967266, %v4617
  %v4623 = vadd.s32 %v4622, 127
  %v4624 = vshll.u32 %v4623, 23
  %v4625 = vor.u32 4788187, %v4624
  %v4626 = vand.u32 2147483647, %v4625
  %v4628 = vcvt.s32.f32 %v4621
  %v4629 = vmul.f32 %v4628, %v4626
  %v4630 = vxor.u32 %v4629, 2147483648
  %v4631 = vsel %vm4510, %v4630, %v4629
  %v4632 = vsub.s32 4, %v4608
  %v4633 = vsel %vm4510, %v4632, %v4608
  %v4634 = vsel %vm4509, %v318, %v4631
  %v4635 = vsel %vm4509, 0, %v4633
  %v4636 = vmul.f32 %v4634, %v4634
  %v4637 = vmul.f32 %v4636, -0.001358992
  %v4638 = vadd.f32 %v4637, 0.041655596
  %v4639 = vmul.f32 %v4636, %v4638
  %v4640 = vadd.f32 %v4639, -0.4999988
  %v4641 = vmul.f32 %v4636, %v4640
  %v4642 = vadd.f32 1.0, %v4641
  %v4643 = vmul.f32 %v4634, %v4634
  %v4644 = vmul.f32 %v4643, -0.00019511016
  %v4645 = vadd.f32 %v4644, 0.008332121
  %v4646 = vmul.f32 %v4643, %v4645
  %v4647 = vadd.f32 %v4646, -0.16666654
  %v4648 = vmul.f32 %v4643, %v4647
  %v4649 = vadd.f32 %v4648, 1.0
  %v4650 = vmul.f32 %v4649, %v4634
  %vm4651 = vweird.f32 %v318
  %v4652 = vadd.s32 %v4635, 3
  %v4653 = vand.u32 %v4652, 3
  %vm4654 = vcmp.lt.s32.totalorder %v4653, 2
  %vm4655 = vcmp.eq.s32.totalorder %v4653, 0
  %v4656 = vxor.u32 %v4650, 2147483648
  %v4657 = vsel %vm4655, %v4642, %v4656
  %vm4658 = vcmp.eq.s32.totalorder %v4653, 2
  %v4659 = vxor.u32 %v4642, 2147483648
  %v4660 = vsel %vm4658, %v4659, %v4650
  %v4661 = vsel %vm4654, %v4657, %v4660
  %v4662 = vsel %vm4651, nan, %v4661
  %v4663 = vand.u32 2147483647, %v319
  %vm4664 = vcmp.le.f32.partialorder %v4663, 0.7853982
  %vm4665 = vcmp.lt.s32.totalorder %v319, 0
  %v4666 = vand.u32 %v319, 2139095040
  %v4667 = vshrl.u32 %v4666, 23
  %v4668 = vsub.s32 %v4667, 127
  %v4669 = vand.u32 2147483647, %v319
  %v4670 = vand.u32 %v4669, 8388607
  %v4671 = vor.u32 %v4670, 8388608
  %v4672 = vsub.s32 0, %v4671
  %v4673 = vadd.s32 %v4668, 1
  %vm4674 = vcmp.gt.s32.totalorder %v4673, 0
  %v4675 = vsel %vm4674, %v4673, 0
  %v4676 = vshrl.u32 %v4675, 5
  %v4677 = vand.u32 %v4675, 31
  %v4678 = vsub.s32 32, %v4677
  %v4679 = vshrl.u32 683565275, %v4678
  %v4680 = vshll.u32 683565275, %v4677
  %v4681 = vshrl.u32 2475754826, %v4678
  %v4682 = vor.u32 %v4680, %v4681
  %v4683 = vshll.u32 2475754826, %v4677
  %v4684 = vshrl.u32 2131351028, %v4678
  %v4685 = vor.u32 %v4683, %v4684
  %v4686 = vshll.u32 2131351028, %v4677
  %v4687 = vshrl.u32 2102212464, %v4678
  %v4688 = vor.u32 %v4686, %v4687
  %v4689 = vshll.u32 2102212464, %v4677
  %v4690 = vshrl.u32 920167782, %v4678
  %v4691 = vor.u32 %v4689, %v4690
  %v4692 = vshll.u32 920167782, %v4677
  %v4693 = vshrl.u32 1326507024, %v4678
  %v4694 = vor.u32 %v4692, %v4693
  %vm4695 = vcmp.lt.s32.totalorder %v4676, 1
  %vm4696 = vcmp.lt.s32.totalorder %v4676, 2
  %vm4697 = vcmp.lt.s32.totalorder %v4676, 3
  %vm4698 = vcmp.lt.s32.totalorder %v4676, 4
  %v4699 = vsel %vm4695, %v4679, %v4682
  %v4700 = vsel %vm4698, %v4688, 2102212464
  %v4701 = vsel %vm4697, %v4685, %v4700
  %v4702 = vsel %vm4696, %v4699, %v4701
  %v4703 = vsel %vm4695, %v4682, %v4685
  %v4704 = vsel %vm4698, %v4691, 920167782
  %v4705 = vsel %vm4697, %v4688, %v4704
  %v4706 = vsel %vm4696, %v4703, %v4705
  %v4707 = vsel %vm4695, %v4685, %v4688
  %v4708 = vsel %vm4698, %v4694, 1326507024
  %v4709 = vsel %vm4697, %v4691, %v4708
  %v4710 = vsel %vm4696, %v4707, %v4709
  %v4711 = vshll.u32 %v4671, 8
  %v4712 = vand.u32 %v4711, 65535
  %v4713 = vshrl.u32 %v4711, 16
  %v4714 = vand.u32 %v4710, 65535
  %v4715 = vshrl.u32 %v4710, 16
  %v4716 = vmul.u32 %v4712, %v4714
  %v4717 = vmul.u32 %v4712, %v4715
  %v4718 = vmul.u32 %v4713, %v4714
  %v4719 = vmul.u32 %v4713, %v4715
  %v4720 = vshll.u32 %v4717, 16
  %v4721 = vshrl.u32 %v4717, 16
  %v4722 = vshll.u32 %v4718, 16
  %v4723 = vshrl.u32 %v4718, 16
  %vm4724 = vc.u32 %v4716, %v4720
  %v4725 = vsel %vm4724, 1, 0
  %v4726 = vadd.s32 %v4716, %v4720
  %v4727 = vadd.s32 %v4719, %v4725
  %vm4728 = vc.u32 %v4726, %v4722
  %v4729 = vsel %vm4728, 1, 0
  %v4730 = vadd.s32 %v4726, %v4722
  %v4731 = vadd.s32 %v4727, %v4729
  %v4732 = vadd.s32 %v4731, %v4721
  %v4733 = vadd.s32 %v4732, %v4723
  %v4734 = vand.u32 %v4711, 65535
  %v4735 = vshrl.u32 %v4711, 16
  %v4736 = vand.u32 %v4706, 65535
  %v4737 = vshrl.u32 %v4706, 16
  %v4738 = vmul.u32 %v4734, %v4736
  %v4739 = vmul.u32 %v4734, %v4737
  %v4740 = vmul.u32 %v4735, %v4736
  %v4741 = vmul.u32 %v4735, %v4737
  %v4742 = vshll.u32 %v4739, 16
  %v4743 = vshrl.u32 %v4739, 16
  %v4744 = vshll.u32 %v4740, 16
  %v4745 = vshrl.u32 %v4740, 16
  %vm4746 = vc.u32 %v4738, %v4742
  %v4747 = vsel %vm4746, 1, 0
  %v4748 = vadd.s32 %v4738, %v4742
  %v4749 = vadd.s32 %v4741, %v4747
  %vm4750 = vc.u32 %v4748, %v4744
  %v4751 = vsel %vm4750, 1, 0
  %v4752 = vadd.s32 %v4748, %v4744
  %v4753 = vadd.s32 %v4749, %v4751
  %v4754 = vadd.s32 %v4753, %v4743
  %v4755 = vadd.s32 %v4754, %v4745
  %v4756 = vmul.u32 %v4711, %v4702
  %v4757 = vadd.s32 %v4733, %v4752
  %vm4758 = vc.u32 %v4733, %v4752
  %v4759 = vadd.s32 %v4755, 1
  %v4760 = vsel %vm4758, %v4759, %v4755
  %v4761 = vadd.s32 %v4756, %v4760
  %v4762 = vadd.s32 %v4761, 536870912
  %v4763 = vshrl.u32 %v4762, 30
  %v4764 = vshll.u32 %v4763, 30
  %v4765 = vsub.s32 %v4761, %v4764
  %vm4766 = vcmp.lt.s32.totalorder %v4765, 0
  %v4767 = vsub.s32 0, %v4765
  %v4768 = vsel %vm4766, %v4767, %v4765
  %v4769 = vclz %v4768
  %v4770 = vsub.s32 %v4769, 2
  %vm4771 = vcmp.gt.s32.totalorder 0, %v4770
  %v4772 = vsel %vm4771, 0, %v4770
  %v4773 = vsub.s32 32, %v4772
  %v4774 = vshll.u32 %v4765, %v4772
  %v4775 = vshrl.u32 %v4757, %v4773
  %v4776 = vor.u32 %v4774, %v4775
  %v4777 = vsub.s32 4294967266, %v4772
  %v4778 = vadd.s32 %v4777, 127
  %v4779 = vshll.u32 %v4778, 23
  %v4780 = vor.u32 4788187, %v4779
  %v4781 = vand.u32 2147483647, %v4780
  %v4783 = vcvt.s32.f32 %v4776
  %v4784 = vmul.f32 %v4783, %v4781
  %v4785 = vxor.u32 %v4784, 2147483648
  %v4786 = vsel %vm4665, %v4785, %v4784
  %v4787 = vsub.s32 4, %v4763
  %v4788 = vsel %vm4665, %v4787, %v4763
  %v4789 = vsel %vm4664, %v319, %v4786
  %v4790 = vsel %vm4664, 0, %v4788
  %v4791 = vmul.f32 %v4789, %v4789
  %v4792 = vmul.f32 %v4791, -0.001358992
  %v4793 = vadd.f32 %v4792, 0.041655596
  %v4794 = vmul.f32 %v4791, %v4793
  %v4795 = vadd.f32 %v4794, -0.4999988
  %v4796 = vmul.f32 %v4791, %v4795
  %v4797 = vadd.f32 1.0, %v4796
  %v4798 = vmul.f32 %v4789, %v4789
  %v4799 = vmul.f32 %v4798, -0.00019511016
  %v4800 = vadd.f32 %v4799, 0.008332121
  %v4801 = vmul.f32 %v4798, %v4800
  %v4802 = vadd.f32 %v4801, -0.16666654
  %v4803 = vmul.f32 %v4798, %v4802
  %v4804 = vadd.f32 %v4803, 1.0
  %v4805 = vmul.f32 %v4804, %v4789
  %vm4806 = vweird.f32 %v319
  %v4807 = vadd.s32 %v4790, 3
  %v4808 = vand.u32 %v4807, 3
  %vm4809 = vcmp.lt.s32.totalorder %v4808, 2
  %vm4810 = vcmp.eq.s32.totalorder %v4808, 0
  %v4811 = vxor.u32 %v4805, 2147483648
  %v4812 = vsel %vm4810, %v4797, %v4811
  %vm4813 = vcmp.eq.s32.totalorder %v4808, 2
  %v4814 = vxor.u32 %v4797, 2147483648
  %v4815 = vsel %vm4813, %v4814, %v4805
  %v4816 = vsel %vm4809, %v4812, %v4815
  %v4817 = vsel %vm4806, nan, %v4816
  %v4818 = vand.u32 2147483647, %v320
  %vm4819 = vcmp.le.f32.partialorder %v4818, 0.7853982
  %vm4820 = vcmp.lt.s32.totalorder %v320, 0
  %v4821 = vand.u32 %v320, 2139095040
  %v4822 = vshrl.u32 %v4821, 23
  %v4823 = vsub.s32 %v4822, 127
  %v4824 = vand.u32 2147483647, %v320
  %v4825 = vand.u32 %v4824, 8388607
  %v4826 = vor.u32 %v4825, 8388608
  %v4827 = vsub.s32 0, %v4826
  %v4828 = vadd.s32 %v4823, 1
  %vm4829 = vcmp.gt.s32.totalorder %v4828, 0
  %v4830 = vsel %vm4829, %v4828, 0
  %v4831 = vshrl.u32 %v4830, 5
  %v4832 = vand.u32 %v4830, 31
  %v4833 = vsub.s32 32, %v4832
  %v4834 = vshrl.u32 683565275, %v4833
  %v4835 = vshll.u32 683565275, %v4832
  %v4836 = vshrl.u32 2475754826, %v4833
  %v4837 = vor.u32 %v4835, %v4836
  %v4838 = vshll.u32 2475754826, %v4832
  %v4839 = vshrl.u32 2131351028, %v4833
  %v4840 = vor.u32 %v4838, %v4839
  %v4841 = vshll.u32 2131351028, %v4832
  %v4842 = vshrl.u32 2102212464, %v4833
  %v4843 = vor.u32 %v4841, %v4842
  %v4844 = vshll.u32 2102212464, %v4832
  %v4845 = vshrl.u32 920167782, %v4833
  %v4846 = vor.u32 %v4844, %v4845
  %v4847 = vshll.u32 920167782, %v4832
  %v4848 = vshrl.u32 1326507024, %v4833
  %v4849 = vor.u32 %v4847, %v4848
  %vm4850 = vcmp.lt.s32.totalorder %v4831, 1
  %vm4851 = vcmp.lt.s32.totalorder %v4831, 2
  %vm4852 = vcmp.lt.s32.totalorder %v4831, 3
  %vm4853 = vcmp.lt.s32.totalorder %v4831, 4
  %v4854 = vsel %vm4850, %v4834, %v4837
  %v4855 = vsel %vm4853, %v4843, 2102212464
  %v4856 = vsel %vm4852, %v4840, %v4855
  %v4857 = vsel %vm4851, %v4854, %v4856
  %v4858 = vsel %vm4850, %v4837, %v4840
  %v4859 = vsel %vm4853, %v4846, 920167782
  %v4860 = vsel %vm4852, %v4843, %v4859
  %v4861 = vsel %vm4851, %v4858, %v4860
  %v4862 = vsel %vm4850, %v4840, %v4843
  %v4863 = vsel %vm4853, %v4849, 1326507024
  %v4864 = vsel %vm4852, %v4846, %v4863
  %v4865 = vsel %vm4851, %v4862, %v4864
  %v4866 = vshll.u32 %v4826, 8
  %v4867 = vand.u32 %v4866, 65535
  %v4868 = vshrl.u32 %v4866, 16
  %v4869 = vand.u32 %v4865, 65535
  %v4870 = vshrl.u32 %v4865, 16
  %v4871 = vmul.u32 %v4867, %v4869
  %v4872 = vmul.u32 %v4867, %v4870
  %v4873 = vmul.u32 %v4868, %v4869
  %v4874 = vmul.u32 %v4868, %v4870
  %v4875 = vshll.u32 %v4872, 16
  %v4876 = vshrl.u32 %v4872, 16
  %v4877 = vshll.u32 %v4873, 16
  %v4878 = vshrl.u32 %v4873, 16
  %vm4879 = vc.u32 %v4871, %v4875
  %v4880 = vsel %vm4879, 1, 0
  %v4881 = vadd.s32 %v4871, %v4875
  %v4882 = vadd.s32 %v4874, %v4880
  %vm4883 = vc.u32 %v4881, %v4877
  %v4884 = vsel %vm4883, 1, 0
  %v4885 = vadd.s32 %v4881, %v4877
  %v4886 = vadd.s32 %v4882, %v4884
  %v4887 = vadd.s32 %v4886, %v4876
  %v4888 = vadd.s32 %v4887, %v4878
  %v4889 = vand.u32 %v4866, 65535
  %v4890 = vshrl.u32 %v4866, 16
  %v4891 = vand.u32 %v4861, 65535
  %v4892 = vshrl.u32 %v4861, 16
  %v4893 = vmul.u32 %v4889, %v4891
  %v4894 = vmul.u32 %v4889, %v4892
  %v4895 = vmul.u32 %v4890, %v4891
  %v4896 = vmul.u32 %v4890, %v4892
  %v4897 = vshll.u32 %v4894, 16
  %v4898 = vshrl.u32 %v4894, 16
  %v4899 = vshll.u32 %v4895, 16
  %v4900 = vshrl.u32 %v4895, 16
  %vm4901 = vc.u32 %v4893, %v4897
  %v4902 = vsel %vm4901, 1, 0
  %v4903 = vadd.s32 %v4893, %v4897
  %v4904 = vadd.s32 %v4896, %v4902
  %vm4905 = vc.u32 %v4903, %v4899
  %v4906 = vsel %vm4905, 1, 0
  %v4907 = vadd.s32 %v4903, %v4899
  %v4908 = vadd.s32 %v4904, %v4906
  %v4909 = vadd.s32 %v4908, %v4898
  %v4910 = vadd.s32 %v4909, %v4900
  %v4911 = vmul.u32 %v4866, %v4857
  %v4912 = vadd.s32 %v4888, %v4907
  %vm4913 = vc.u32 %v4888, %v4907
  %v4914 = vadd.s32 %v4910, 1
  %v4915 = vsel %vm4913, %v4914, %v4910
  %v4916 = vadd.s32 %v4911, %v4915
  %v4917 = vadd.s32 %v4916, 536870912
  %v4918 = vshrl.u32 %v4917, 30
  %v4919 = vshll.u32 %v4918, 30
  %v4920 = vsub.s32 %v4916, %v4919
  %vm4921 = vcmp.lt.s32.totalorder %v4920, 0
  %v4922 = vsub.s32 0, %v4920
  %v4923 = vsel %vm4921, %v4922, %v4920
  %v4924 = vclz %v4923
  %v4925 = vsub.s32 %v4924, 2
  %vm4926 = vcmp.gt.s32.totalorder 0, %v4925
  %v4927 = vsel %vm4926, 0, %v4925
  %v4928 = vsub.s32 32, %v4927
  %v4929 = vshll.u32 %v4920, %v4927
  %v4930 = vshrl.u32 %v4912, %v4928
  %v4931 = vor.u32 %v4929, %v4930
  %v4932 = vsub.s32 4294967266, %v4927
  %v4933 = vadd.s32 %v4932, 127
  %v4934 = vshll.u32 %v4933, 23
  %v4935 = vor.u32 4788187, %v4934
  %v4936 = vand.u32 2147483647, %v4935
  %v4938 = vcvt.s32.f32 %v4931
  %v4939 = vmul.f32 %v4938, %v4936
  %v4940 = vxor.u32 %v4939, 2147483648
  %v4941 = vsel %vm4820, %v4940, %v4939
  %v4942 = vsub.s32 4, %v4918
  %v4943 = vsel %vm4820, %v4942, %v4918
  %v4944 = vsel %vm4819, %v320, %v4941
  %v4945 = vsel %vm4819, 0, %v4943
  %v4946 = vmul.f32 %v4944, %v4944
  %v4947 = vmul.f32 %v4946, -0.001358992
  %v4948 = vadd.f32 %v4947, 0.041655596
  %v4949 = vmul.f32 %v4946, %v4948
  %v4950 = vadd.f32 %v4949, -0.4999988
  %v4951 = vmul.f32 %v4946, %v4950
  %v4952 = vadd.f32 1.0, %v4951
  %v4953 = vmul.f32 %v4944, %v4944
  %v4954 = vmul.f32 %v4953, -0.00019511016
  %v4955 = vadd.f32 %v4954, 0.008332121
  %v4956 = vmul.f32 %v4953, %v4955
  %v4957 = vadd.f32 %v4956, -0.16666654
  %v4958 = vmul.f32 %v4953, %v4957
  %v4959 = vadd.f32 %v4958, 1.0
  %v4960 = vmul.f32 %v4959, %v4944
  %vm4961 = vweird.f32 %v320
  %v4962 = vadd.s32 %v4945, 3
  %v4963 = vand.u32 %v4962, 3
  %vm4964 = vcmp.lt.s32.totalorder %v4963, 2
  %vm4965 = vcmp.eq.s32.totalorder %v4963, 0
  %v4966 = vxor.u32 %v4960, 2147483648
  %v4967 = vsel %vm4965, %v4952, %v4966
  %vm4968 = vcmp.eq.s32.totalorder %v4963, 2
  %v4969 = vxor.u32 %v4952, 2147483648
  %v4970 = vsel %vm4968, %v4969, %v4960
  %v4971 = vsel %vm4964, %v4967, %v4970
  %v4972 = vsel %vm4961, nan, %v4971
  %v4973 = vand.u32 2147483647, %v321
  %vm4974 = vcmp.le.f32.partialorder %v4973, 0.7853982
  %vm4975 = vcmp.lt.s32.totalorder %v321, 0
  %v4976 = vand.u32 %v321, 2139095040
  %v4977 = vshrl.u32 %v4976, 23
  %v4978 = vsub.s32 %v4977, 127
  %v4979 = vand.u32 2147483647, %v321
  %v4980 = vand.u32 %v4979, 8388607
  %v4981 = vor.u32 %v4980, 8388608
  %v4982 = vsub.s32 0, %v4981
  %v4983 = vadd.s32 %v4978, 1
  %vm4984 = vcmp.gt.s32.totalorder %v4983, 0
  %v4985 = vsel %vm4984, %v4983, 0
  %v4986 = vshrl.u32 %v4985, 5
  %v4987 = vand.u32 %v4985, 31
  %v4988 = vsub.s32 32, %v4987
  %v4989 = vshrl.u32 683565275, %v4988
  %v4990 = vshll.u32 683565275, %v4987
  %v4991 = vshrl.u32 2475754826, %v4988
  %v4992 = vor.u32 %v4990, %v4991
  %v4993 = vshll.u32 2475754826, %v4987
  %v4994 = vshrl.u32 2131351028, %v4988
  %v4995 = vor.u32 %v4993, %v4994
  %v4996 = vshll.u32 2131351028, %v4987
  %v4997 = vshrl.u32 2102212464, %v4988
  %v4998 = vor.u32 %v4996, %v4997
  %v4999 = vshll.u32 2102212464, %v4987
  %v5000 = vshrl.u32 920167782, %v4988
  %v5001 = vor.u32 %v4999, %v5000
  %v5002 = vshll.u32 920167782, %v4987
  %v5003 = vshrl.u32 1326507024, %v4988
  %v5004 = vor.u32 %v5002, %v5003
  %vm5005 = vcmp.lt.s32.totalorder %v4986, 1
  %vm5006 = vcmp.lt.s32.totalorder %v4986, 2
  %vm5007 = vcmp.lt.s32.totalorder %v4986, 3
  %vm5008 = vcmp.lt.s32.totalorder %v4986, 4
  %v5009 = vsel %vm5005, %v4989, %v4992
  %v5010 = vsel %vm5008, %v4998, 2102212464
  %v5011 = vsel %vm5007, %v4995, %v5010
  %v5012 = vsel %vm5006, %v5009, %v5011
  %v5013 = vsel %vm5005, %v4992, %v4995
  %v5014 = vsel %vm5008, %v5001, 920167782
  %v5015 = vsel %vm5007, %v4998, %v5014
  %v5016 = vsel %vm5006, %v5013, %v5015
  %v5017 = vsel %vm5005, %v4995, %v4998
  %v5018 = vsel %vm5008, %v5004, 1326507024
  %v5019 = vsel %vm5007, %v5001, %v5018
  %v5020 = vsel %vm5006, %v5017, %v5019
  %v5021 = vshll.u32 %v4981, 8
  %v5022 = vand.u32 %v5021, 65535
  %v5023 = vshrl.u32 %v5021, 16
  %v5024 = vand.u32 %v5020, 65535
  %v5025 = vshrl.u32 %v5020, 16
  %v5026 = vmul.u32 %v5022, %v5024
  %v5027 = vmul.u32 %v5022, %v5025
  %v5028 = vmul.u32 %v5023, %v5024
  %v5029 = vmul.u32 %v5023, %v5025
  %v5030 = vshll.u32 %v5027, 16
  %v5031 = vshrl.u32 %v5027, 16
  %v5032 = vshll.u32 %v5028, 16
  %v5033 = vshrl.u32 %v5028, 16
  %vm5034 = vc.u32 %v5026, %v5030
  %v5035 = vsel %vm5034, 1, 0
  %v5036 = vadd.s32 %v5026, %v5030
  %v5037 = vadd.s32 %v5029, %v5035
  %vm5038 = vc.u32 %v5036, %v5032
  %v5039 = vsel %vm5038, 1, 0
  %v5040 = vadd.s32 %v5036, %v5032
  %v5041 = vadd.s32 %v5037, %v5039
  %v5042 = vadd.s32 %v5041, %v5031
  %v5043 = vadd.s32 %v5042, %v5033
  %v5044 = vand.u32 %v5021, 65535
  %v5045 = vshrl.u32 %v5021, 16
  %v5046 = vand.u32 %v5016, 65535
  %v5047 = vshrl.u32 %v5016, 16
  %v5048 = vmul.u32 %v5044, %v5046
  %v5049 = vmul.u32 %v5044, %v5047
  %v5050 = vmul.u32 %v5045, %v5046
  %v5051 = vmul.u32 %v5045, %v5047
  %v5052 = vshll.u32 %v5049, 16
  %v5053 = vshrl.u32 %v5049, 16
  %v5054 = vshll.u32 %v5050, 16
  %v5055 = vshrl.u32 %v5050, 16
  %vm5056 = vc.u32 %v5048, %v5052
  %v5057 = vsel %vm5056, 1, 0
  %v5058 = vadd.s32 %v5048, %v5052
  %v5059 = vadd.s32 %v5051, %v5057
  %vm5060 = vc.u32 %v5058, %v5054
  %v5061 = vsel %vm5060, 1, 0
  %v5062 = vadd.s32 %v5058, %v5054
  %v5063 = vadd.s32 %v5059, %v5061
  %v5064 = vadd.s32 %v5063, %v5053
  %v5065 = vadd.s32 %v5064, %v5055
  %v5066 = vmul.u32 %v5021, %v5012
  %v5067 = vadd.s32 %v5043, %v5062
  %vm5068 = vc.u32 %v5043, %v5062
  %v5069 = vadd.s32 %v5065, 1
  %v5070 = vsel %vm5068, %v5069, %v5065
  %v5071 = vadd.s32 %v5066, %v5070
  %v5072 = vadd.s32 %v5071, 536870912
  %v5073 = vshrl.u32 %v5072, 30
  %v5074 = vshll.u32 %v5073, 30
  %v5075 = vsub.s32 %v5071, %v5074
  %vm5076 = vcmp.lt.s32.totalorder %v5075, 0
  %v5077 = vsub.s32 0, %v5075
  %v5078 = vsel %vm5076, %v5077, %v5075
  %v5079 = vclz %v5078
  %v5080 = vsub.s32 %v5079, 2
  %vm5081 = vcmp.gt.s32.totalorder 0, %v5080
  %v5082 = vsel %vm5081, 0, %v5080
  %v5083 = vsub.s32 32, %v5082
  %v5084 = vshll.u32 %v5075, %v5082
  %v5085 = vshrl.u32 %v5067, %v5083
  %v5086 = vor.u32 %v5084, %v5085
  %v5087 = vsub.s32 4294967266, %v5082
  %v5088 = vadd.s32 %v5087, 127
  %v5089 = vshll.u32 %v5088, 23
  %v5090 = vor.u32 4788187, %v5089
  %v5091 = vand.u32 2147483647, %v5090
  %v5093 = vcvt.s32.f32 %v5086
  %v5094 = vmul.f32 %v5093, %v5091
  %v5095 = vxor.u32 %v5094, 2147483648
  %v5096 = vsel %vm4975, %v5095, %v5094
  %v5097 = vsub.s32 4, %v5073
  %v5098 = vsel %vm4975, %v5097, %v5073
  %v5099 = vsel %vm4974, %v321, %v5096
  %v5100 = vsel %vm4974, 0, %v5098
  %v5101 = vmul.f32 %v5099, %v5099
  %v5102 = vmul.f32 %v5101, -0.001358992
  %v5103 = vadd.f32 %v5102, 0.041655596
  %v5104 = vmul.f32 %v5101, %v5103
  %v5105 = vadd.f32 %v5104, -0.4999988
  %v5106 = vmul.f32 %v5101, %v5105
  %v5107 = vadd.f32 1.0, %v5106
  %v5108 = vmul.f32 %v5099, %v5099
  %v5109 = vmul.f32 %v5108, -0.00019511016
  %v5110 = vadd.f32 %v5109, 0.008332121
  %v5111 = vmul.f32 %v5108, %v5110
  %v5112 = vadd.f32 %v5111, -0.16666654
  %v5113 = vmul.f32 %v5108, %v5112
  %v5114 = vadd.f32 %v5113, 1.0
  %v5115 = vmul.f32 %v5114, %v5099
  %vm5116 = vweird.f32 %v321
  %v5117 = vadd.s32 %v5100, 3
  %v5118 = vand.u32 %v5117, 3
  %vm5119 = vcmp.lt.s32.totalorder %v5118, 2
  %vm5120 = vcmp.eq.s32.totalorder %v5118, 0
  %v5121 = vxor.u32 %v5115, 2147483648
  %v5122 = vsel %vm5120, %v5107, %v5121
  %vm5123 = vcmp.eq.s32.totalorder %v5118, 2
  %v5124 = vxor.u32 %v5107, 2147483648
  %v5125 = vsel %vm5123, %v5124, %v5115
  %v5126 = vsel %vm5119, %v5122, %v5125
  %v5127 = vsel %vm5116, nan, %v5126
  %v5128 = vand.u32 2147483647, %v322
  %vm5129 = vcmp.le.f32.partialorder %v5128, 0.7853982
  %vm5130 = vcmp.lt.s32.totalorder %v322, 0
  %v5131 = vand.u32 %v322, 2139095040
  %v5132 = vshrl.u32 %v5131, 23
  %v5133 = vsub.s32 %v5132, 127
  %v5134 = vand.u32 2147483647, %v322
  %v5135 = vand.u32 %v5134, 8388607
  %v5136 = vor.u32 %v5135, 8388608
  %v5137 = vsub.s32 0, %v5136
  %v5138 = vadd.s32 %v5133, 1
  %vm5139 = vcmp.gt.s32.totalorder %v5138, 0
  %v5140 = vsel %vm5139, %v5138, 0
  %v5141 = vshrl.u32 %v5140, 5
  %v5142 = vand.u32 %v5140, 31
  %v5143 = vsub.s32 32, %v5142
  %v5144 = vshrl.u32 683565275, %v5143
  %v5145 = vshll.u32 683565275, %v5142
  %v5146 = vshrl.u32 2475754826, %v5143
  %v5147 = vor.u32 %v5145, %v5146
  %v5148 = vshll.u32 2475754826, %v5142
  %v5149 = vshrl.u32 2131351028, %v5143
  %v5150 = vor.u32 %v5148, %v5149
  %v5151 = vshll.u32 2131351028, %v5142
  %v5152 = vshrl.u32 2102212464, %v5143
  %v5153 = vor.u32 %v5151, %v5152
  %v5154 = vshll.u32 2102212464, %v5142
  %v5155 = vshrl.u32 920167782, %v5143
  %v5156 = vor.u32 %v5154, %v5155
  %v5157 = vshll.u32 920167782, %v5142
  %v5158 = vshrl.u32 1326507024, %v5143
  %v5159 = vor.u32 %v5157, %v5158
  %vm5160 = vcmp.lt.s32.totalorder %v5141, 1
  %vm5161 = vcmp.lt.s32.totalorder %v5141, 2
  %vm5162 = vcmp.lt.s32.totalorder %v5141, 3
  %vm5163 = vcmp.lt.s32.totalorder %v5141, 4
  %v5164 = vsel %vm5160, %v5144, %v5147
  %v5165 = vsel %vm5163, %v5153, 2102212464
  %v5166 = vsel %vm5162, %v5150, %v5165
  %v5167 = vsel %vm5161, %v5164, %v5166
  %v5168 = vsel %vm5160, %v5147, %v5150
  %v5169 = vsel %vm5163, %v5156, 920167782
  %v5170 = vsel %vm5162, %v5153, %v5169
  %v5171 = vsel %vm5161, %v5168, %v5170
  %v5172 = vsel %vm5160, %v5150, %v5153
  %v5173 = vsel %vm5163, %v5159, 1326507024
  %v5174 = vsel %vm5162, %v5156, %v5173
  %v5175 = vsel %vm5161, %v5172, %v5174
  %v5176 = vshll.u32 %v5136, 8
  %v5177 = vand.u32 %v5176, 65535
  %v5178 = vshrl.u32 %v5176, 16
  %v5179 = vand.u32 %v5175, 65535
  %v5180 = vshrl.u32 %v5175, 16
  %v5181 = vmul.u32 %v5177, %v5179
  %v5182 = vmul.u32 %v5177, %v5180
  %v5183 = vmul.u32 %v5178, %v5179
  %v5184 = vmul.u32 %v5178, %v5180
  %v5185 = vshll.u32 %v5182, 16
  %v5186 = vshrl.u32 %v5182, 16
  %v5187 = vshll.u32 %v5183, 16
  %v5188 = vshrl.u32 %v5183, 16
  %vm5189 = vc.u32 %v5181, %v5185
  %v5190 = vsel %vm5189, 1, 0
  %v5191 = vadd.s32 %v5181, %v5185
  %v5192 = vadd.s32 %v5184, %v5190
  %vm5193 = vc.u32 %v5191, %v5187
  %v5194 = vsel %vm5193, 1, 0
  %v5195 = vadd.s32 %v5191, %v5187
  %v5196 = vadd.s32 %v5192, %v5194
  %v5197 = vadd.s32 %v5196, %v5186
  %v5198 = vadd.s32 %v5197, %v5188
  %v5199 = vand.u32 %v5176, 65535
  %v5200 = vshrl.u32 %v5176, 16
  %v5201 = vand.u32 %v5171, 65535
  %v5202 = vshrl.u32 %v5171, 16
  %v5203 = vmul.u32 %v5199, %v5201
  %v5204 = vmul.u32 %v5199, %v5202
  %v5205 = vmul.u32 %v5200, %v5201
  %v5206 = vmul.u32 %v5200, %v5202
  %v5207 = vshll.u32 %v5204, 16
  %v5208 = vshrl.u32 %v5204, 16
  %v5209 = vshll.u32 %v5205, 16
  %v5210 = vshrl.u32 %v5205, 16
  %vm5211 = vc.u32 %v5203, %v5207
  %v5212 = vsel %vm5211, 1, 0
  %v5213 = vadd.s32 %v5203, %v5207
  %v5214 = vadd.s32 %v5206, %v5212
  %vm5215 = vc.u32 %v5213, %v5209
  %v5216 = vsel %vm5215, 1, 0
  %v5217 = vadd.s32 %v5213, %v5209
  %v5218 = vadd.s32 %v5214, %v5216
  %v5219 = vadd.s32 %v5218, %v5208
  %v5220 = vadd.s32 %v5219, %v5210
  %v5221 = vmul.u32 %v5176, %v5167
  %v5222 = vadd.s32 %v5198, %v5217
  %vm5223 = vc.u32 %v5198, %v5217
  %v5224 = vadd.s32 %v5220, 1
  %v5225 = vsel %vm5223, %v5224, %v5220
  %v5226 = vadd.s32 %v5221, %v5225
  %v5227 = vadd.s32 %v5226, 536870912
  %v5228 = vshrl.u32 %v5227, 30
  %v5229 = vshll.u32 %v5228, 30
  %v5230 = vsub.s32 %v5226, %v5229
  %vm5231 = vcmp.lt.s32.totalorder %v5230, 0
  %v5232 = vsub.s32 0, %v5230
  %v5233 = vsel %vm5231, %v5232, %v5230
  %v5234 = vclz %v5233
  %v5235 = vsub.s32 %v5234, 2
  %vm5236 = vcmp.gt.s32.totalorder 0, %v5235
  %v5237 = vsel %vm5236, 0, %v5235
  %v5238 = vsub.s32 32, %v5237
  %v5239 = vshll.u32 %v5230, %v5237
  %v5240 = vshrl.u32 %v5222, %v5238
  %v5241 = vor.u32 %v5239, %v5240
  %v5242 = vsub.s32 4294967266, %v5237
  %v5243 = vadd.s32 %v5242, 127
  %v5244 = vshll.u32 %v5243, 23
  %v5245 = vor.u32 4788187, %v5244
  %v5246 = vand.u32 2147483647, %v5245
  %v5248 = vcvt.s32.f32 %v5241
  %v5249 = vmul.f32 %v5248, %v5246
  %v5250 = vxor.u32 %v5249, 2147483648
  %v5251 = vsel %vm5130, %v5250, %v5249
  %v5252 = vsub.s32 4, %v5228
  %v5253 = vsel %vm5130, %v5252, %v5228
  %v5254 = vsel %vm5129, %v322, %v5251
  %v5255 = vsel %vm5129, 0, %v5253
  %v5256 = vmul.f32 %v5254, %v5254
  %v5257 = vmul.f32 %v5256, -0.001358992
  %v5258 = vadd.f32 %v5257, 0.041655596
  %v5259 = vmul.f32 %v5256, %v5258
  %v5260 = vadd.f32 %v5259, -0.4999988
  %v5261 = vmul.f32 %v5256, %v5260
  %v5262 = vadd.f32 1.0, %v5261
  %v5263 = vmul.f32 %v5254, %v5254
  %v5264 = vmul.f32 %v5263, -0.00019511016
  %v5265 = vadd.f32 %v5264, 0.008332121
  %v5266 = vmul.f32 %v5263, %v5265
  %v5267 = vadd.f32 %v5266, -0.16666654
  %v5268 = vmul.f32 %v5263, %v5267
  %v5269 = vadd.f32 %v5268, 1.0
  %v5270 = vmul.f32 %v5269, %v5254
  %vm5271 = vweird.f32 %v322
  %v5272 = vadd.s32 %v5255, 3
  %v5273 = vand.u32 %v5272, 3
  %vm5274 = vcmp.lt.s32.totalorder %v5273, 2
  %vm5275 = vcmp.eq.s32.totalorder %v5273, 0
  %v5276 = vxor.u32 %v5270, 2147483648
  %v5277 = vsel %vm5275, %v5262, %v5276
  %vm5278 = vcmp.eq.s32.totalorder %v5273, 2
  %v5279 = vxor.u32 %v5262, 2147483648
  %v5280 = vsel %vm5278, %v5279, %v5270
  %v5281 = vsel %vm5274, %v5277, %v5280
  %v5282 = vsel %vm5271, nan, %v5281
  %v5283 = vpack.c.bf16 %v632, %v477
  %v5284 = vpack.c.bf16 %v942, %v787
  %v5285 = vpack.c.bf16 %v1252, %v1097
  %v5286 = vpack.c.bf16 %v1562, %v1407
  %v5287 = vpack.c.bf16 %v1872, %v1717
  %v5288 = vpack.c.bf16 %v2182, %v2027
  %v5289 = vpack.c.bf16 %v2492, %v2337
  %v5290 = vpack.c.bf16 %v2802, %v2647
  %v5291 = vpack.c.bf16 %v3112, %v2957
  %v5292 = vpack.c.bf16 %v3422, %v3267
  %v5293 = vpack.c.bf16 %v3732, %v3577
  %v5294 = vpack.c.bf16 %v4042, %v3887
  %v5295 = vpack.c.bf16 %v4352, %v4197
  %v5296 = vpack.c.bf16 %v4662, %v4507
  %v5297 = vpack.c.bf16 %v4972, %v4817
  %v5298 = vpack.c.bf16 %v5282, %v5127
  %v5299 = vld [vmem:[%s3] sm:$0xf]
  %v5300 = vld [vmem:[%s3 + $0x4] sm:$0xf]
  %v5301 = vld [vmem:[%s3 + $0x8] sm:$0xf]
  %v5302 = vld [vmem:[%s3 + $0xc] sm:$0xf]
  %v5303 = vld [vmem:[%s3 + $0x10] sm:$0xf]
  %v5304 = vld [vmem:[%s3 + $0x14] sm:$0xf]
  %v5305 = vld [vmem:[%s3 + $0x18] sm:$0xf]
  %v5306 = vld [vmem:[%s3 + $0x1c] sm:$0xf]
  %v5307 = vperm.slane %v93, 0
  %v5316 = vunpack.c.l.b16 %v5299
  %v5317 = vunpack.c.l.b16 %v5300
  %v5318 = vunpack.c.l.b16 %v5301
  %v5319 = vunpack.c.l.b16 %v5302
  %v5320 = vunpack.c.l.b16 %v5303
  %v5321 = vunpack.c.l.b16 %v5304
  %v5322 = vunpack.c.l.b16 %v5305
  %v5323 = vunpack.c.l.b16 %v5306
  %v5324 = vpack.c.b16 %v5317, %v5316
  %v5325 = vpack.c.b16 %v5319, %v5318
  %v5326 = vpack.c.b16 %v5321, %v5320
  %v5327 = vpack.c.b16 %v5323, %v5322
  %vm5332 = vcmask 523264
  %v5334 = vsel %vm5332, %v5283, 0
  %v5337 = vsel %vm5332, %v5284, 0
  %v5340 = vsel %vm5332, %v5285, 0
  %v5343 = vsel %vm5332, %v5286, 0
  %v5346 = vsel %vm5332, %v5287, 0
  %v5349 = vsel %vm5332, %v5288, 0
  %v5352 = vsel %vm5332, %v5289, 0
  %v5355 = vsel %vm5332, %v5290, 0
  %v5358 = vsel %vm5332, %v5291, 0
  %v5361 = vsel %vm5332, %v5292, 0
  %v5364 = vsel %vm5332, %v5293, 0
  %v5367 = vsel %vm5332, %v5294, 0
  %v5370 = vsel %vm5332, %v5295, 0
  %v5373 = vsel %vm5332, %v5296, 0
  %v5376 = vsel %vm5332, %v5297, 0
  %v5379 = vsel %vm5332, %v5298, 0
  %5381 = vmatpush.bf16.msra.mxu0 0
  %5382 = vmatpush.bf16.msra.mxu0 0
  %5383 = vmatpush.bf16.msra.mxu0 0
  %5384 = vmatpush.bf16.msra.mxu0 0
  %5385 = vmatpush.bf16.msra.mxu0 %v5327
  %5386 = vmatpush.bf16.msra.mxu0 %v5326
  %5387 = vmatpush.bf16.msra.mxu0 %v5325
  %5388 = vmatpush.bf16.msra.mxu0 %v5324
  %5389 = vmatmul.bf16.gmra.mxu0 %v5334
  %v5390 = vpop.f32.mrf.mxu0
  %v5391 = vadd.f32 %v5307, %v5390
  %v5392 = vpop.f32.mrf.mxu0
  %v5393 = vadd.f32 %v5307, %v5392
  %5394 = vmatmul.bf16.gmra.mxu0 %v5337
  %v5395 = vpop.f32.mrf.mxu0
  %v5396 = vadd.f32 %v5307, %v5395
  %v5397 = vpop.f32.mrf.mxu0
  %v5398 = vadd.f32 %v5307, %v5397
  %5399 = vmatmul.bf16.gmra.mxu0 %v5340
  %v5400 = vpop.f32.mrf.mxu0
  %v5401 = vadd.f32 %v5307, %v5400
  %v5402 = vpop.f32.mrf.mxu0
  %v5403 = vadd.f32 %v5307, %v5402
  %5404 = vmatmul.bf16.gmra.mxu0 %v5343
  %v5405 = vpop.f32.mrf.mxu0
  %v5406 = vadd.f32 %v5307, %v5405
  %v5407 = vpop.f32.mrf.mxu0
  %v5408 = vadd.f32 %v5307, %v5407
  %5409 = vmatmul.bf16.gmra.mxu0 %v5346
  %v5410 = vpop.f32.mrf.mxu0
  %v5411 = vadd.f32 %v5307, %v5410
  %v5412 = vpop.f32.mrf.mxu0
  %v5413 = vadd.f32 %v5307, %v5412
  %5414 = vmatmul.bf16.gmra.mxu0 %v5349
  %v5415 = vpop.f32.mrf.mxu0
  %v5416 = vadd.f32 %v5307, %v5415
  %v5417 = vpop.f32.mrf.mxu0
  %v5418 = vadd.f32 %v5307, %v5417
  %5419 = vmatmul.bf16.gmra.mxu0 %v5352
  %v5420 = vpop.f32.mrf.mxu0
  %v5421 = vadd.f32 %v5307, %v5420
  %v5422 = vpop.f32.mrf.mxu0
  %v5423 = vadd.f32 %v5307, %v5422
  %5424 = vmatmul.bf16.gmra.mxu0 %v5355
  %v5425 = vpop.f32.mrf.mxu0
  %v5426 = vadd.f32 %v5307, %v5425
  %v5427 = vpop.f32.mrf.mxu0
  %v5428 = vadd.f32 %v5307, %v5427
  %5429 = vmatmul.bf16.gmra.mxu0 %v5358
  %v5430 = vpop.f32.mrf.mxu0
  %v5431 = vadd.f32 %v5307, %v5430
  %v5432 = vpop.f32.mrf.mxu0
  %v5433 = vadd.f32 %v5307, %v5432
  %5434 = vmatmul.bf16.gmra.mxu0 %v5361
  %v5435 = vpop.f32.mrf.mxu0
  %v5436 = vadd.f32 %v5307, %v5435
  %v5437 = vpop.f32.mrf.mxu0
  %v5438 = vadd.f32 %v5307, %v5437
  %5439 = vmatmul.bf16.gmra.mxu0 %v5364
  %v5440 = vpop.f32.mrf.mxu0
  %v5441 = vadd.f32 %v5307, %v5440
  %v5442 = vpop.f32.mrf.mxu0
  %v5443 = vadd.f32 %v5307, %v5442
  %5444 = vmatmul.bf16.gmra.mxu0 %v5367
  %v5445 = vpop.f32.mrf.mxu0
  %v5446 = vadd.f32 %v5307, %v5445
  %v5447 = vpop.f32.mrf.mxu0
  %v5448 = vadd.f32 %v5307, %v5447
  %5449 = vmatmul.bf16.gmra.mxu0 %v5370
  %v5450 = vpop.f32.mrf.mxu0
  %v5451 = vadd.f32 %v5307, %v5450
  %v5452 = vpop.f32.mrf.mxu0
  %v5453 = vadd.f32 %v5307, %v5452
  %5454 = vmatmul.bf16.gmra.mxu0 %v5373
  %v5455 = vpop.f32.mrf.mxu0
  %v5456 = vadd.f32 %v5307, %v5455
  %v5457 = vpop.f32.mrf.mxu0
  %v5458 = vadd.f32 %v5307, %v5457
  %5459 = vmatmul.bf16.gmra.mxu0 %v5376
  %v5460 = vpop.f32.mrf.mxu0
  %v5461 = vadd.f32 %v5307, %v5460
  %v5462 = vpop.f32.mrf.mxu0
  %v5463 = vadd.f32 %v5307, %v5462
  %5464 = vmatmul.bf16.gmra.mxu0 %v5379
  %v5465 = vpop.f32.mrf.mxu0
  %v5466 = vadd.f32 %v5307, %v5465
  %v5467 = vpop.f32.mrf.mxu0
  %v5468 = vadd.f32 %v5307, %v5467
  %5469 = vdwg.mxu0
  %v5470 = vmul.f32 %v5391, %v5391
  %v5471 = vmul.f32 %v5393, %v5393
  %v5472 = vmul.f32 %v5396, %v5396
  %v5473 = vmul.f32 %v5398, %v5398
  %v5474 = vmul.f32 %v5401, %v5401
  %v5475 = vmul.f32 %v5403, %v5403
  %v5476 = vmul.f32 %v5406, %v5406
  %v5477 = vmul.f32 %v5408, %v5408
  %v5478 = vmul.f32 %v5411, %v5411
  %v5479 = vmul.f32 %v5413, %v5413
  %v5480 = vmul.f32 %v5416, %v5416
  %v5481 = vmul.f32 %v5418, %v5418
  %v5482 = vmul.f32 %v5421, %v5421
  %v5483 = vmul.f32 %v5423, %v5423
  %v5484 = vmul.f32 %v5426, %v5426
  %v5485 = vmul.f32 %v5428, %v5428
  %v5486 = vmul.f32 %v5431, %v5431
  %v5487 = vmul.f32 %v5433, %v5433
  %v5488 = vmul.f32 %v5436, %v5436
  %v5489 = vmul.f32 %v5438, %v5438
  %v5490 = vmul.f32 %v5441, %v5441
  %v5491 = vmul.f32 %v5443, %v5443
  %v5492 = vmul.f32 %v5446, %v5446
  %v5493 = vmul.f32 %v5448, %v5448
  %v5494 = vmul.f32 %v5451, %v5451
  %v5495 = vmul.f32 %v5453, %v5453
  %v5496 = vmul.f32 %v5456, %v5456
  %v5497 = vmul.f32 %v5458, %v5458
  %v5498 = vmul.f32 %v5461, %v5461
  %v5499 = vmul.f32 %v5463, %v5463
  %v5500 = vmul.f32 %v5466, %v5466
  %v5501 = vmul.f32 %v5468, %v5468
  %v5502 = vmul.f32 %v5391, %v5470
  %v5503 = vmul.f32 %v5393, %v5471
  %v5504 = vmul.f32 %v5396, %v5472
  %v5505 = vmul.f32 %v5398, %v5473
  %v5506 = vmul.f32 %v5401, %v5474
  %v5507 = vmul.f32 %v5403, %v5475
  %v5508 = vmul.f32 %v5406, %v5476
  %v5509 = vmul.f32 %v5408, %v5477
  %v5510 = vmul.f32 %v5411, %v5478
  %v5511 = vmul.f32 %v5413, %v5479
  %v5512 = vmul.f32 %v5416, %v5480
  %v5513 = vmul.f32 %v5418, %v5481
  %v5514 = vmul.f32 %v5421, %v5482
  %v5515 = vmul.f32 %v5423, %v5483
  %v5516 = vmul.f32 %v5426, %v5484
  %v5517 = vmul.f32 %v5428, %v5485
  %v5518 = vmul.f32 %v5431, %v5486
  %v5519 = vmul.f32 %v5433, %v5487
  %v5520 = vmul.f32 %v5436, %v5488
  %v5521 = vmul.f32 %v5438, %v5489
  %v5522 = vmul.f32 %v5441, %v5490
  %v5523 = vmul.f32 %v5443, %v5491
  %v5524 = vmul.f32 %v5446, %v5492
  %v5525 = vmul.f32 %v5448, %v5493
  %v5526 = vmul.f32 %v5451, %v5494
  %v5527 = vmul.f32 %v5453, %v5495
  %v5528 = vmul.f32 %v5456, %v5496
  %v5529 = vmul.f32 %v5458, %v5497
  %v5530 = vmul.f32 %v5461, %v5498
  %v5531 = vmul.f32 %v5463, %v5499
  %v5532 = vmul.f32 %v5466, %v5500
  %v5533 = vmul.f32 %v5468, %v5501
  %v5534 = vmul.f32 %v5502, 0.044715
  %v5535 = vmul.f32 %v5503, 0.044715
  %v5536 = vmul.f32 %v5504, 0.044715
  %v5537 = vmul.f32 %v5505, 0.044715
  %v5538 = vmul.f32 %v5506, 0.044715
  %v5539 = vmul.f32 %v5507, 0.044715
  %v5540 = vmul.f32 %v5508, 0.044715
  %v5541 = vmul.f32 %v5509, 0.044715
  %v5542 = vmul.f32 %v5510, 0.044715
  %v5543 = vmul.f32 %v5511, 0.044715
  %v5544 = vmul.f32 %v5512, 0.044715
  %v5545 = vmul.f32 %v5513, 0.044715
  %v5546 = vmul.f32 %v5514, 0.044715
  %v5547 = vmul.f32 %v5515, 0.044715
  %v5548 = vmul.f32 %v5516, 0.044715
  %v5549 = vmul.f32 %v5517, 0.044715
  %v5550 = vmul.f32 %v5518, 0.044715
  %v5551 = vmul.f32 %v5519, 0.044715
  %v5552 = vmul.f32 %v5520, 0.044715
  %v5553 = vmul.f32 %v5521, 0.044715
  %v5554 = vmul.f32 %v5522, 0.044715
  %v5555 = vmul.f32 %v5523, 0.044715
  %v5556 = vmul.f32 %v5524, 0.044715
  %v5557 = vmul.f32 %v5525, 0.044715
  %v5558 = vmul.f32 %v5526, 0.044715
  %v5559 = vmul.f32 %v5527, 0.044715
  %v5560 = vmul.f32 %v5528, 0.044715
  %v5561 = vmul.f32 %v5529, 0.044715
  %v5562 = vmul.f32 %v5530, 0.044715
  %v5563 = vmul.f32 %v5531, 0.044715
  %v5564 = vmul.f32 %v5532, 0.044715
  %v5565 = vmul.f32 %v5533, 0.044715
  %v5566 = vadd.f32 %v5391, %v5534
  %v5567 = vadd.f32 %v5393, %v5535
  %v5568 = vadd.f32 %v5396, %v5536
  %v5569 = vadd.f32 %v5398, %v5537
  %v5570 = vadd.f32 %v5401, %v5538
  %v5571 = vadd.f32 %v5403, %v5539
  %v5572 = vadd.f32 %v5406, %v5540
  %v5573 = vadd.f32 %v5408, %v5541
  %v5574 = vadd.f32 %v5411, %v5542
  %v5575 = vadd.f32 %v5413, %v5543
  %v5576 = vadd.f32 %v5416, %v5544
  %v5577 = vadd.f32 %v5418, %v5545
  %v5578 = vadd.f32 %v5421, %v5546
  %v5579 = vadd.f32 %v5423, %v5547
  %v5580 = vadd.f32 %v5426, %v5548
  %v5581 = vadd.f32 %v5428, %v5549
  %v5582 = vadd.f32 %v5431, %v5550
  %v5583 = vadd.f32 %v5433, %v5551
  %v5584 = vadd.f32 %v5436, %v5552
  %v5585 = vadd.f32 %v5438, %v5553
  %v5586 = vadd.f32 %v5441, %v5554
  %v5587 = vadd.f32 %v5443, %v5555
  %v5588 = vadd.f32 %v5446, %v5556
  %v5589 = vadd.f32 %v5448, %v5557
  %v5590 = vadd.f32 %v5451, %v5558
  %v5591 = vadd.f32 %v5453, %v5559
  %v5592 = vadd.f32 %v5456, %v5560
  %v5593 = vadd.f32 %v5458, %v5561
  %v5594 = vadd.f32 %v5461, %v5562
  %v5595 = vadd.f32 %v5463, %v5563
  %v5596 = vadd.f32 %v5466, %v5564
  %v5597 = vadd.f32 %v5468, %v5565
  %v5598 = vmul.f32 %v5566, 0.7978846
  %v5599 = vmul.f32 %v5567, 0.7978846
  %v5600 = vmul.f32 %v5568, 0.7978846
  %v5601 = vmul.f32 %v5569, 0.7978846
  %v5602 = vmul.f32 %v5570, 0.7978846
  %v5603 = vmul.f32 %v5571, 0.7978846
  %v5604 = vmul.f32 %v5572, 0.7978846
  %v5605 = vmul.f32 %v5573, 0.7978846
  %v5606 = vmul.f32 %v5574, 0.7978846
  %v5607 = vmul.f32 %v5575, 0.7978846
  %v5608 = vmul.f32 %v5576, 0.7978846
  %v5609 = vmul.f32 %v5577, 0.7978846
  %v5610 = vmul.f32 %v5578, 0.7978846
  %v5611 = vmul.f32 %v5579, 0.7978846
  %v5612 = vmul.f32 %v5580, 0.7978846
  %v5613 = vmul.f32 %v5581, 0.7978846
  %v5614 = vmul.f32 %v5582, 0.7978846
  %v5615 = vmul.f32 %v5583, 0.7978846
  %v5616 = vmul.f32 %v5584, 0.7978846
  %v5617 = vmul.f32 %v5585, 0.7978846
  %v5618 = vmul.f32 %v5586, 0.7978846
  %v5619 = vmul.f32 %v5587, 0.7978846
  %v5620 = vmul.f32 %v5588, 0.7978846
  %v5621 = vmul.f32 %v5589, 0.7978846
  %v5622 = vmul.f32 %v5590, 0.7978846
  %v5623 = vmul.f32 %v5591, 0.7978846
  %v5624 = vmul.f32 %v5592, 0.7978846
  %v5625 = vmul.f32 %v5593, 0.7978846
  %v5626 = vmul.f32 %v5594, 0.7978846
  %v5627 = vmul.f32 %v5595, 0.7978846
  %v5628 = vmul.f32 %v5596, 0.7978846
  %v5629 = vmul.f32 %v5597, 0.7978846
  %v5630 = vtanh.pop %v5598
  %v5631 = vtanh.pop %v5599
  %v5632 = vtanh.pop %v5600
  %v5633 = vtanh.pop %v5601
  %v5634 = vtanh.pop %v5602
  %v5635 = vtanh.pop %v5603
  %v5636 = vtanh.pop %v5604
  %v5637 = vtanh.pop %v5605
  %v5638 = vtanh.pop %v5606
  %v5639 = vtanh.pop %v5607
  %v5640 = vtanh.pop %v5608
  %v5641 = vtanh.pop %v5609
  %v5642 = vtanh.pop %v5610
  %v5643 = vtanh.pop %v5611
  %v5644 = vtanh.pop %v5612
  %v5645 = vtanh.pop %v5613
  %v5646 = vtanh.pop %v5614
  %v5647 = vtanh.pop %v5615
  %v5648 = vtanh.pop %v5616
  %v5649 = vtanh.pop %v5617
  %v5650 = vtanh.pop %v5618
  %v5651 = vtanh.pop %v5619
  %v5652 = vtanh.pop %v5620
  %v5653 = vtanh.pop %v5621
  %v5654 = vtanh.pop %v5622
  %v5655 = vtanh.pop %v5623
  %v5656 = vtanh.pop %v5624
  %v5657 = vtanh.pop %v5625
  %v5658 = vtanh.pop %v5626
  %v5659 = vtanh.pop %v5627
  %v5660 = vtanh.pop %v5628
  %v5661 = vtanh.pop %v5629
  %v5662 = vadd.f32 %v5630, 1.0
  %v5663 = vadd.f32 %v5631, 1.0
  %v5664 = vadd.f32 %v5632, 1.0
  %v5665 = vadd.f32 %v5633, 1.0
  %v5666 = vadd.f32 %v5634, 1.0
  %v5667 = vadd.f32 %v5635, 1.0
  %v5668 = vadd.f32 %v5636, 1.0
  %v5669 = vadd.f32 %v5637, 1.0
  %v5670 = vadd.f32 %v5638, 1.0
  %v5671 = vadd.f32 %v5639, 1.0
  %v5672 = vadd.f32 %v5640, 1.0
  %v5673 = vadd.f32 %v5641, 1.0
  %v5674 = vadd.f32 %v5642, 1.0
  %v5675 = vadd.f32 %v5643, 1.0
  %v5676 = vadd.f32 %v5644, 1.0
  %v5677 = vadd.f32 %v5645, 1.0
  %v5678 = vadd.f32 %v5646, 1.0
  %v5679 = vadd.f32 %v5647, 1.0
  %v5680 = vadd.f32 %v5648, 1.0
  %v5681 = vadd.f32 %v5649, 1.0
  %v5682 = vadd.f32 %v5650, 1.0
  %v5683 = vadd.f32 %v5651, 1.0
  %v5684 = vadd.f32 %v5652, 1.0
  %v5685 = vadd.f32 %v5653, 1.0
  %v5686 = vadd.f32 %v5654, 1.0
  %v5687 = vadd.f32 %v5655, 1.0
  %v5688 = vadd.f32 %v5656, 1.0
  %v5689 = vadd.f32 %v5657, 1.0
  %v5690 = vadd.f32 %v5658, 1.0
  %v5691 = vadd.f32 %v5659, 1.0
  %v5692 = vadd.f32 %v5660, 1.0
  %v5693 = vadd.f32 %v5661, 1.0
  %v5694 = vmul.f32 %v5662, 0.5
  %v5695 = vmul.f32 %v5663, 0.5
  %v5696 = vmul.f32 %v5664, 0.5
  %v5697 = vmul.f32 %v5665, 0.5
  %v5698 = vmul.f32 %v5666, 0.5
  %v5699 = vmul.f32 %v5667, 0.5
  %v5700 = vmul.f32 %v5668, 0.5
  %v5701 = vmul.f32 %v5669, 0.5
  %v5702 = vmul.f32 %v5670, 0.5
  %v5703 = vmul.f32 %v5671, 0.5
  %v5704 = vmul.f32 %v5672, 0.5
  %v5705 = vmul.f32 %v5673, 0.5
  %v5706 = vmul.f32 %v5674, 0.5
  %v5707 = vmul.f32 %v5675, 0.5
  %v5708 = vmul.f32 %v5676, 0.5
  %v5709 = vmul.f32 %v5677, 0.5
  %v5710 = vmul.f32 %v5678, 0.5
  %v5711 = vmul.f32 %v5679, 0.5
  %v5712 = vmul.f32 %v5680, 0.5
  %v5713 = vmul.f32 %v5681, 0.5
  %v5714 = vmul.f32 %v5682, 0.5
  %v5715 = vmul.f32 %v5683, 0.5
  %v5716 = vmul.f32 %v5684, 0.5
  %v5717 = vmul.f32 %v5685, 0.5
  %v5718 = vmul.f32 %v5686, 0.5
  %v5719 = vmul.f32 %v5687, 0.5
  %v5720 = vmul.f32 %v5688, 0.5
  %v5721 = vmul.f32 %v5689, 0.5
  %v5722 = vmul.f32 %v5690, 0.5
  %v5723 = vmul.f32 %v5691, 0.5
  %v5724 = vmul.f32 %v5692, 0.5
  %v5725 = vmul.f32 %v5693, 0.5
  %v5726 = vmul.f32 %v5391, %v5694
  %v5727 = vmul.f32 %v5393, %v5695
  %v5728 = vmul.f32 %v5396, %v5696
  %v5729 = vmul.f32 %v5398, %v5697
  %v5730 = vmul.f32 %v5401, %v5698
  %v5731 = vmul.f32 %v5403, %v5699
  %v5732 = vmul.f32 %v5406, %v5700
  %v5733 = vmul.f32 %v5408, %v5701
  %v5734 = vmul.f32 %v5411, %v5702
  %v5735 = vmul.f32 %v5413, %v5703
  %v5736 = vmul.f32 %v5416, %v5704
  %v5737 = vmul.f32 %v5418, %v5705
  %v5738 = vmul.f32 %v5421, %v5706
  %v5739 = vmul.f32 %v5423, %v5707
  %v5740 = vmul.f32 %v5426, %v5708
  %v5741 = vmul.f32 %v5428, %v5709
  %v5742 = vmul.f32 %v5431, %v5710
  %v5743 = vmul.f32 %v5433, %v5711
  %v5744 = vmul.f32 %v5436, %v5712
  %v5745 = vmul.f32 %v5438, %v5713
  %v5746 = vmul.f32 %v5441, %v5714
  %v5747 = vmul.f32 %v5443, %v5715
  %v5748 = vmul.f32 %v5446, %v5716
  %v5749 = vmul.f32 %v5448, %v5717
  %v5750 = vmul.f32 %v5451, %v5718
  %v5751 = vmul.f32 %v5453, %v5719
  %v5752 = vmul.f32 %v5456, %v5720
  %v5753 = vmul.f32 %v5458, %v5721
  %v5754 = vmul.f32 %v5461, %v5722
  %v5755 = vmul.f32 %v5463, %v5723
  %v5756 = vmul.f32 %v5466, %v5724
  %v5757 = vmul.f32 %v5468, %v5725
  %5790 = vrot.lane.b32.xlu0 %v5726, 32
  %v5791 = vpop.permute.xlu0 %5790
  %5792 = vrot.lane.b32.xlu0 %v5727, 32
  %v5793 = vpop.permute.xlu0 %5792
  %5794 = vrot.lane.b32.xlu0 %v5728, 32
  %v5795 = vpop.permute.xlu0 %5794
  %5796 = vrot.lane.b32.xlu0 %v5729, 32
  %v5797 = vpop.permute.xlu0 %5796
  %5798 = vrot.lane.b32.xlu0 %v5730, 32
  %v5799 = vpop.permute.xlu0 %5798
  %5800 = vrot.lane.b32.xlu0 %v5731, 32
  %v5801 = vpop.permute.xlu0 %5800
  %5802 = vrot.lane.b32.xlu0 %v5732, 32
  %v5803 = vpop.permute.xlu0 %5802
  %5804 = vrot.lane.b32.xlu0 %v5733, 32
  %v5805 = vpop.permute.xlu0 %5804
  %5806 = vrot.lane.b32.xlu0 %v5734, 32
  %v5807 = vpop.permute.xlu0 %5806
  %5808 = vrot.lane.b32.xlu0 %v5735, 32
  %v5809 = vpop.permute.xlu0 %5808
  %5810 = vrot.lane.b32.xlu0 %v5736, 32
  %v5811 = vpop.permute.xlu0 %5810
  %5812 = vrot.lane.b32.xlu0 %v5737, 32
  %v5813 = vpop.permute.xlu0 %5812
  %5814 = vrot.lane.b32.xlu0 %v5738, 32
  %v5815 = vpop.permute.xlu0 %5814
  %5816 = vrot.lane.b32.xlu0 %v5739, 32
  %v5817 = vpop.permute.xlu0 %5816
  %5818 = vrot.lane.b32.xlu0 %v5740, 32
  %v5819 = vpop.permute.xlu0 %5818
  %5820 = vrot.lane.b32.xlu0 %v5741, 32
  %v5821 = vpop.permute.xlu0 %5820
  %5822 = vrot.lane.b32.xlu0 %v5742, 32
  %v5823 = vpop.permute.xlu0 %5822
  %5824 = vrot.lane.b32.xlu0 %v5743, 32
  %v5825 = vpop.permute.xlu0 %5824
  %5826 = vrot.lane.b32.xlu0 %v5744, 32
  %v5827 = vpop.permute.xlu0 %5826
  %5828 = vrot.lane.b32.xlu0 %v5745, 32
  %v5829 = vpop.permute.xlu0 %5828
  %5830 = vrot.lane.b32.xlu0 %v5746, 32
  %v5831 = vpop.permute.xlu0 %5830
  %5832 = vrot.lane.b32.xlu0 %v5747, 32
  %v5833 = vpop.permute.xlu0 %5832
  %5834 = vrot.lane.b32.xlu0 %v5748, 32
  %v5835 = vpop.permute.xlu0 %5834
  %5836 = vrot.lane.b32.xlu0 %v5749, 32
  %v5837 = vpop.permute.xlu0 %5836
  %5838 = vrot.lane.b32.xlu0 %v5750, 32
  %v5839 = vpop.permute.xlu0 %5838
  %5840 = vrot.lane.b32.xlu0 %v5751, 32
  %v5841 = vpop.permute.xlu0 %5840
  %5842 = vrot.lane.b32.xlu0 %v5752, 32
  %v5843 = vpop.permute.xlu0 %5842
  %5844 = vrot.lane.b32.xlu0 %v5753, 32
  %v5845 = vpop.permute.xlu0 %5844
  %5846 = vrot.lane.b32.xlu0 %v5754, 32
  %v5847 = vpop.permute.xlu0 %5846
  %5848 = vrot.lane.b32.xlu0 %v5755, 32
  %v5849 = vpop.permute.xlu0 %5848
  %5850 = vrot.lane.b32.xlu0 %v5756, 32
  %v5851 = vpop.permute.xlu0 %5850
  %5852 = vrot.lane.b32.xlu0 %v5757, 32
  %v5853 = vpop.permute.xlu0 %5852
  %vm5886 = vcmask 261120
  %v5887 = vsel %vm5886, %v27, %v5791
  %v5888 = vsel %vm5886, %v28, %v5793
  %v5889 = vsel %vm5886, %v29, %v5795
  %v5890 = vsel %vm5886, %v30, %v5797
  %v5891 = vsel %vm5886, %v31, %v5799
  %v5892 = vsel %vm5886, %v32, %v5801
  %v5893 = vsel %vm5886, %v33, %v5803
  %v5894 = vsel %vm5886, %v34, %v5805
  %v5895 = vsel %vm5886, %v35, %v5807
  %v5896 = vsel %vm5886, %v36, %v5809
  %v5897 = vsel %vm5886, %v37, %v5811
  %v5898 = vsel %vm5886, %v38, %v5813
  %v5899 = vsel %vm5886, %v39, %v5815
  %v5900 = vsel %vm5886, %v40, %v5817
  %v5901 = vsel %vm5886, %v41, %v5819
  %v5902 = vsel %vm5886, %v42, %v5821
  %v5903 = vsel %vm5886, %v43, %v5823
  %v5904 = vsel %vm5886, %v44, %v5825
  %v5905 = vsel %vm5886, %v45, %v5827
  %v5906 = vsel %vm5886, %v46, %v5829
  %v5907 = vsel %vm5886, %v47, %v5831
  %v5908 = vsel %vm5886, %v48, %v5833
  %v5909 = vsel %vm5886, %v49, %v5835
  %v5910 = vsel %vm5886, %v50, %v5837
  %v5911 = vsel %vm5886, %v51, %v5839
  %v5912 = vsel %vm5886, %v52, %v5841
  %v5913 = vsel %vm5886, %v53, %v5843
  %v5914 = vsel %vm5886, %v54, %v5845
  %v5915 = vsel %vm5886, %v55, %v5847
  %v5916 = vsel %vm5886, %v56, %v5849
  %v5917 = vsel %vm5886, %v57, %v5851
  %v5918 = vsel %vm5886, %v58, %v5853
  %v5919 = vpack.c.bf16 %v5888, %v5887
  %v5920 = vpack.c.bf16 %v5890, %v5889
  %v5921 = vpack.c.bf16 %v5892, %v5891
  %v5922 = vpack.c.bf16 %v5894, %v5893
  %v5923 = vpack.c.bf16 %v5896, %v5895
  %v5924 = vpack.c.bf16 %v5898, %v5897
  %v5925 = vpack.c.bf16 %v5900, %v5899
  %v5926 = vpack.c.bf16 %v5902, %v5901
  %v5927 = vpack.c.bf16 %v5904, %v5903
  %v5928 = vpack.c.bf16 %v5906, %v5905
  %v5929 = vpack.c.bf16 %v5908, %v5907
  %v5930 = vpack.c.bf16 %v5910, %v5909
  %v5931 = vpack.c.bf16 %v5912, %v5911
  %v5932 = vpack.c.bf16 %v5914, %v5913
  %v5933 = vpack.c.bf16 %v5916, %v5915
  %v5934 = vpack.c.bf16 %v5918, %v5917
  %v5935 = vld [vmem:[%s4] sm:$0xf]
  %v5936 = vld [vmem:[%s4 + $0x4] sm:$0xf]
  %v5937 = vld [vmem:[%s4 + $0x8] sm:$0xf]
  %v5938 = vld [vmem:[%s4 + $0xc] sm:$0xf]
  %v5939 = vld [vmem:[%s4 + $0x10] sm:$0xf]
  %v5940 = vld [vmem:[%s4 + $0x14] sm:$0xf]
  %v5941 = vld [vmem:[%s4 + $0x18] sm:$0xf]
  %v5942 = vld [vmem:[%s4 + $0x1c] sm:$0xf]
  %v5943 = vld [vmem:[%s4 + $0x20] sm:$0xf]
  %v5944 = vld [vmem:[%s4 + $0x24] sm:$0xf]
  %v5945 = vld [vmem:[%s4 + $0x28] sm:$0xf]
  %v5946 = vld [vmem:[%s4 + $0x2c] sm:$0xf]
  %v5947 = vperm.slane %v94, 0
  %v5960 = vunpack.c.l.b16 %v5935
  %v5961 = vunpack.c.l.b16 %v5936
  %v5962 = vunpack.c.l.b16 %v5937
  %v5963 = vunpack.c.l.b16 %v5938
  %v5964 = vunpack.c.l.b16 %v5939
  %v5965 = vunpack.c.l.b16 %v5940
  %v5966 = vunpack.c.l.b16 %v5941
  %v5967 = vunpack.c.l.b16 %v5942
  %v5968 = vunpack.c.l.b16 %v5943
  %v5969 = vunpack.c.l.b16 %v5944
  %v5970 = vunpack.c.l.b16 %v5945
  %v5971 = vunpack.c.l.b16 %v5946
  %v5972 = vpack.c.b16 %v5961, %v5960
  %v5973 = vpack.c.b16 %v5963, %v5962
  %v5974 = vpack.c.b16 %v5965, %v5964
  %v5975 = vpack.c.b16 %v5967, %v5966
  %v5976 = vpack.c.b16 %v5969, %v5968
  %v5977 = vpack.c.b16 %v5971, %v5970
  %vm5984 = vcmask 785408
  %v5986 = vsel %vm5984, %v5919, 0
  %v5989 = vsel %vm5984, %v5920, 0
  %v5992 = vsel %vm5984, %v5921, 0
  %v5995 = vsel %vm5984, %v5922, 0
  %v5998 = vsel %vm5984, %v5923, 0
  %v6001 = vsel %vm5984, %v5924, 0
  %v6004 = vsel %vm5984, %v5925, 0
  %v6007 = vsel %vm5984, %v5926, 0
  %v6010 = vsel %vm5984, %v5927, 0
  %v6013 = vsel %vm5984, %v5928, 0
  %v6016 = vsel %vm5984, %v5929, 0
  %v6019 = vsel %vm5984, %v5930, 0
  %v6022 = vsel %vm5984, %v5931, 0
  %v6025 = vsel %vm5984, %v5932, 0
  %v6028 = vsel %vm5984, %v5933, 0
  %v6031 = vsel %vm5984, %v5934, 0
  %6033 = vmatpush.bf16.msra.mxu0 0
  %6034 = vmatpush.bf16.msra.mxu0 0
  %6035 = vmatpush.bf16.msra.mxu0 %v5977
  %6036 = vmatpush.bf16.msra.mxu0 %v5976
  %6037 = vmatpush.bf16.msra.mxu0 %v5975
  %6038 = vmatpush.bf16.msra.mxu0 %v5974
  %6039 = vmatpush.bf16.msra.mxu0 %v5973
  %6040 = vmatpush.bf16.msra.mxu0 %v5972
  %6041 = vmatmul.bf16.gmra.mxu0 %v5986
  %v6042 = vpop.f32.mrf.mxu0
  %v6043 = vadd.f32 %v5947, %v6042
  %v6044 = vpop.f32.mrf.mxu0
  %v6045 = vadd.f32 %v5947, %v6044
  %6046 = vmatmul.bf16.gmra.mxu0 %v5989
  %v6047 = vpop.f32.mrf.mxu0
  %v6048 = vadd.f32 %v5947, %v6047
  %v6049 = vpop.f32.mrf.mxu0
  %v6050 = vadd.f32 %v5947, %v6049
  %6051 = vmatmul.bf16.gmra.mxu0 %v5992
  %v6052 = vpop.f32.mrf.mxu0
  %v6053 = vadd.f32 %v5947, %v6052
  %v6054 = vpop.f32.mrf.mxu0
  %v6055 = vadd.f32 %v5947, %v6054
  %6056 = vmatmul.bf16.gmra.mxu0 %v5995
  %v6057 = vpop.f32.mrf.mxu0
  %v6058 = vadd.f32 %v5947, %v6057
  %v6059 = vpop.f32.mrf.mxu0
  %v6060 = vadd.f32 %v5947, %v6059
  %6061 = vmatmul.bf16.gmra.mxu0 %v5998
  %v6062 = vpop.f32.mrf.mxu0
  %v6063 = vadd.f32 %v5947, %v6062
  %v6064 = vpop.f32.mrf.mxu0
  %v6065 = vadd.f32 %v5947, %v6064
  %6066 = vmatmul.bf16.gmra.mxu0 %v6001
  %v6067 = vpop.f32.mrf.mxu0
  %v6068 = vadd.f32 %v5947, %v6067
  %v6069 = vpop.f32.mrf.mxu0
  %v6070 = vadd.f32 %v5947, %v6069
  %6071 = vmatmul.bf16.gmra.mxu0 %v6004
  %v6072 = vpop.f32.mrf.mxu0
  %v6073 = vadd.f32 %v5947, %v6072
  %v6074 = vpop.f32.mrf.mxu0
  %v6075 = vadd.f32 %v5947, %v6074
  %6076 = vmatmul.bf16.gmra.mxu0 %v6007
  %v6077 = vpop.f32.mrf.mxu0
  %v6078 = vadd.f32 %v5947, %v6077
  %v6079 = vpop.f32.mrf.mxu0
  %v6080 = vadd.f32 %v5947, %v6079
  %6081 = vmatmul.bf16.gmra.mxu0 %v6010
  %v6082 = vpop.f32.mrf.mxu0
  %v6083 = vadd.f32 %v5947, %v6082
  %v6084 = vpop.f32.mrf.mxu0
  %v6085 = vadd.f32 %v5947, %v6084
  %6086 = vmatmul.bf16.gmra.mxu0 %v6013
  %v6087 = vpop.f32.mrf.mxu0
  %v6088 = vadd.f32 %v5947, %v6087
  %v6089 = vpop.f32.mrf.mxu0
  %v6090 = vadd.f32 %v5947, %v6089
  %6091 = vmatmul.bf16.gmra.mxu0 %v6016
  %v6092 = vpop.f32.mrf.mxu0
  %v6093 = vadd.f32 %v5947, %v6092
  %v6094 = vpop.f32.mrf.mxu0
  %v6095 = vadd.f32 %v5947, %v6094
  %6096 = vmatmul.bf16.gmra.mxu0 %v6019
  %v6097 = vpop.f32.mrf.mxu0
  %v6098 = vadd.f32 %v5947, %v6097
  %v6099 = vpop.f32.mrf.mxu0
  %v6100 = vadd.f32 %v5947, %v6099
  %6101 = vmatmul.bf16.gmra.mxu0 %v6022
  %v6102 = vpop.f32.mrf.mxu0
  %v6103 = vadd.f32 %v5947, %v6102
  %v6104 = vpop.f32.mrf.mxu0
  %v6105 = vadd.f32 %v5947, %v6104
  %6106 = vmatmul.bf16.gmra.mxu0 %v6025
  %v6107 = vpop.f32.mrf.mxu0
  %v6108 = vadd.f32 %v5947, %v6107
  %v6109 = vpop.f32.mrf.mxu0
  %v6110 = vadd.f32 %v5947, %v6109
  %6111 = vmatmul.bf16.gmra.mxu0 %v6028
  %v6112 = vpop.f32.mrf.mxu0
  %v6113 = vadd.f32 %v5947, %v6112
  %v6114 = vpop.f32.mrf.mxu0
  %v6115 = vadd.f32 %v5947, %v6114
  %6116 = vmatmul.bf16.gmra.mxu0 %v6031
  %v6117 = vpop.f32.mrf.mxu0
  %v6118 = vadd.f32 %v5947, %v6117
  %v6119 = vpop.f32.mrf.mxu0
  %v6120 = vadd.f32 %v5947, %v6119
  %6121 = vdwg.mxu0
  %v6122 = vpack.c.bf16 %v6045, %v6043
  %v6123 = vpack.c.bf16 %v6050, %v6048
  %v6124 = vpack.c.bf16 %v6055, %v6053
  %v6125 = vpack.c.bf16 %v6060, %v6058
  %v6126 = vpack.c.bf16 %v6065, %v6063
  %v6127 = vpack.c.bf16 %v6070, %v6068
  %v6128 = vpack.c.bf16 %v6075, %v6073
  %v6129 = vpack.c.bf16 %v6080, %v6078
  %v6130 = vpack.c.bf16 %v6085, %v6083
  %v6131 = vpack.c.bf16 %v6090, %v6088
  %v6132 = vpack.c.bf16 %v6095, %v6093
  %v6133 = vpack.c.bf16 %v6100, %v6098
  %v6134 = vpack.c.bf16 %v6105, %v6103
  %v6135 = vpack.c.bf16 %v6110, %v6108
  %v6136 = vpack.c.bf16 %v6115, %v6113
  %v6137 = vpack.c.bf16 %v6120, %v6118
  %v6138 = vld [vmem:[%s5] sm:$0xf]
  %v6139 = vld [vmem:[%s5 + $0x4] sm:$0xf]
  %v6140 = vld [vmem:[%s5 + $0x8] sm:$0xf]
  %v6141 = vld [vmem:[%s5 + $0xc] sm:$0xf]
  %v6142 = vld [vmem:[%s5 + $0x10] sm:$0xf]
  %v6143 = vld [vmem:[%s5 + $0x14] sm:$0xf]
  %v6144 = vld [vmem:[%s5 + $0x18] sm:$0xf]
  %v6145 = vld [vmem:[%s5 + $0x1c] sm:$0xf]
  %v6146 = vperm.slane %v95, 0
  %v6155 = vunpack.c.l.b16 %v6138
  %v6156 = vunpack.c.l.b16 %v6139
  %v6157 = vunpack.c.l.b16 %v6140
  %v6158 = vunpack.c.l.b16 %v6141
  %v6159 = vunpack.c.l.b16 %v6142
  %v6160 = vunpack.c.l.b16 %v6143
  %v6161 = vunpack.c.l.b16 %v6144
  %v6162 = vunpack.c.l.b16 %v6145
  %v6163 = vpack.c.b16 %v6156, %v6155
  %v6164 = vpack.c.b16 %v6158, %v6157
  %v6165 = vpack.c.b16 %v6160, %v6159
  %v6166 = vpack.c.b16 %v6162, %v6161
  %v6172 = vsel %vm5332, %v6122, 0
  %v6175 = vsel %vm5332, %v6123, 0
  %v6178 = vsel %vm5332, %v6124, 0
  %v6181 = vsel %vm5332, %v6125, 0
  %v6184 = vsel %vm5332, %v6126, 0
  %v6187 = vsel %vm5332, %v6127, 0
  %v6190 = vsel %vm5332, %v6128, 0
  %v6193 = vsel %vm5332, %v6129, 0
  %v6196 = vsel %vm5332, %v6130, 0
  %v6199 = vsel %vm5332, %v6131, 0
  %v6202 = vsel %vm5332, %v6132, 0
  %v6205 = vsel %vm5332, %v6133, 0
  %v6208 = vsel %vm5332, %v6134, 0
  %v6211 = vsel %vm5332, %v6135, 0
  %v6214 = vsel %vm5332, %v6136, 0
  %v6217 = vsel %vm5332, %v6137, 0
  %6219 = vmatpush.bf16.msra.mxu0 0
  %6220 = vmatpush.bf16.msra.mxu0 0
  %6221 = vmatpush.bf16.msra.mxu0 0
  %6222 = vmatpush.bf16.msra.mxu0 0
  %6223 = vmatpush.bf16.msra.mxu0 %v6166
  %6224 = vmatpush.bf16.msra.mxu0 %v6165
  %6225 = vmatpush.bf16.msra.mxu0 %v6164
  %6226 = vmatpush.bf16.msra.mxu0 %v6163
  %6227 = vmatmul.bf16.gmra.mxu0 %v6172
  %v6228 = vpop.f32.mrf.mxu0
  %v6229 = vadd.f32 %v6146, %v6228
  %v6230 = vpop.f32.mrf.mxu0
  %v6231 = vadd.f32 %v6146, %v6230
  %6232 = vmatmul.bf16.gmra.mxu0 %v6175
  %v6233 = vpop.f32.mrf.mxu0
  %v6234 = vadd.f32 %v6146, %v6233
  %v6235 = vpop.f32.mrf.mxu0
  %v6236 = vadd.f32 %v6146, %v6235
  %6237 = vmatmul.bf16.gmra.mxu0 %v6178
  %v6238 = vpop.f32.mrf.mxu0
  %v6239 = vadd.f32 %v6146, %v6238
  %v6240 = vpop.f32.mrf.mxu0
  %v6241 = vadd.f32 %v6146, %v6240
  %6242 = vmatmul.bf16.gmra.mxu0 %v6181
  %v6243 = vpop.f32.mrf.mxu0
  %v6244 = vadd.f32 %v6146, %v6243
  %v6245 = vpop.f32.mrf.mxu0
  %v6246 = vadd.f32 %v6146, %v6245
  %6247 = vmatmul.bf16.gmra.mxu0 %v6184
  %v6248 = vpop.f32.mrf.mxu0
  %v6249 = vadd.f32 %v6146, %v6248
  %v6250 = vpop.f32.mrf.mxu0
  %v6251 = vadd.f32 %v6146, %v6250
  %6252 = vmatmul.bf16.gmra.mxu0 %v6187
  %v6253 = vpop.f32.mrf.mxu0
  %v6254 = vadd.f32 %v6146, %v6253
  %v6255 = vpop.f32.mrf.mxu0
  %v6256 = vadd.f32 %v6146, %v6255
  %6257 = vmatmul.bf16.gmra.mxu0 %v6190
  %v6258 = vpop.f32.mrf.mxu0
  %v6259 = vadd.f32 %v6146, %v6258
  %v6260 = vpop.f32.mrf.mxu0
  %v6261 = vadd.f32 %v6146, %v6260
  %6262 = vmatmul.bf16.gmra.mxu0 %v6193
  %v6263 = vpop.f32.mrf.mxu0
  %v6264 = vadd.f32 %v6146, %v6263
  %v6265 = vpop.f32.mrf.mxu0
  %v6266 = vadd.f32 %v6146, %v6265
  %6267 = vmatmul.bf16.gmra.mxu0 %v6196
  %v6268 = vpop.f32.mrf.mxu0
  %v6269 = vadd.f32 %v6146, %v6268
  %v6270 = vpop.f32.mrf.mxu0
  %v6271 = vadd.f32 %v6146, %v6270
  %6272 = vmatmul.bf16.gmra.mxu0 %v6199
  %v6273 = vpop.f32.mrf.mxu0
  %v6274 = vadd.f32 %v6146, %v6273
  %v6275 = vpop.f32.mrf.mxu0
  %v6276 = vadd.f32 %v6146, %v6275
  %6277 = vmatmul.bf16.gmra.mxu0 %v6202
  %v6278 = vpop.f32.mrf.mxu0
  %v6279 = vadd.f32 %v6146, %v6278
  %v6280 = vpop.f32.mrf.mxu0
  %v6281 = vadd.f32 %v6146, %v6280
  %6282 = vmatmul.bf16.gmra.mxu0 %v6205
  %v6283 = vpop.f32.mrf.mxu0
  %v6284 = vadd.f32 %v6146, %v6283
  %v6285 = vpop.f32.mrf.mxu0
  %v6286 = vadd.f32 %v6146, %v6285
  %6287 = vmatmul.bf16.gmra.mxu0 %v6208
  %v6288 = vpop.f32.mrf.mxu0
  %v6289 = vadd.f32 %v6146, %v6288
  %v6290 = vpop.f32.mrf.mxu0
  %v6291 = vadd.f32 %v6146, %v6290
  %6292 = vmatmul.bf16.gmra.mxu0 %v6211
  %v6293 = vpop.f32.mrf.mxu0
  %v6294 = vadd.f32 %v6146, %v6293
  %v6295 = vpop.f32.mrf.mxu0
  %v6296 = vadd.f32 %v6146, %v6295
  %6297 = vmatmul.bf16.gmra.mxu0 %v6214
  %v6298 = vpop.f32.mrf.mxu0
  %v6299 = vadd.f32 %v6146, %v6298
  %v6300 = vpop.f32.mrf.mxu0
  %v6301 = vadd.f32 %v6146, %v6300
  %6302 = vmatmul.bf16.gmra.mxu0 %v6217
  %v6303 = vpop.f32.mrf.mxu0
  %v6304 = vadd.f32 %v6146, %v6303
  %v6305 = vpop.f32.mrf.mxu0
  %v6306 = vadd.f32 %v6146, %v6305
  %6307 = vdwg.mxu0
  %v6308 = vmul.f32 %v6229, %v6229
  %v6309 = vmul.f32 %v6231, %v6231
  %v6310 = vmul.f32 %v6234, %v6234
  %v6311 = vmul.f32 %v6236, %v6236
  %v6312 = vmul.f32 %v6239, %v6239
  %v6313 = vmul.f32 %v6241, %v6241
  %v6314 = vmul.f32 %v6244, %v6244
  %v6315 = vmul.f32 %v6246, %v6246
  %v6316 = vmul.f32 %v6249, %v6249
  %v6317 = vmul.f32 %v6251, %v6251
  %v6318 = vmul.f32 %v6254, %v6254
  %v6319 = vmul.f32 %v6256, %v6256
  %v6320 = vmul.f32 %v6259, %v6259
  %v6321 = vmul.f32 %v6261, %v6261
  %v6322 = vmul.f32 %v6264, %v6264
  %v6323 = vmul.f32 %v6266, %v6266
  %v6324 = vmul.f32 %v6269, %v6269
  %v6325 = vmul.f32 %v6271, %v6271
  %v6326 = vmul.f32 %v6274, %v6274
  %v6327 = vmul.f32 %v6276, %v6276
  %v6328 = vmul.f32 %v6279, %v6279
  %v6329 = vmul.f32 %v6281, %v6281
  %v6330 = vmul.f32 %v6284, %v6284
  %v6331 = vmul.f32 %v6286, %v6286
  %v6332 = vmul.f32 %v6289, %v6289
  %v6333 = vmul.f32 %v6291, %v6291
  %v6334 = vmul.f32 %v6294, %v6294
  %v6335 = vmul.f32 %v6296, %v6296
  %v6336 = vmul.f32 %v6299, %v6299
  %v6337 = vmul.f32 %v6301, %v6301
  %v6338 = vmul.f32 %v6304, %v6304
  %v6339 = vmul.f32 %v6306, %v6306
  %v6340 = vmul.f32 %v6229, %v6308
  %v6341 = vmul.f32 %v6231, %v6309
  %v6342 = vmul.f32 %v6234, %v6310
  %v6343 = vmul.f32 %v6236, %v6311
  %v6344 = vmul.f32 %v6239, %v6312
  %v6345 = vmul.f32 %v6241, %v6313
  %v6346 = vmul.f32 %v6244, %v6314
  %v6347 = vmul.f32 %v6246, %v6315
  %v6348 = vmul.f32 %v6249, %v6316
  %v6349 = vmul.f32 %v6251, %v6317
  %v6350 = vmul.f32 %v6254, %v6318
  %v6351 = vmul.f32 %v6256, %v6319
  %v6352 = vmul.f32 %v6259, %v6320
  %v6353 = vmul.f32 %v6261, %v6321
  %v6354 = vmul.f32 %v6264, %v6322
  %v6355 = vmul.f32 %v6266, %v6323
  %v6356 = vmul.f32 %v6269, %v6324
  %v6357 = vmul.f32 %v6271, %v6325
  %v6358 = vmul.f32 %v6274, %v6326
  %v6359 = vmul.f32 %v6276, %v6327
  %v6360 = vmul.f32 %v6279, %v6328
  %v6361 = vmul.f32 %v6281, %v6329
  %v6362 = vmul.f32 %v6284, %v6330
  %v6363 = vmul.f32 %v6286, %v6331
  %v6364 = vmul.f32 %v6289, %v6332
  %v6365 = vmul.f32 %v6291, %v6333
  %v6366 = vmul.f32 %v6294, %v6334
  %v6367 = vmul.f32 %v6296, %v6335
  %v6368 = vmul.f32 %v6299, %v6336
  %v6369 = vmul.f32 %v6301, %v6337
  %v6370 = vmul.f32 %v6304, %v6338
  %v6371 = vmul.f32 %v6306, %v6339
  %v6372 = vmul.f32 %v6340, 0.044715
  %v6373 = vmul.f32 %v6341, 0.044715
  %v6374 = vmul.f32 %v6342, 0.044715
  %v6375 = vmul.f32 %v6343, 0.044715
  %v6376 = vmul.f32 %v6344, 0.044715
  %v6377 = vmul.f32 %v6345, 0.044715
  %v6378 = vmul.f32 %v6346, 0.044715
  %v6379 = vmul.f32 %v6347, 0.044715
  %v6380 = vmul.f32 %v6348, 0.044715
  %v6381 = vmul.f32 %v6349, 0.044715
  %v6382 = vmul.f32 %v6350, 0.044715
  %v6383 = vmul.f32 %v6351, 0.044715
  %v6384 = vmul.f32 %v6352, 0.044715
  %v6385 = vmul.f32 %v6353, 0.044715
  %v6386 = vmul.f32 %v6354, 0.044715
  %v6387 = vmul.f32 %v6355, 0.044715
  %v6388 = vmul.f32 %v6356, 0.044715
  %v6389 = vmul.f32 %v6357, 0.044715
  %v6390 = vmul.f32 %v6358, 0.044715
  %v6391 = vmul.f32 %v6359, 0.044715
  %v6392 = vmul.f32 %v6360, 0.044715
  %v6393 = vmul.f32 %v6361, 0.044715
  %v6394 = vmul.f32 %v6362, 0.044715
  %v6395 = vmul.f32 %v6363, 0.044715
  %v6396 = vmul.f32 %v6364, 0.044715
  %v6397 = vmul.f32 %v6365, 0.044715
  %v6398 = vmul.f32 %v6366, 0.044715
  %v6399 = vmul.f32 %v6367, 0.044715
  %v6400 = vmul.f32 %v6368, 0.044715
  %v6401 = vmul.f32 %v6369, 0.044715
  %v6402 = vmul.f32 %v6370, 0.044715
  %v6403 = vmul.f32 %v6371, 0.044715
  %v6404 = vadd.f32 %v6229, %v6372
  %v6405 = vadd.f32 %v6231, %v6373
  %v6406 = vadd.f32 %v6234, %v6374
  %v6407 = vadd.f32 %v6236, %v6375
  %v6408 = vadd.f32 %v6239, %v6376
  %v6409 = vadd.f32 %v6241, %v6377
  %v6410 = vadd.f32 %v6244, %v6378
  %v6411 = vadd.f32 %v6246, %v6379
  %v6412 = vadd.f32 %v6249, %v6380
  %v6413 = vadd.f32 %v6251, %v6381
  %v6414 = vadd.f32 %v6254, %v6382
  %v6415 = vadd.f32 %v6256, %v6383
  %v6416 = vadd.f32 %v6259, %v6384
  %v6417 = vadd.f32 %v6261, %v6385
  %v6418 = vadd.f32 %v6264, %v6386
  %v6419 = vadd.f32 %v6266, %v6387
  %v6420 = vadd.f32 %v6269, %v6388
  %v6421 = vadd.f32 %v6271, %v6389
  %v6422 = vadd.f32 %v6274, %v6390
  %v6423 = vadd.f32 %v6276, %v6391
  %v6424 = vadd.f32 %v6279, %v6392
  %v6425 = vadd.f32 %v6281, %v6393
  %v6426 = vadd.f32 %v6284, %v6394
  %v6427 = vadd.f32 %v6286, %v6395
  %v6428 = vadd.f32 %v6289, %v6396
  %v6429 = vadd.f32 %v6291, %v6397
  %v6430 = vadd.f32 %v6294, %v6398
  %v6431 = vadd.f32 %v6296, %v6399
  %v6432 = vadd.f32 %v6299, %v6400
  %v6433 = vadd.f32 %v6301, %v6401
  %v6434 = vadd.f32 %v6304, %v6402
  %v6435 = vadd.f32 %v6306, %v6403
  %v6436 = vmul.f32 %v6404, 0.7978846
  %v6437 = vmul.f32 %v6405, 0.7978846
  %v6438 = vmul.f32 %v6406, 0.7978846
  %v6439 = vmul.f32 %v6407, 0.7978846
  %v6440 = vmul.f32 %v6408, 0.7978846
  %v6441 = vmul.f32 %v6409, 0.7978846
  %v6442 = vmul.f32 %v6410, 0.7978846
  %v6443 = vmul.f32 %v6411, 0.7978846
  %v6444 = vmul.f32 %v6412, 0.7978846
  %v6445 = vmul.f32 %v6413, 0.7978846
  %v6446 = vmul.f32 %v6414, 0.7978846
  %v6447 = vmul.f32 %v6415, 0.7978846
  %v6448 = vmul.f32 %v6416, 0.7978846
  %v6449 = vmul.f32 %v6417, 0.7978846
  %v6450 = vmul.f32 %v6418, 0.7978846
  %v6451 = vmul.f32 %v6419, 0.7978846
  %v6452 = vmul.f32 %v6420, 0.7978846
  %v6453 = vmul.f32 %v6421, 0.7978846
  %v6454 = vmul.f32 %v6422, 0.7978846
  %v6455 = vmul.f32 %v6423, 0.7978846
  %v6456 = vmul.f32 %v6424, 0.7978846
  %v6457 = vmul.f32 %v6425, 0.7978846
  %v6458 = vmul.f32 %v6426, 0.7978846
  %v6459 = vmul.f32 %v6427, 0.7978846
  %v6460 = vmul.f32 %v6428, 0.7978846
  %v6461 = vmul.f32 %v6429, 0.7978846
  %v6462 = vmul.f32 %v6430, 0.7978846
  %v6463 = vmul.f32 %v6431, 0.7978846
  %v6464 = vmul.f32 %v6432, 0.7978846
  %v6465 = vmul.f32 %v6433, 0.7978846
  %v6466 = vmul.f32 %v6434, 0.7978846
  %v6467 = vmul.f32 %v6435, 0.7978846
  %v6468 = vtanh.pop %v6436
  %v6469 = vtanh.pop %v6437
  %v6470 = vtanh.pop %v6438
  %v6471 = vtanh.pop %v6439
  %v6472 = vtanh.pop %v6440
  %v6473 = vtanh.pop %v6441
  %v6474 = vtanh.pop %v6442
  %v6475 = vtanh.pop %v6443
  %v6476 = vtanh.pop %v6444
  %v6477 = vtanh.pop %v6445
  %v6478 = vtanh.pop %v6446
  %v6479 = vtanh.pop %v6447
  %v6480 = vtanh.pop %v6448
  %v6481 = vtanh.pop %v6449
  %v6482 = vtanh.pop %v6450
  %v6483 = vtanh.pop %v6451
  %v6484 = vtanh.pop %v6452
  %v6485 = vtanh.pop %v6453
  %v6486 = vtanh.pop %v6454
  %v6487 = vtanh.pop %v6455
  %v6488 = vtanh.pop %v6456
  %v6489 = vtanh.pop %v6457
  %v6490 = vtanh.pop %v6458
  %v6491 = vtanh.pop %v6459
  %v6492 = vtanh.pop %v6460
  %v6493 = vtanh.pop %v6461
  %v6494 = vtanh.pop %v6462
  %v6495 = vtanh.pop %v6463
  %v6496 = vtanh.pop %v6464
  %v6497 = vtanh.pop %v6465
  %v6498 = vtanh.pop %v6466
  %v6499 = vtanh.pop %v6467
  %v6500 = vadd.f32 %v6468, 1.0
  %v6501 = vadd.f32 %v6469, 1.0
  %v6502 = vadd.f32 %v6470, 1.0
  %v6503 = vadd.f32 %v6471, 1.0
  %v6504 = vadd.f32 %v6472, 1.0
  %v6505 = vadd.f32 %v6473, 1.0
  %v6506 = vadd.f32 %v6474, 1.0
  %v6507 = vadd.f32 %v6475, 1.0
  %v6508 = vadd.f32 %v6476, 1.0
  %v6509 = vadd.f32 %v6477, 1.0
  %v6510 = vadd.f32 %v6478, 1.0
  %v6511 = vadd.f32 %v6479, 1.0
  %v6512 = vadd.f32 %v6480, 1.0
  %v6513 = vadd.f32 %v6481, 1.0
  %v6514 = vadd.f32 %v6482, 1.0
  %v6515 = vadd.f32 %v6483, 1.0
  %v6516 = vadd.f32 %v6484, 1.0
  %v6517 = vadd.f32 %v6485, 1.0
  %v6518 = vadd.f32 %v6486, 1.0
  %v6519 = vadd.f32 %v6487, 1.0
  %v6520 = vadd.f32 %v6488, 1.0
  %v6521 = vadd.f32 %v6489, 1.0
  %v6522 = vadd.f32 %v6490, 1.0
  %v6523 = vadd.f32 %v6491, 1.0
  %v6524 = vadd.f32 %v6492, 1.0
  %v6525 = vadd.f32 %v6493, 1.0
  %v6526 = vadd.f32 %v6494, 1.0
  %v6527 = vadd.f32 %v6495, 1.0
  %v6528 = vadd.f32 %v6496, 1.0
  %v6529 = vadd.f32 %v6497, 1.0
  %v6530 = vadd.f32 %v6498, 1.0
  %v6531 = vadd.f32 %v6499, 1.0
  %v6532 = vmul.f32 %v6500, 0.5
  %v6533 = vmul.f32 %v6501, 0.5
  %v6534 = vmul.f32 %v6502, 0.5
  %v6535 = vmul.f32 %v6503, 0.5
  %v6536 = vmul.f32 %v6504, 0.5
  %v6537 = vmul.f32 %v6505, 0.5
  %v6538 = vmul.f32 %v6506, 0.5
  %v6539 = vmul.f32 %v6507, 0.5
  %v6540 = vmul.f32 %v6508, 0.5
  %v6541 = vmul.f32 %v6509, 0.5
  %v6542 = vmul.f32 %v6510, 0.5
  %v6543 = vmul.f32 %v6511, 0.5
  %v6544 = vmul.f32 %v6512, 0.5
  %v6545 = vmul.f32 %v6513, 0.5
  %v6546 = vmul.f32 %v6514, 0.5
  %v6547 = vmul.f32 %v6515, 0.5
  %v6548 = vmul.f32 %v6516, 0.5
  %v6549 = vmul.f32 %v6517, 0.5
  %v6550 = vmul.f32 %v6518, 0.5
  %v6551 = vmul.f32 %v6519, 0.5
  %v6552 = vmul.f32 %v6520, 0.5
  %v6553 = vmul.f32 %v6521, 0.5
  %v6554 = vmul.f32 %v6522, 0.5
  %v6555 = vmul.f32 %v6523, 0.5
  %v6556 = vmul.f32 %v6524, 0.5
  %v6557 = vmul.f32 %v6525, 0.5
  %v6558 = vmul.f32 %v6526, 0.5
  %v6559 = vmul.f32 %v6527, 0.5
  %v6560 = vmul.f32 %v6528, 0.5
  %v6561 = vmul.f32 %v6529, 0.5
  %v6562 = vmul.f32 %v6530, 0.5
  %v6563 = vmul.f32 %v6531, 0.5
  %v6564 = vmul.f32 %v6229, %v6532
  %v6565 = vmul.f32 %v6231, %v6533
  %v6566 = vmul.f32 %v6234, %v6534
  %v6567 = vmul.f32 %v6236, %v6535
  %v6568 = vmul.f32 %v6239, %v6536
  %v6569 = vmul.f32 %v6241, %v6537
  %v6570 = vmul.f32 %v6244, %v6538
  %v6571 = vmul.f32 %v6246, %v6539
  %v6572 = vmul.f32 %v6249, %v6540
  %v6573 = vmul.f32 %v6251, %v6541
  %v6574 = vmul.f32 %v6254, %v6542
  %v6575 = vmul.f32 %v6256, %v6543
  %v6576 = vmul.f32 %v6259, %v6544
  %v6577 = vmul.f32 %v6261, %v6545
  %v6578 = vmul.f32 %v6264, %v6546
  %v6579 = vmul.f32 %v6266, %v6547
  %v6580 = vmul.f32 %v6269, %v6548
  %v6581 = vmul.f32 %v6271, %v6549
  %v6582 = vmul.f32 %v6274, %v6550
  %v6583 = vmul.f32 %v6276, %v6551
  %v6584 = vmul.f32 %v6279, %v6552
  %v6585 = vmul.f32 %v6281, %v6553
  %v6586 = vmul.f32 %v6284, %v6554
  %v6587 = vmul.f32 %v6286, %v6555
  %v6588 = vmul.f32 %v6289, %v6556
  %v6589 = vmul.f32 %v6291, %v6557
  %v6590 = vmul.f32 %v6294, %v6558
  %v6591 = vmul.f32 %v6296, %v6559
  %v6592 = vmul.f32 %v6299, %v6560
  %v6593 = vmul.f32 %v6301, %v6561
  %v6594 = vmul.f32 %v6304, %v6562
  %v6595 = vmul.f32 %v6306, %v6563
  %v6596 = vadd.f32 %v6043, %v6564
  %v6597 = vadd.f32 %v6045, %v6565
  %v6598 = vadd.f32 %v6048, %v6566
  %v6599 = vadd.f32 %v6050, %v6567
  %v6600 = vadd.f32 %v6053, %v6568
  %v6601 = vadd.f32 %v6055, %v6569
  %v6602 = vadd.f32 %v6058, %v6570
  %v6603 = vadd.f32 %v6060, %v6571
  %v6604 = vadd.f32 %v6063, %v6572
  %v6605 = vadd.f32 %v6065, %v6573
  %v6606 = vadd.f32 %v6068, %v6574
  %v6607 = vadd.f32 %v6070, %v6575
  %v6608 = vadd.f32 %v6073, %v6576
  %v6609 = vadd.f32 %v6075, %v6577
  %v6610 = vadd.f32 %v6078, %v6578
  %v6611 = vadd.f32 %v6080, %v6579
  %v6612 = vadd.f32 %v6083, %v6580
  %v6613 = vadd.f32 %v6085, %v6581
  %v6614 = vadd.f32 %v6088, %v6582
  %v6615 = vadd.f32 %v6090, %v6583
  %v6616 = vadd.f32 %v6093, %v6584
  %v6617 = vadd.f32 %v6095, %v6585
  %v6618 = vadd.f32 %v6098, %v6586
  %v6619 = vadd.f32 %v6100, %v6587
  %v6620 = vadd.f32 %v6103, %v6588
  %v6621 = vadd.f32 %v6105, %v6589
  %v6622 = vadd.f32 %v6108, %v6590
  %v6623 = vadd.f32 %v6110, %v6591
  %v6624 = vadd.f32 %v6113, %v6592
  %v6625 = vadd.f32 %v6115, %v6593
  %v6626 = vadd.f32 %v6118, %v6594
  %v6627 = vadd.f32 %v6120, %v6595
  %v6628 = vpack.c.bf16 %v6597, %v6596
  %v6629 = vpack.c.bf16 %v6599, %v6598
  %v6630 = vpack.c.bf16 %v6601, %v6600
  %v6631 = vpack.c.bf16 %v6603, %v6602
  %v6632 = vpack.c.bf16 %v6605, %v6604
  %v6633 = vpack.c.bf16 %v6607, %v6606
  %v6634 = vpack.c.bf16 %v6609, %v6608
  %v6635 = vpack.c.bf16 %v6611, %v6610
  %v6636 = vpack.c.bf16 %v6613, %v6612
  %v6637 = vpack.c.bf16 %v6615, %v6614
  %v6638 = vpack.c.bf16 %v6617, %v6616
  %v6639 = vpack.c.bf16 %v6619, %v6618
  %v6640 = vpack.c.bf16 %v6621, %v6620
  %v6641 = vpack.c.bf16 %v6623, %v6622
  %v6642 = vpack.c.bf16 %v6625, %v6624
  %v6643 = vpack.c.bf16 %v6627, %v6626
  %v6644 = vld [vmem:[%s6] sm:$0xf]
  %v6645 = vld [vmem:[%s6 + $0x4] sm:$0xf]
  %v6646 = vld [vmem:[%s6 + $0x8] sm:$0xf]
  %v6647 = vld [vmem:[%s6 + $0xc] sm:$0xf]
  %v6648 = vld [vmem:[%s6 + $0x10] sm:$0xf]
  %v6649 = vld [vmem:[%s6 + $0x14] sm:$0xf]
  %v6650 = vld [vmem:[%s6 + $0x18] sm:$0xf]
  %v6651 = vld [vmem:[%s6 + $0x1c] sm:$0xf]
  %v6652 = vperm.slane %v96, 0
  %v6661 = vunpack.c.l.b16 %v6644
  %v6662 = vunpack.c.l.b16 %v6645
  %v6663 = vunpack.c.l.b16 %v6646
  %v6664 = vunpack.c.l.b16 %v6647
  %v6665 = vunpack.c.l.b16 %v6648
  %v6666 = vunpack.c.l.b16 %v6649
  %v6667 = vunpack.c.l.b16 %v6650
  %v6668 = vunpack.c.l.b16 %v6651
  %v6669 = vpack.c.b16 %v6662, %v6661
  %v6670 = vpack.c.b16 %v6664, %v6663
  %v6671 = vpack.c.b16 %v6666, %v6665
  %v6672 = vpack.c.b16 %v6668, %v6667
  %v6678 = vsel %vm5332, %v6628, 0
  %v6681 = vsel %vm5332, %v6629, 0
  %v6684 = vsel %vm5332, %v6630, 0
  %v6687 = vsel %vm5332, %v6631, 0
  %v6690 = vsel %vm5332, %v6632, 0
  %v6693 = vsel %vm5332, %v6633, 0
  %v6696 = vsel %vm5332, %v6634, 0
  %v6699 = vsel %vm5332, %v6635, 0
  %v6702 = vsel %vm5332, %v6636, 0
  %v6705 = vsel %vm5332, %v6637, 0
  %v6708 = vsel %vm5332, %v6638, 0
  %v6711 = vsel %vm5332, %v6639, 0
  %v6714 = vsel %vm5332, %v6640, 0
  %v6717 = vsel %vm5332, %v6641, 0
  %v6720 = vsel %vm5332, %v6642, 0
  %v6723 = vsel %vm5332, %v6643, 0
  %6725 = vmatpush.bf16.msra.mxu0 0
  %6726 = vmatpush.bf16.msra.mxu0 0
  %6727 = vmatpush.bf16.msra.mxu0 0
  %6728 = vmatpush.bf16.msra.mxu0 0
  %6729 = vmatpush.bf16.msra.mxu0 %v6672
  %6730 = vmatpush.bf16.msra.mxu0 %v6671
  %6731 = vmatpush.bf16.msra.mxu0 %v6670
  %6732 = vmatpush.bf16.msra.mxu0 %v6669
  %6733 = vmatmul.bf16.gmra.mxu0 %v6678
  %v6734 = vpop.f32.mrf.mxu0
  %v6735 = vadd.f32 %v6652, %v6734
  %v6736 = vpop.f32.mrf.mxu0
  %v6737 = vadd.f32 %v6652, %v6736
  %6738 = vmatmul.bf16.gmra.mxu0 %v6681
  %v6739 = vpop.f32.mrf.mxu0
  %v6740 = vadd.f32 %v6652, %v6739
  %v6741 = vpop.f32.mrf.mxu0
  %v6742 = vadd.f32 %v6652, %v6741
  %6743 = vmatmul.bf16.gmra.mxu0 %v6684
  %v6744 = vpop.f32.mrf.mxu0
  %v6745 = vadd.f32 %v6652, %v6744
  %v6746 = vpop.f32.mrf.mxu0
  %v6747 = vadd.f32 %v6652, %v6746
  %6748 = vmatmul.bf16.gmra.mxu0 %v6687
  %v6749 = vpop.f32.mrf.mxu0
  %v6750 = vadd.f32 %v6652, %v6749
  %v6751 = vpop.f32.mrf.mxu0
  %v6752 = vadd.f32 %v6652, %v6751
  %6753 = vmatmul.bf16.gmra.mxu0 %v6690
  %v6754 = vpop.f32.mrf.mxu0
  %v6755 = vadd.f32 %v6652, %v6754
  %v6756 = vpop.f32.mrf.mxu0
  %v6757 = vadd.f32 %v6652, %v6756
  %6758 = vmatmul.bf16.gmra.mxu0 %v6693
  %v6759 = vpop.f32.mrf.mxu0
  %v6760 = vadd.f32 %v6652, %v6759
  %v6761 = vpop.f32.mrf.mxu0
  %v6762 = vadd.f32 %v6652, %v6761
  %6763 = vmatmul.bf16.gmra.mxu0 %v6696
  %v6764 = vpop.f32.mrf.mxu0
  %v6765 = vadd.f32 %v6652, %v6764
  %v6766 = vpop.f32.mrf.mxu0
  %v6767 = vadd.f32 %v6652, %v6766
  %6768 = vmatmul.bf16.gmra.mxu0 %v6699
  %v6769 = vpop.f32.mrf.mxu0
  %v6770 = vadd.f32 %v6652, %v6769
  %v6771 = vpop.f32.mrf.mxu0
  %v6772 = vadd.f32 %v6652, %v6771
  %6773 = vmatmul.bf16.gmra.mxu0 %v6702
  %v6774 = vpop.f32.mrf.mxu0
  %v6775 = vadd.f32 %v6652, %v6774
  %v6776 = vpop.f32.mrf.mxu0
  %v6777 = vadd.f32 %v6652, %v6776
  %6778 = vmatmul.bf16.gmra.mxu0 %v6705
  %v6779 = vpop.f32.mrf.mxu0
  %v6780 = vadd.f32 %v6652, %v6779
  %v6781 = vpop.f32.mrf.mxu0
  %v6782 = vadd.f32 %v6652, %v6781
  %6783 = vmatmul.bf16.gmra.mxu0 %v6708
  %v6784 = vpop.f32.mrf.mxu0
  %v6785 = vadd.f32 %v6652, %v6784
  %v6786 = vpop.f32.mrf.mxu0
  %v6787 = vadd.f32 %v6652, %v6786
  %6788 = vmatmul.bf16.gmra.mxu0 %v6711
  %v6789 = vpop.f32.mrf.mxu0
  %v6790 = vadd.f32 %v6652, %v6789
  %v6791 = vpop.f32.mrf.mxu0
  %v6792 = vadd.f32 %v6652, %v6791
  %6793 = vmatmul.bf16.gmra.mxu0 %v6714
  %v6794 = vpop.f32.mrf.mxu0
  %v6795 = vadd.f32 %v6652, %v6794
  %v6796 = vpop.f32.mrf.mxu0
  %v6797 = vadd.f32 %v6652, %v6796
  %6798 = vmatmul.bf16.gmra.mxu0 %v6717
  %v6799 = vpop.f32.mrf.mxu0
  %v6800 = vadd.f32 %v6652, %v6799
  %v6801 = vpop.f32.mrf.mxu0
  %v6802 = vadd.f32 %v6652, %v6801
  %6803 = vmatmul.bf16.gmra.mxu0 %v6720
  %v6804 = vpop.f32.mrf.mxu0
  %v6805 = vadd.f32 %v6652, %v6804
  %v6806 = vpop.f32.mrf.mxu0
  %v6807 = vadd.f32 %v6652, %v6806
  %6808 = vmatmul.bf16.gmra.mxu0 %v6723
  %v6809 = vpop.f32.mrf.mxu0
  %v6810 = vadd.f32 %v6652, %v6809
  %v6811 = vpop.f32.mrf.mxu0
  %v6812 = vadd.f32 %v6652, %v6811
  %6813 = vdwg.mxu0
  %vm6814 = vcmask 130048
  %6815 = vst.msk [vmem:[%s7] sm:$0xff] %vm6814, %v6735
  %6816 = vst.msk [vmem:[%s7 + $0x8] sm:$0xff] %vm6814, %v6737
  %6817 = vst.msk [vmem:[%s7 + $0x10] sm:$0xff] %vm6814, %v6740
  %6818 = vst.msk [vmem:[%s7 + $0x18] sm:$0xff] %vm6814, %v6742
  %6819 = vst.msk [vmem:[%s7 + $0x20] sm:$0xff] %vm6814, %v6745
  %6820 = vst.msk [vmem:[%s7 + $0x28] sm:$0xff] %vm6814, %v6747
  %6821 = vst.msk [vmem:[%s7 + $0x30] sm:$0xff] %vm6814, %v6750
  %6822 = vst.msk [vmem:[%s7 + $0x38] sm:$0xff] %vm6814, %v6752
  %6823 = vst.msk [vmem:[%s7 + $0x40] sm:$0xff] %vm6814, %v6755
  %6824 = vst.msk [vmem:[%s7 + $0x48] sm:$0xff] %vm6814, %v6757
  %6825 = vst.msk [vmem:[%s7 + $0x50] sm:$0xff] %vm6814, %v6760
  %6826 = vst.msk [vmem:[%s7 + $0x58] sm:$0xff] %vm6814, %v6762
  %6827 = vst.msk [vmem:[%s7 + $0x60] sm:$0xff] %vm6814, %v6765
  %6828 = vst.msk [vmem:[%s7 + $0x68] sm:$0xff] %vm6814, %v6767
  %6829 = vst.msk [vmem:[%s7 + $0x70] sm:$0xff] %vm6814, %v6770
  %6830 = vst.msk [vmem:[%s7 + $0x78] sm:$0xff] %vm6814, %v6772
  %6831 = vst.msk [vmem:[%s7 + $0x80] sm:$0xff] %vm6814, %v6775
  %6832 = vst.msk [vmem:[%s7 + $0x88] sm:$0xff] %vm6814, %v6777
  %6833 = vst.msk [vmem:[%s7 + $0x90] sm:$0xff] %vm6814, %v6780
  %6834 = vst.msk [vmem:[%s7 + $0x98] sm:$0xff] %vm6814, %v6782
  %6835 = vst.msk [vmem:[%s7 + $0xa0] sm:$0xff] %vm6814, %v6785
  %6836 = vst.msk [vmem:[%s7 + $0xa8] sm:$0xff] %vm6814, %v6787
  %6837 = vst.msk [vmem:[%s7 + $0xb0] sm:$0xff] %vm6814, %v6790
  %6838 = vst.msk [vmem:[%s7 + $0xb8] sm:$0xff] %vm6814, %v6792
  %6839 = vst.msk [vmem:[%s7 + $0xc0] sm:$0xff] %vm6814, %v6795
  %6840 = vst.msk [vmem:[%s7 + $0xc8] sm:$0xff] %vm6814, %v6797
  %6841 = vst.msk [vmem:[%s7 + $0xd0] sm:$0xff] %vm6814, %v6800
  %6842 = vst.msk [vmem:[%s7 + $0xd8] sm:$0xff] %vm6814, %v6802
  %6843 = vst.msk [vmem:[%s7 + $0xe0] sm:$0xff] %vm6814, %v6805
  %6844 = vst.msk [vmem:[%s7 + $0xe8] sm:$0xff] %vm6814, %v6807
  %6845 = vst.msk [vmem:[%s7 + $0xf0] sm:$0xff] %vm6814, %v6810
  %6846 = vst.msk [vmem:[%s7 + $0xf8] sm:$0xff] %vm6814, %v6812
  // Predicated region
  $region30: #{denoiser_forward.1} parent=0 // pred_check
    _
  $region31: #{denoiser_forward.1} parent=0 // pred_check_branch
    %6848 = sbr.rel (0) target = $region33
  $region32: #{denoiser_forward.1} parent=0 // pred_region
    _
  $region33: #{denoiser_forward.1} parent=0 // pred_fallthru
    _
  // Predicated region
  $region34: #{denoiser_forward.1} parent=0 // pred_check
    _
  $region35: #{denoiser_forward.1} parent=0 // pred_check_branch
    %6850 = sbr.rel (0) target = $region37
  $region36: #{denoiser_forward.1} parent=0 // pred_region
    _
  $region37: #{denoiser_forward.1} parent=0 // pred_fallthru
    _

</llo_original>
